<compile_context>
chip_gen: v5e
topology: v5e:2x2
jax: 0.10.0
libtpu: 0.0.40
codegen_flags: <defaults>
</compile_context>

<pallas_src>
from functools import partial

import jax
import jax.numpy as jnp
from jax.experimental import pallas as pl
from jax.experimental.pallas import tpu as pltpu

C, R = 64, 4
MID = C // R
N = 2
H = W = 16
HW = H * W
EPS = 1e-5


def _sigmoid(x):
    # sigmoid(x) = 0.5 * (tanh(x/2) + 1): keeps the transcendental on the EUP.
    return 0.5 * (jnp.tanh(0.5 * x) + 1.0)


# -----------------------------------------------------------------------------
# Fused kernel. Everything is channel-major (C, HW); the conv is one im2col
# dot fed from lane-shifted reads of a zero-haloed VMEM slab.
# -----------------------------------------------------------------------------
def _fuse_kernel(xh_ref, xl_ref,
                 tdw1_ref, tdb1_ref, tdw2_ref, tdb2_ref,
                 buw1_ref, bub1_ref, buw2_ref, bub2_ref,
                 wk_ref, pshift_ref, colmask_ref,
                 out_ref,
                 slab_ref, col_ref,
                 *, nb, c, h, w, pad, halo):
    hw = h * w

    # ---- bottomup gate: per-pixel 1x1 convs, folded over the nb items ----
    if nb == 1:
        xl_all = xl_ref[0]                                           # (c, hw)
    else:
        xl_all = jnp.concatenate([xl_ref[i] for i in range(nb)], axis=1)
    b1 = jnp.maximum(
        jnp.dot(buw1_ref[...], xl_all, preferred_element_type=jnp.float32)
        + bub1_ref[...], 0.0)                                        # (mid, nb*hw)
    bu = _sigmoid(
        jnp.dot(buw2_ref[...], b1, preferred_element_type=jnp.float32)
        + bub2_ref[...])                                             # (c, nb*hw)

    mask_l = colmask_ref[0:1, :]     # zeroes output column w == 0   (dx = -1 taps)
    mask_r = colmask_ref[1:2, :]     # zeroes output column w == W-1 (dx = +1 taps)

    # Zero only the row halo of the conv slab (the payload window is always
    # fully overwritten below). Re-done every step: safe with per-core scratch.
    zero_halo = jnp.zeros((c, halo), jnp.float32)
    slab_ref[:, pad - halo:pad] = zero_halo
    slab_ref[:, pad + hw:pad + hw + halo] = zero_halo

    for i in range(nb):
        xh_i = xh_ref[i]                                             # (c, hw)
        xl_i = xl_ref[i]
        bu_i = bu[:, i * hw:(i + 1) * hw] if nb > 1 else bu

        # ---- topdown gate: global avg pool + two folded 1x1 convs (tiny) ----
        pooled = jnp.mean(xh_i, axis=1, keepdims=True)               # (c, 1)
        t1 = jnp.maximum(
            jnp.sum(tdw1_ref[...] * pooled, axis=0, keepdims=True)
            + tdb1_ref[...], 0.0)                                    # (1, mid)
        td = _sigmoid(
            jnp.sum(tdw2_ref[...] * t1, axis=1, keepdims=True)
            + tdb2_ref[...])                                         # (c, 1)

        xs = 2.0 * xl_i * td + 2.0 * xh_i * bu_i                     # (c, hw)

        # ---- 3x3 conv + folded BN + ReLU, channel-major / lane-dense ----
        slab_ref[:, pad:pad + hw] = xs
        t = 0
        for dy in (-1, 0, 1):
            base = pad + dy * w
            for dx in (-1, 0, 1):
                shifted = slab_ref[:, base + dx:base + dx + hw]      # (c, hw)
                if dx == -1:
                    shifted = shifted * mask_l
                elif dx == 1:
                    shifted = shifted * mask_r
                col_ref[t * c:(t + 1) * c, :] = shifted
                t += 1
        y = jnp.dot(wk_ref[...], col_ref[...],
                    preferred_element_type=jnp.float32) + pshift_ref[...]
        out_ref[i] = jnp.maximum(y, 0.0)                             # (c, hw)


# -----------------------------------------------------------------------------
# Wrapper: NCHW in / NCHW out, only free reshapes on the XLA side.
# -----------------------------------------------------------------------------
def _full_spec(shape):
    zeros = (0,) * len(shape)
    return pl.BlockSpec(shape, lambda i, _z=zeros: _z)


def _prefers_batch_fold():
    # Fold the whole batch into one grid step on single-TensorCore chips
    # (v5e / v6e); keep one item per grid step elsewhere (v7x: 2 TCs/chip).
    try:
        kind = jax.devices()[0].device_kind.lower()
    except Exception:
        return False
    return any(s in kind for s in ("v5 lite", "v5e", "v6 lite", "v6e"))


@partial(jax.jit, static_argnames=("fold_batch",))
def fuse_forward(xh_nchw, xl_nchw, f, fold_batch=False):
    n, c, h, w = xh_nchw.shape
    assert xl_nchw.shape == xh_nchw.shape
    hw = h * w
    mid = f["buw1"].shape[0]
    assert f["buw1"].shape == (mid, c) and f["wk"].shape == (c, 9 * c)

    nb = n if fold_batch else 1
    g = n // nb
    pad = 128
    while pad < w + 1:                       # conv slab halo must cover one row (+1)
        pad += 128
    halo = min(pad, ((w + 1 + 31) // 32) * 32)

    xh = xh_nchw.reshape(n, c, hw).astype(jnp.float32)
    xl = xl_nchw.reshape(n, c, hw).astype(jnp.float32)

    # column-wrap masks for the dx = -1 / +1 conv taps (built once, tiny)
    wcol = jnp.arange(hw, dtype=jnp.int32) % w
    colmask = jnp.stack([(wcol != 0), (wcol != w - 1)]).astype(jnp.float32)  # (2, hw)

    io_spec = pl.BlockSpec((nb, c, hw), lambda i: (i, 0, 0))
    kern = partial(_fuse_kernel, nb=nb, c=c, h=h, w=w, pad=pad, halo=halo)

    out = pl.pallas_call(
        kern,
        out_shape=jax.ShapeDtypeStruct((n, c, hw), jnp.float32),
        grid_spec=pltpu.PrefetchScalarGridSpec(
            num_scalar_prefetch=0,
            grid=(g,),
            in_specs=[
                io_spec, io_spec,
                _full_spec((c, mid)), _full_spec((1, mid)),
                _full_spec((c, mid)), _full_spec((c, 1)),
                _full_spec((mid, c)), _full_spec((mid, 1)),
                _full_spec((c, mid)), _full_spec((c, 1)),
                _full_spec((c, 9 * c)), _full_spec((c, 1)),
                _full_spec((2, hw)),
            ],
            out_specs=io_spec,
            scratch_shapes=[
                pltpu.VMEM((c, 2 * pad + hw), jnp.float32),   # padded conv slab
                pltpu.VMEM((9 * c, hw), jnp.float32),         # im2col matrix
            ],
        ),
        compiler_params=pltpu.CompilerParams(dimension_semantics=("parallel",)),
    )(xh, xl,
      f["tdw1"], f["tdb1"], f["tdw2"], f["tdb2"],
      f["buw1"], f["bub1"], f["buw2"], f["bub2"],
      f["wk"], f["pshift"], colmask)
    return out.reshape(n, c, h, w)


# -----------------------------------------------------------------------------
# Parameter setup (deterministic, synthetic) and eval-mode BN folding.
# -----------------------------------------------------------------------------
def make_params(key):
    ks = jax.random.split(key, 20)
    rn = lambda k, shp, sc=0.1: sc * jax.random.normal(k, shp, dtype=jnp.float32)
    p = {}
    # topdown: Conv2d(C, MID, 1)+BN(MID); Conv2d(MID, C, 1)+BN(C)  (PyTorch (out,in))
    p["td_w1"], p["td_b1"] = rn(ks[0], (MID, C)), rn(ks[1], (MID,))
    p["td_g1"], p["td_be1"] = 1.0 + rn(ks[2], (MID,)), rn(ks[3], (MID,), 0.05)
    p["td_w2"], p["td_b2"] = rn(ks[4], (C, MID)), rn(ks[5], (C,))
    p["td_g2"], p["td_be2"] = 1.0 + rn(ks[6], (C,)), rn(ks[7], (C,), 0.05)
    # bottomup: same structure
    p["bu_w1"], p["bu_b1"] = rn(ks[8], (MID, C)), rn(ks[9], (MID,))
    p["bu_g1"], p["bu_be1"] = 1.0 + rn(ks[10], (MID,)), rn(ks[11], (MID,), 0.05)
    p["bu_w2"], p["bu_b2"] = rn(ks[12], (C, MID)), rn(ks[13], (C,))
    p["bu_g2"], p["bu_be2"] = 1.0 + rn(ks[14], (C,)), rn(ks[15], (C,), 0.05)
    # post: Conv2d(C, C, 3, padding=1)+BN(C); weight in PyTorch OIHW layout
    p["po_w"] = rn(ks[16], (C, C, 3, 3))
    p["po_b"] = rn(ks[17], (C,))
    p["po_g"], p["po_be"] = 1.0 + rn(ks[18], (C,)), rn(ks[19], (C,), 0.05)
    return p


def fold_params(p):
    # eval-mode BN (running_mean=0, running_var=1) folded into the adjacent conv:
    # y = (Wx + b)*s + beta  with  s = gamma / sqrt(var + eps)
    def fold(w, b, g, be):
        s = g / jnp.sqrt(1.0 + EPS)
        return w * s[:, None], b * s + be

    f = {}
    w, b = fold(p["td_w1"], p["td_b1"], p["td_g1"], p["td_be1"])
    f["tdw1"], f["tdb1"] = w.T, b.reshape(1, MID)            # (C,MID), (1,MID)
    w, b = fold(p["td_w2"], p["td_b2"], p["td_g2"], p["td_be2"])
    f["tdw2"], f["tdb2"] = w, b.reshape(C, 1)                # (C,MID), (C,1)
    w, b = fold(p["bu_w1"], p["bu_b1"], p["bu_g1"], p["bu_be1"])
    f["buw1"], f["bub1"] = w, b.reshape(MID, 1)              # (MID,C), (MID,1)
    w, b = fold(p["bu_w2"], p["bu_b2"], p["bu_g2"], p["bu_be2"])
    f["buw2"], f["bub2"] = w, b.reshape(C, 1)                # (C,MID), (C,1)
    # post conv: BN scale folded into the conv weight; lane-dense (C_out, 9*C_in)
    # with row-block t = dh*3+dw matching the kernel's im2col layout.
    s = p["po_g"] / jnp.sqrt(1.0 + EPS)
    f["wk"] = (jnp.transpose(p["po_w"], (0, 2, 3, 1)).reshape(C, 9 * C)
               * s[:, None])                                 # (C, 9C)
    f["pshift"] = (p["po_b"] * s + p["po_be"]).reshape(C, 1)  # (C,1)
    f["pscale"] = s.reshape(1, C)                            # reference only
    f["po_w"] = p["po_w"]                                    # OIHW, reference only
    return f


# -----------------------------------------------------------------------------
# Pure-JAX reference (same eval-mode BN folding) for a sanity check.
# -----------------------------------------------------------------------------
def ref_forward(xh, xl, f):
    prec = jax.lax.Precision.HIGHEST
    xh = xh.astype(jnp.float32)
    xl = xl.astype(jnp.float32)
    pooled = jnp.mean(xh, axis=(2, 3), keepdims=True)                     # (N,C,1,1)
    t1 = jnp.maximum(jnp.einsum("cm,nchw->nmhw", f["tdw1"], pooled, precision=prec)
                     + f["tdb1"].reshape(1, MID, 1, 1), 0.0)
    td = jax.nn.sigmoid(jnp.einsum("cm,nmhw->nchw", f["tdw2"], t1, precision=prec)
                        + f["tdb2"].reshape(1, C, 1, 1))
    b1 = jnp.maximum(jnp.einsum("mc,nchw->nmhw", f["buw1"], xl, precision=prec)
                     + f["bub1"].reshape(1, MID, 1, 1), 0.0)
    bu = jax.nn.sigmoid(jnp.einsum("cm,nmhw->nchw", f["buw2"], b1, precision=prec)
                        + f["bub2"].reshape(1, C, 1, 1))
    xs = 2.0 * xl * td + 2.0 * xh * bu
    y = jax.lax.conv_general_dilated(
        xs, f["po_w"], window_strides=(1, 1), padding="SAME",
        dimension_numbers=("NCHW", "OIHW", "NCHW"), precision=prec)
    return jnp.maximum(y * f["pscale"].reshape(1, C, 1, 1)
                       + f["pshift"].reshape(1, C, 1, 1), 0.0)


if __name__ == "__main__":
    key = jax.random.PRNGKey(0)
    kx, kp = jax.random.split(key)
    k1, k2 = jax.random.split(kx)
    xh = jax.random.normal(k1, (N, C, H, W), jnp.float32)   # PyTorch NCHW inputs
    xl = jax.random.normal(k2, (N, C, H, W), jnp.float32)

    folded = fold_params(make_params(kp))
    ref = jax.block_until_ready(ref_forward(xh, xl, folded))

    # Exercise BOTH batch layouts: one item per grid step (v7x: 2 TensorCores)
    # and the whole batch folded into one lane-dense step (v5e / v6e).
    for fold in (False, True):
        out = jax.block_until_ready(fuse_forward(xh, xl, folded, fold_batch=fold))
        assert out.shape == (N, C, H, W), out.shape
        assert bool(jnp.allclose(out, ref, atol=1e-2, rtol=1e-2)), \
            f"mismatch vs reference (fold_batch={fold})"

    # Default entry point: pick the layout from the local device kind.
    out = jax.block_until_ready(
        fuse_forward(xh, xl, folded, fold_batch=_prefers_batch_fold()))
    assert bool(jnp.allclose(out, ref, atol=1e-2, rtol=1e-2))

    print("KERNEL_OK")
</pallas_src>

<mosaic_0001>
module attributes {stable_mosaic.version = 11 : i64} {
  func.func @_fuse_kernel(%arg0: i32, %arg1: memref<1x64x256xf32, #tpu.memory_space<vmem>>, %arg2: memref<1x64x256xf32, #tpu.memory_space<vmem>>, %arg3: memref<64x16xf32, #tpu.memory_space<vmem>>, %arg4: memref<1x16xf32, #tpu.memory_space<vmem>>, %arg5: memref<64x16xf32, #tpu.memory_space<vmem>>, %arg6: memref<64x1xf32, #tpu.memory_space<vmem>>, %arg7: memref<16x64xf32, #tpu.memory_space<vmem>>, %arg8: memref<16x1xf32, #tpu.memory_space<vmem>>, %arg9: memref<64x16xf32, #tpu.memory_space<vmem>>, %arg10: memref<64x1xf32, #tpu.memory_space<vmem>>, %arg11: memref<64x576xf32, #tpu.memory_space<vmem>>, %arg12: memref<64x1xf32, #tpu.memory_space<vmem>>, %arg13: memref<2x256xf32, #tpu.memory_space<vmem>>, %arg14: memref<1x64x256xf32, #tpu.memory_space<vmem>>, %arg15: memref<64x512xf32, #tpu.memory_space<vmem>>, %arg16: memref<576x256xf32, #tpu.memory_space<vmem>>) attributes {dimension_semantics = [#tpu.dimension_semantics<parallel>], iteration_bounds = array<i64: 2>, scalar_prefetch = 0 : i64, scratch_operands = 2 : i64, tpu.core_type = #tpu.core_type<tc>, window_params = [{transform_indices = @transform_0, window_bounds = array<i64: 1, 64, 256>}, {transform_indices = @transform_1, window_bounds = array<i64: 1, 64, 256>}, {pipeline_mode = #tpu.pipeline_mode<synchronous>, transform_indices = @transform_2, window_bounds = array<i64: 64, 16>}, {pipeline_mode = #tpu.pipeline_mode<synchronous>, transform_indices = @transform_3, window_bounds = array<i64: 1, 16>}, {pipeline_mode = #tpu.pipeline_mode<synchronous>, transform_indices = @transform_4, window_bounds = array<i64: 64, 16>}, {pipeline_mode = #tpu.pipeline_mode<synchronous>, transform_indices = @transform_5, window_bounds = array<i64: 64, 1>}, {pipeline_mode = #tpu.pipeline_mode<synchronous>, transform_indices = @transform_6, window_bounds = array<i64: 16, 64>}, {pipeline_mode = #tpu.pipeline_mode<synchronous>, transform_indices = @transform_7, window_bounds = array<i64: 16, 1>}, {pipeline_mode = #tpu.pipeline_mode<synchronous>, transform_indices = @transform_8, window_bounds = array<i64: 64, 16>}, {pipeline_mode = #tpu.pipeline_mode<synchronous>, transform_indices = @transform_9, window_bounds = array<i64: 64, 1>}, {pipeline_mode = #tpu.pipeline_mode<synchronous>, transform_indices = @transform_10, window_bounds = array<i64: 64, 576>}, {pipeline_mode = #tpu.pipeline_mode<synchronous>, transform_indices = @transform_11, window_bounds = array<i64: 64, 1>}, {pipeline_mode = #tpu.pipeline_mode<synchronous>, transform_indices = @transform_12, window_bounds = array<i64: 2, 256>}, {transform_indices = @transform_13, window_bounds = array<i64: 1, 64, 256>}]} {
    %c0 = arith.constant 0 : index
    %c0_0 = arith.constant 0 : index
    %c0_1 = arith.constant 0 : index
    %0 = vector.load %arg2[%c0, %c0_0, %c0_1] : memref<1x64x256xf32, #tpu.memory_space<vmem>>, vector<1x64x256xf32>
    %1 = vector.shape_cast %0 : vector<1x64x256xf32> to vector<64x256xf32>
    %c0_2 = arith.constant 0 : index
    %c0_3 = arith.constant 0 : index
    %2 = vector.load %arg7[%c0_2, %c0_3] : memref<16x64xf32, #tpu.memory_space<vmem>>, vector<16x64xf32>
    %cst = arith.constant dense<0.000000e+00> : vector<16x256xf32>
    %3 = tpu.matmul %2, %1, %cst {dimension_numbers = #tpu.dot_dimension_numbers<[1], [0], [0], [1], [0, 0, 1, 1], [], []>} : vector<16x64xf32>, vector<64x256xf32>, vector<16x256xf32> -> vector<16x256xf32>
    %c0_4 = arith.constant 0 : index
    %c0_5 = arith.constant 0 : index
    %4 = vector.load %arg8[%c0_4, %c0_5] : memref<16x1xf32, #tpu.memory_space<vmem>>, vector<16x1xf32>
    %5 = vector.broadcast %4 : vector<16x1xf32> to vector<16x256xf32>
    %6 = arith.addf %3, %5 : vector<16x256xf32>
    %cst_6 = arith.constant 0.000000e+00 : f32
    %7 = vector.broadcast %cst_6 : f32 to vector<16x256xf32>
    %8 = arith.maximumf %6, %7 : vector<16x256xf32>
    %c0_7 = arith.constant 0 : index
    %c0_8 = arith.constant 0 : index
    %9 = vector.load %arg9[%c0_7, %c0_8] : memref<64x16xf32, #tpu.memory_space<vmem>>, vector<64x16xf32>
    %cst_9 = arith.constant dense<0.000000e+00> : vector<64x256xf32>
    %10 = tpu.matmul %9, %8, %cst_9 {dimension_numbers = #tpu.dot_dimension_numbers<[1], [0], [0], [1], [0, 0, 1, 1], [], []>} : vector<64x16xf32>, vector<16x256xf32>, vector<64x256xf32> -> vector<64x256xf32>
    %c0_10 = arith.constant 0 : index
    %c0_11 = arith.constant 0 : index
    %11 = vector.load %arg10[%c0_10, %c0_11] : memref<64x1xf32, #tpu.memory_space<vmem>>, vector<64x1xf32>
    %12 = vector.broadcast %11 : vector<64x1xf32> to vector<64x256xf32>
    %13 = arith.addf %10, %12 : vector<64x256xf32>
    %cst_12 = arith.constant 5.000000e-01 : f32
    %14 = vector.broadcast %cst_12 : f32 to vector<64x256xf32>
    %15 = arith.mulf %14, %13 : vector<64x256xf32>
    %16 = math.tanh %15 : vector<64x256xf32>
    %cst_13 = arith.constant 1.000000e+00 : f32
    %17 = vector.broadcast %cst_13 : f32 to vector<64x256xf32>
    %18 = arith.addf %16, %17 : vector<64x256xf32>
    %cst_14 = arith.constant 5.000000e-01 : f32
    %19 = vector.broadcast %cst_14 : f32 to vector<64x256xf32>
    %20 = arith.mulf %19, %18 : vector<64x256xf32>
    %c0_15 = arith.constant 0 : index
    %c0_16 = arith.constant 0 : index
    %21 = vector.load %arg13[%c0_15, %c0_16] : memref<2x256xf32, #tpu.memory_space<vmem>>, vector<1x256xf32>
    %c1 = arith.constant 1 : index
    %c0_17 = arith.constant 0 : index
    %22 = vector.load %arg13[%c1, %c0_17] : memref<2x256xf32, #tpu.memory_space<vmem>>, vector<1x256xf32>
    %cst_18 = arith.constant 0.000000e+00 : f32
    %23 = vector.broadcast %cst_18 : f32 to vector<64x32xf32>
    %c0_19 = arith.constant 0 : index
    %c96 = arith.constant 96 : index
    %24 = vector.load %arg15[%c0_19, %c96] : memref<64x512xf32, #tpu.memory_space<vmem>>, vector<64x32xf32>
    tpu.vector_store %arg15[%c0_19, %c96], %23 {strides = array<i32>} : memref<64x512xf32, #tpu.memory_space<vmem>>, vector<64x32xf32>,
    %c0_20 = arith.constant 0 : index
    %c384 = arith.constant 384 : index
    %25 = vector.load %arg15[%c0_20, %c384] : memref<64x512xf32, #tpu.memory_space<vmem>>, vector<64x32xf32>
    tpu.vector_store %arg15[%c0_20, %c384], %23 {strides = array<i32>} : memref<64x512xf32, #tpu.memory_space<vmem>>, vector<64x32xf32>,
    %c0_21 = arith.constant 0 : index
    %c0_22 = arith.constant 0 : index
    %c0_23 = arith.constant 0 : index
    %26 = vector.load %arg1[%c0_21, %c0_22, %c0_23] : memref<1x64x256xf32, #tpu.memory_space<vmem>>, vector<1x64x256xf32>
    %27 = vector.shape_cast %26 : vector<1x64x256xf32> to vector<64x256xf32>
    %c0_24 = arith.constant 0 : index
    %c0_25 = arith.constant 0 : index
    %c0_26 = arith.constant 0 : index
    %28 = vector.load %arg2[%c0_24, %c0_25, %c0_26] : memref<1x64x256xf32, #tpu.memory_space<vmem>>, vector<1x64x256xf32>
    %29 = vector.shape_cast %28 : vector<1x64x256xf32> to vector<64x256xf32>
    %cst_27 = arith.constant dense<0.000000e+00> : vector<64xf32>
    %30 = vector.multi_reduction <add>, %27, %cst_27 [1] : vector<64x256xf32> to vector<64xf32>
    %31 = vector.shape_cast %30 : vector<64xf32> to vector<64x1xf32>
    %cst_28 = arith.constant 2.560000e+02 : f32
    %32 = vector.broadcast %cst_28 : f32 to vector<64x1xf32>
    %33 = arith.divf %31, %32 : vector<64x1xf32>
    %c0_29 = arith.constant 0 : index
    %c0_30 = arith.constant 0 : index
    %34 = vector.load %arg3[%c0_29, %c0_30] : memref<64x16xf32, #tpu.memory_space<vmem>>, vector<64x16xf32>
    %35 = vector.broadcast %33 : vector<64x1xf32> to vector<64x16xf32>
    %36 = arith.mulf %34, %35 : vector<64x16xf32>
    %cst_31 = arith.constant dense<0.000000e+00> : vector<16xf32>
    %37 = vector.multi_reduction <add>, %36, %cst_31 [0] : vector<64x16xf32> to vector<16xf32>
    %38 = vector.shape_cast %37 : vector<16xf32> to vector<1x16xf32>
    %c0_32 = arith.constant 0 : index
    %c0_33 = arith.constant 0 : index
    %39 = vector.load %arg4[%c0_32, %c0_33] : memref<1x16xf32, #tpu.memory_space<vmem>>, vector<1x16xf32>
    %40 = arith.addf %38, %39 : vector<1x16xf32>
    %cst_34 = arith.constant 0.000000e+00 : f32
    %41 = vector.broadcast %cst_34 : f32 to vector<1x16xf32>
    %42 = arith.maximumf %40, %41 : vector<1x16xf32>
    %c0_35 = arith.constant 0 : index
    %c0_36 = arith.constant 0 : index
    %43 = vector.load %arg5[%c0_35, %c0_36] : memref<64x16xf32, #tpu.memory_space<vmem>>, vector<64x16xf32>
    %44 = vector.broadcast %42 : vector<1x16xf32> to vector<64x16xf32>
    %45 = arith.mulf %43, %44 : vector<64x16xf32>
    %cst_37 = arith.constant dense<0.000000e+00> : vector<64xf32>
    %46 = vector.multi_reduction <add>, %45, %cst_37 [1] : vector<64x16xf32> to vector<64xf32>
    %47 = vector.shape_cast %46 : vector<64xf32> to vector<64x1xf32>
    %c0_38 = arith.constant 0 : index
    %c0_39 = arith.constant 0 : index
    %48 = vector.load %arg6[%c0_38, %c0_39] : memref<64x1xf32, #tpu.memory_space<vmem>>, vector<64x1xf32>
    %49 = arith.addf %47, %48 : vector<64x1xf32>
    %cst_40 = arith.constant 5.000000e-01 : f32
    %50 = vector.broadcast %cst_40 : f32 to vector<64x1xf32>
    %51 = arith.mulf %50, %49 : vector<64x1xf32>
    %52 = math.tanh %51 : vector<64x1xf32>
    %cst_41 = arith.constant 1.000000e+00 : f32
    %53 = vector.broadcast %cst_41 : f32 to vector<64x1xf32>
    %54 = arith.addf %52, %53 : vector<64x1xf32>
    %cst_42 = arith.constant 5.000000e-01 : f32
    %55 = vector.broadcast %cst_42 : f32 to vector<64x1xf32>
    %56 = arith.mulf %55, %54 : vector<64x1xf32>
    %cst_43 = arith.constant 2.000000e+00 : f32
    %57 = vector.broadcast %cst_43 : f32 to vector<64x256xf32>
    %58 = arith.mulf %57, %29 : vector<64x256xf32>
    %59 = vector.broadcast %56 : vector<64x1xf32> to vector<64x256xf32>
    %60 = arith.mulf %58, %59 : vector<64x256xf32>
    %cst_44 = arith.constant 2.000000e+00 : f32
    %61 = vector.broadcast %cst_44 : f32 to vector<64x256xf32>
    %62 = arith.mulf %61, %27 : vector<64x256xf32>
    %63 = arith.mulf %62, %20 : vector<64x256xf32>
    %64 = arith.addf %60, %63 : vector<64x256xf32>
    %c0_45 = arith.constant 0 : index
    %c128 = arith.constant 128 : index
    %65 = vector.load %arg15[%c0_45, %c128] : memref<64x512xf32, #tpu.memory_space<vmem>>, vector<64x256xf32>
    tpu.vector_store %arg15[%c0_45, %c128], %64 {strides = array<i32>} : memref<64x512xf32, #tpu.memory_space<vmem>>, vector<64x256xf32>,
    %c0_46 = arith.constant 0 : index
    %c111 = arith.constant 111 : index
    %66 = vector.load %arg15[%c0_46, %c111] : memref<64x512xf32, #tpu.memory_space<vmem>>, vector<64x256xf32>
    %67 = vector.broadcast %21 : vector<1x256xf32> to vector<64x256xf32>
    %68 = arith.mulf %66, %67 : vector<64x256xf32>
    %c0_47 = arith.constant 0 : index
    %c0_48 = arith.constant 0 : index
    %69 = vector.load %arg16[%c0_47, %c0_48] : memref<576x256xf32, #tpu.memory_space<vmem>>, vector<64x256xf32>
    tpu.vector_store %arg16[%c0_47, %c0_48], %68 {strides = array<i32>} : memref<576x256xf32, #tpu.memory_space<vmem>>, vector<64x256xf32>,
    %c0_49 = arith.constant 0 : index
    %c112 = arith.constant 112 : index
    %70 = vector.load %arg15[%c0_49, %c112] : memref<64x512xf32, #tpu.memory_space<vmem>>, vector<64x256xf32>
    %c64 = arith.constant 64 : index
    %c0_50 = arith.constant 0 : index
    %71 = vector.load %arg16[%c64, %c0_50] : memref<576x256xf32, #tpu.memory_space<vmem>>, vector<64x256xf32>
    tpu.vector_store %arg16[%c64, %c0_50], %70 {strides = array<i32>} : memref<576x256xf32, #tpu.memory_space<vmem>>, vector<64x256xf32>,
    %c0_51 = arith.constant 0 : index
    %c113 = arith.constant 113 : index
    %72 = vector.load %arg15[%c0_51, %c113] : memref<64x512xf32, #tpu.memory_space<vmem>>, vector<64x256xf32>
    %73 = vector.broadcast %22 : vector<1x256xf32> to vector<64x256xf32>
    %74 = arith.mulf %72, %73 : vector<64x256xf32>
    %c128_52 = arith.constant 128 : index
    %c0_53 = arith.constant 0 : index
    %75 = vector.load %arg16[%c128_52, %c0_53] : memref<576x256xf32, #tpu.memory_space<vmem>>, vector<64x256xf32>
    tpu.vector_store %arg16[%c128_52, %c0_53], %74 {strides = array<i32>} : memref<576x256xf32, #tpu.memory_space<vmem>>, vector<64x256xf32>,
    %c0_54 = arith.constant 0 : index
    %c127 = arith.constant 127 : index
    %76 = vector.load %arg15[%c0_54, %c127] : memref<64x512xf32, #tpu.memory_space<vmem>>, vector<64x256xf32>
    %77 = vector.broadcast %21 : vector<1x256xf32> to vector<64x256xf32>
    %78 = arith.mulf %76, %77 : vector<64x256xf32>
    %c192 = arith.constant 192 : index
    %c0_55 = arith.constant 0 : index
    %79 = vector.load %arg16[%c192, %c0_55] : memref<576x256xf32, #tpu.memory_space<vmem>>, vector<64x256xf32>
    tpu.vector_store %arg16[%c192, %c0_55], %78 {strides = array<i32>} : memref<576x256xf32, #tpu.memory_space<vmem>>, vector<64x256xf32>,
    %c0_56 = arith.constant 0 : index
    %c128_57 = arith.constant 128 : index
    %80 = vector.load %arg15[%c0_56, %c128_57] : memref<64x512xf32, #tpu.memory_space<vmem>>, vector<64x256xf32>
    %c256 = arith.constant 256 : index
    %c0_58 = arith.constant 0 : index
    %81 = vector.load %arg16[%c256, %c0_58] : memref<576x256xf32, #tpu.memory_space<vmem>>, vector<64x256xf32>
    tpu.vector_store %arg16[%c256, %c0_58], %80 {strides = array<i32>} : memref<576x256xf32, #tpu.memory_space<vmem>>, vector<64x256xf32>,
    %c0_59 = arith.constant 0 : index
    %c129 = arith.constant 129 : index
    %82 = vector.load %arg15[%c0_59, %c129] : memref<64x512xf32, #tpu.memory_space<vmem>>, vector<64x256xf32>
    %83 = vector.broadcast %22 : vector<1x256xf32> to vector<64x256xf32>
    %84 = arith.mulf %82, %83 : vector<64x256xf32>
    %c320 = arith.constant 320 : index
    %c0_60 = arith.constant 0 : index
    %85 = vector.load %arg16[%c320, %c0_60] : memref<576x256xf32, #tpu.memory_space<vmem>>, vector<64x256xf32>
    tpu.vector_store %arg16[%c320, %c0_60], %84 {strides = array<i32>} : memref<576x256xf32, #tpu.memory_space<vmem>>, vector<64x256xf32>,
    %c0_61 = arith.constant 0 : index
    %c143 = arith.constant 143 : index
    %86 = vector.load %arg15[%c0_61, %c143] : memref<64x512xf32, #tpu.memory_space<vmem>>, vector<64x256xf32>
    %87 = vector.broadcast %21 : vector<1x256xf32> to vector<64x256xf32>
    %88 = arith.mulf %86, %87 : vector<64x256xf32>
    %c384_62 = arith.constant 384 : index
    %c0_63 = arith.constant 0 : index
    %89 = vector.load %arg16[%c384_62, %c0_63] : memref<576x256xf32, #tpu.memory_space<vmem>>, vector<64x256xf32>
    tpu.vector_store %arg16[%c384_62, %c0_63], %88 {strides = array<i32>} : memref<576x256xf32, #tpu.memory_space<vmem>>, vector<64x256xf32>,
    %c0_64 = arith.constant 0 : index
    %c144 = arith.constant 144 : index
    %90 = vector.load %arg15[%c0_64, %c144] : memref<64x512xf32, #tpu.memory_space<vmem>>, vector<64x256xf32>
    %c448 = arith.constant 448 : index
    %c0_65 = arith.constant 0 : index
    %91 = vector.load %arg16[%c448, %c0_65] : memref<576x256xf32, #tpu.memory_space<vmem>>, vector<64x256xf32>
    tpu.vector_store %arg16[%c448, %c0_65], %90 {strides = array<i32>} : memref<576x256xf32, #tpu.memory_space<vmem>>, vector<64x256xf32>,
    %c0_66 = arith.constant 0 : index
    %c145 = arith.constant 145 : index
    %92 = vector.load %arg15[%c0_66, %c145] : memref<64x512xf32, #tpu.memory_space<vmem>>, vector<64x256xf32>
    %93 = vector.broadcast %22 : vector<1x256xf32> to vector<64x256xf32>
    %94 = arith.mulf %92, %93 : vector<64x256xf32>
    %c512 = arith.constant 512 : index
    %c0_67 = arith.constant 0 : index
    %95 = vector.load %arg16[%c512, %c0_67] : memref<576x256xf32, #tpu.memory_space<vmem>>, vector<64x256xf32>
    tpu.vector_store %arg16[%c512, %c0_67], %94 {strides = array<i32>} : memref<576x256xf32, #tpu.memory_space<vmem>>, vector<64x256xf32>,
    %c0_68 = arith.constant 0 : index
    %c0_69 = arith.constant 0 : index
    %96 = vector.load %arg11[%c0_68, %c0_69] : memref<64x576xf32, #tpu.memory_space<vmem>>, vector<64x576xf32>
    %c0_70 = arith.constant 0 : index
    %c0_71 = arith.constant 0 : index
    %97 = vector.load %arg16[%c0_70, %c0_71] : memref<576x256xf32, #tpu.memory_space<vmem>>, vector<576x256xf32>
    %cst_72 = arith.constant dense<0.000000e+00> : vector<64x256xf32>
    %98 = tpu.matmul %96, %97, %cst_72 {dimension_numbers = #tpu.dot_dimension_numbers<[1], [0], [0], [1], [0, 0, 1, 1], [], []>} : vector<64x576xf32>, vector<576x256xf32>, vector<64x256xf32> -> vector<64x256xf32>
    %c0_73 = arith.constant 0 : index
    %c0_74 = arith.constant 0 : index
    %99 = vector.load %arg12[%c0_73, %c0_74] : memref<64x1xf32, #tpu.memory_space<vmem>>, vector<64x1xf32>
    %100 = vector.broadcast %99 : vector<64x1xf32> to vector<64x256xf32>
    %101 = arith.addf %98, %100 : vector<64x256xf32>
    %cst_75 = arith.constant 0.000000e+00 : f32
    %102 = vector.broadcast %cst_75 : f32 to vector<64x256xf32>
    %103 = arith.maximumf %101, %102 : vector<64x256xf32>
    %c0_76 = arith.constant 0 : index
    %c0_77 = arith.constant 0 : index
    %c0_78 = arith.constant 0 : index
    %104 = vector.load %arg14[%c0_76, %c0_77, %c0_78] : memref<1x64x256xf32, #tpu.memory_space<vmem>>, vector<1x64x256xf32>
    %105 = vector.shape_cast %104 : vector<1x64x256xf32> to vector<64x256xf32>
    %106 = vector.shape_cast %103 : vector<64x256xf32> to vector<1x64x256xf32>
    tpu.vector_store %arg14[%c0_76, %c0_77, %c0_78], %106 {strides = array<i32>} : memref<1x64x256xf32, #tpu.memory_space<vmem>>, vector<1x64x256xf32>,
    return
  }
  func.func @transform_0(%arg0: i32) -> (i32, i32, i32) {
    %c0_i32 = arith.constant 0 : i32
    %c0_i32_0 = arith.constant 0 : i32
    %c0_i32_1 = arith.constant 0 : i32
    return %arg0, %c0_i32, %c0_i32_0 : i32, i32, i32
  }
  func.func @transform_1(%arg0: i32) -> (i32, i32, i32) {
    %c0_i32 = arith.constant 0 : i32
    %c0_i32_0 = arith.constant 0 : i32
    %c0_i32_1 = arith.constant 0 : i32
    return %arg0, %c0_i32, %c0_i32_0 : i32, i32, i32
  }
  func.func @transform_2(%arg0: i32) -> (i32, i32) {
    %c0_i32 = arith.constant 0 : i32
    %c0_i32_0 = arith.constant 0 : i32
    %c0_i32_1 = arith.constant 0 : i32
    return %c0_i32, %c0_i32_0 : i32, i32
  }
  func.func @transform_3(%arg0: i32) -> (i32, i32) {
    %c0_i32 = arith.constant 0 : i32
    %c0_i32_0 = arith.constant 0 : i32
    %c0_i32_1 = arith.constant 0 : i32
    return %c0_i32, %c0_i32_0 : i32, i32
  }
  func.func @transform_4(%arg0: i32) -> (i32, i32) {
    %c0_i32 = arith.constant 0 : i32
    %c0_i32_0 = arith.constant 0 : i32
    %c0_i32_1 = arith.constant 0 : i32
    return %c0_i32, %c0_i32_0 : i32, i32
  }
  func.func @transform_5(%arg0: i32) -> (i32, i32) {
    %c0_i32 = arith.constant 0 : i32
    %c0_i32_0 = arith.constant 0 : i32
    %c0_i32_1 = arith.constant 0 : i32
    return %c0_i32, %c0_i32_0 : i32, i32
  }
  func.func @transform_6(%arg0: i32) -> (i32, i32) {
    %c0_i32 = arith.constant 0 : i32
    %c0_i32_0 = arith.constant 0 : i32
    %c0_i32_1 = arith.constant 0 : i32
    return %c0_i32, %c0_i32_0 : i32, i32
  }
  func.func @transform_7(%arg0: i32) -> (i32, i32) {
    %c0_i32 = arith.constant 0 : i32
    %c0_i32_0 = arith.constant 0 : i32
    %c0_i32_1 = arith.constant 0 : i32
    return %c0_i32, %c0_i32_0 : i32, i32
  }
  func.func @transform_8(%arg0: i32) -> (i32, i32) {
    %c0_i32 = arith.constant 0 : i32
    %c0_i32_0 = arith.constant 0 : i32
    %c0_i32_1 = arith.constant 0 : i32
    return %c0_i32, %c0_i32_0 : i32, i32
  }
  func.func @transform_9(%arg0: i32) -> (i32, i32) {
    %c0_i32 = arith.constant 0 : i32
    %c0_i32_0 = arith.constant 0 : i32
    %c0_i32_1 = arith.constant 0 : i32
    return %c0_i32, %c0_i32_0 : i32, i32
  }
  func.func @transform_10(%arg0: i32) -> (i32, i32) {
    %c0_i32 = arith.constant 0 : i32
    %c0_i32_0 = arith.constant 0 : i32
    %c0_i32_1 = arith.constant 0 : i32
    return %c0_i32, %c0_i32_0 : i32, i32
  }
  func.func @transform_11(%arg0: i32) -> (i32, i32) {
    %c0_i32 = arith.constant 0 : i32
    %c0_i32_0 = arith.constant 0 : i32
    %c0_i32_1 = arith.constant 0 : i32
    return %c0_i32, %c0_i32_0 : i32, i32
  }
  func.func @transform_12(%arg0: i32) -> (i32, i32) {
    %c0_i32 = arith.constant 0 : i32
    %c0_i32_0 = arith.constant 0 : i32
    %c0_i32_1 = arith.constant 0 : i32
    return %c0_i32, %c0_i32_0 : i32, i32
  }
  func.func @transform_13(%arg0: i32) -> (i32, i32, i32) {
    %c0_i32 = arith.constant 0 : i32
    %c0_i32_0 = arith.constant 0 : i32
    %c0_i32_1 = arith.constant 0 : i32
    return %arg0, %c0_i32, %c0_i32_0 : i32, i32, i32
  }
}

</mosaic_0001>

<llo_original>
// kernel: fuse_forward.1
$region0: #{fuse_forward.1}
  #allocation0 [shape = 'u32[]', space=smem, size = 0x4, offset = 0x4, fixed_abs, tag = 'smem constant byte address 0x4 - core index']
  #allocation1 [shape = 'u32[72,128]{1,0:T(1,128)}', space=vmem, size = 0x9000, scoped, tag = 'internal scratch']
  #allocation2 [shape = 'f32[64,512]{1,0:T(8,128)}', space=vmem, size = 0x20000, scoped, tag = 'scratch operand']
  #allocation3 [shape = 'f32[576,256]{1,0:T(8,128)}', space=vmem, size = 0x90000, scoped, tag = 'scratch operand']
  %s0 = inlined_call_operand.vmem [shape: f32[2,64,256], index: 0, kind: input, shape index: {}]
  %s1 = inlined_call_operand.vmem [shape: f32[2,64,256], index: 1, kind: input, shape index: {}]
  %s2 = inlined_call_operand.vmem [shape: f32[64,16], index: 2, kind: input, shape index: {}]
  %s3 = inlined_call_operand.vmem [shape: f32[1,16], index: 3, kind: input, shape index: {}]
  %s4 = inlined_call_operand.vmem [shape: f32[64,16], index: 4, kind: input, shape index: {}]
  %s5 = inlined_call_operand.vmem [shape: f32[64,1], index: 5, kind: input, shape index: {}]
  %s6 = inlined_call_operand.vmem [shape: f32[16,64], index: 6, kind: input, shape index: {}]
  %s7 = inlined_call_operand.vmem [shape: f32[16,1], index: 7, kind: input, shape index: {}]
  %s8 = inlined_call_operand.vmem [shape: f32[64,16], index: 8, kind: input, shape index: {}]
  %s9 = inlined_call_operand.vmem [shape: f32[64,1], index: 9, kind: input, shape index: {}]
  %s10 = inlined_call_operand.vmem [shape: f32[64,576], index: 10, kind: input, shape index: {}]
  %s11 = inlined_call_operand.vmem [shape: f32[64,1], index: 11, kind: input, shape index: {}]
  %s12 = inlined_call_operand.vmem [shape: f32[2,256], index: 12, kind: input, shape index: {}]
  %s13 = inlined_call_operand.vmem [shape: f32[2,64,256], index: 13, kind: output, shape index: {}]
  %s14 = sld [smem:[#allocation0]]
  $region85: #{fuse_forward.1} parent=0
    _
  %s16 = ssub.s32 1, %s14
  %s17 = scalar_select 0, %s16, %s14
  loop: start=0, step=1, limit=4
  $region2: #{fuse_forward.1} parent=0 // loop_pre_header
    _
  $region3: #{fuse_forward.1} parent=0 // loop_header
    %s19 = sphi 0, %s23
    %p20 = scmp.ge.s32.totalorder %s19, 4
    %s29 = sphi 0, %s31
    %s32 = sphi 0, %s29
    %s33 = sphi 0, %s32
    %s49 = sphi 0, %s33
    %s55 = sphi 0, %s57
    %s58 = sphi 0, %s55
    %s59 = sphi 0, %s58
    %s75 = sphi 0, %s59
    %s79 = sphi 0, %s79
    %s81 = sphi 0, %s79
    %s82 = sphi 0, %s81
    %s96 = sphi 0, %s82
    %s100 = sphi 0, %s100
    %s102 = sphi 0, %s100
    %s103 = sphi 0, %s102
    %s117 = sphi 0, %s103
    %s121 = sphi 0, %s121
    %s123 = sphi 0, %s121
    %s124 = sphi 0, %s123
    %s138 = sphi 0, %s124
    %s142 = sphi 0, %s142
    %s144 = sphi 0, %s142
    %s145 = sphi 0, %s144
    %s159 = sphi 0, %s145
    %s163 = sphi 0, %s163
    %s165 = sphi 0, %s163
    %s166 = sphi 0, %s165
    %s180 = sphi 0, %s166
    %s184 = sphi 0, %s184
    %s186 = sphi 0, %s184
    %s187 = sphi 0, %s186
    %s201 = sphi 0, %s187
    %s205 = sphi 0, %s205
    %s207 = sphi 0, %s205
    %s208 = sphi 0, %s207
    %s222 = sphi 0, %s208
    %s226 = sphi 0, %s226
    %s228 = sphi 0, %s226
    %s229 = sphi 0, %s228
    %s243 = sphi 0, %s229
    %s247 = sphi 0, %s247
    %s249 = sphi 0, %s247
    %s250 = sphi 0, %s249
    %s264 = sphi 0, %s250
    %s268 = sphi 0, %s268
    %s270 = sphi 0, %s268
    %s271 = sphi 0, %s270
    %s285 = sphi 0, %s271
    %s289 = sphi 0, %s289
    %s291 = sphi 0, %s289
    %s292 = sphi 0, %s291
    %s306 = sphi 0, %s292
    %s312 = sphi 0, %s314
    %s315 = sphi 0, %s312
    %s316 = sphi 0, %s315
    %s332 = sphi 0, %s316
  $region4: #{fuse_forward.1} parent=0 // loop_header_branch
    %22 = sbr.rel (%p20) target = $region8
  $region5: #{fuse_forward.1} parent=0 // loop_body
    %s24 = ssub.s32 %s19, 1
    %s25 = ssub.s32 %s19, 2
    %s26 = sadd.s32 %s19, 1
    %s27 = ssub.s32 %s19, %s26
    %p28 = scmp.eq.s32.totalorder %s27, 0
    %s30 = sadd.s32 %s29, 1
    %s31 = scalar_select %p28, %s29, %s30
    %p34 = pneg %p28
    %p35 = scmp.eq.s32.totalorder %s19, 1
    %p36 = por %p34, %p35
    %p37 = scmp.ne.s32.totalorder %s29, %s32
    %p38 = scmp.eq.s32.totalorder %s19, 0
    %p39 = por %p37, %p38
    %p40 = scmp.ne.s32.totalorder %s29, %s32
    %p41 = scmp.eq.s32.totalorder %s24, 1
    %p42 = por %p40, %p41
    %p43 = scmp.ne.s32.totalorder %s32, %s33
    %p44 = scmp.eq.s32.totalorder %s24, 0
    %p45 = por %p43, %p44
    %p46 = scmp.ne.s32.totalorder %s32, %s33
    %p47 = scmp.eq.s32.totalorder %s25, 1
    %p48 = por %p46, %p47
    %p50 = scmp.ne.s32.totalorder %s33, %s49
    %p51 = scmp.eq.s32.totalorder %s25, 0
    %p52 = por %p50, %p51
    %s53 = ssub.s32 %s19, %s26
    %p54 = scmp.eq.s32.totalorder %s53, 0
    %s56 = sadd.s32 %s55, 1
    %s57 = scalar_select %p54, %s55, %s56
    %p60 = pneg %p54
    %p61 = scmp.eq.s32.totalorder %s19, 1
    %p62 = por %p60, %p61
    %p63 = scmp.ne.s32.totalorder %s55, %s58
    %p64 = scmp.eq.s32.totalorder %s19, 0
    %p65 = por %p63, %p64
    %p66 = scmp.ne.s32.totalorder %s55, %s58
    %p67 = scmp.eq.s32.totalorder %s24, 1
    %p68 = por %p66, %p67
    %p69 = scmp.ne.s32.totalorder %s58, %s59
    %p70 = scmp.eq.s32.totalorder %s24, 0
    %p71 = por %p69, %p70
    %p72 = scmp.ne.s32.totalorder %s58, %s59
    %p73 = scmp.eq.s32.totalorder %s25, 1
    %p74 = por %p72, %p73
    %p76 = scmp.ne.s32.totalorder %s59, %s75
    %p77 = scmp.eq.s32.totalorder %s25, 0
    %p78 = por %p76, %p77
    %s80 = sadd.s32 %s79, 1
    %p83 = scmp.eq.s32.totalorder %s19, 1
    %p84 = scmp.ne.s32.totalorder %s79, %s81
    %p85 = scmp.eq.s32.totalorder %s19, 0
    %p86 = por %p84, %p85
    %p87 = scmp.ne.s32.totalorder %s79, %s81
    %p88 = scmp.eq.s32.totalorder %s24, 1
    %p89 = por %p87, %p88
    %p90 = scmp.ne.s32.totalorder %s81, %s82
    %p91 = scmp.eq.s32.totalorder %s24, 0
    %p92 = por %p90, %p91
    %p93 = scmp.ne.s32.totalorder %s81, %s82
    %p94 = scmp.eq.s32.totalorder %s25, 1
    %p95 = por %p93, %p94
    %p97 = scmp.ne.s32.totalorder %s82, %s96
    %p98 = scmp.eq.s32.totalorder %s25, 0
    %p99 = por %p97, %p98
    %s101 = sadd.s32 %s100, 1
    %p104 = scmp.eq.s32.totalorder %s19, 1
    %p105 = scmp.ne.s32.totalorder %s100, %s102
    %p106 = scmp.eq.s32.totalorder %s19, 0
    %p107 = por %p105, %p106
    %p108 = scmp.ne.s32.totalorder %s100, %s102
    %p109 = scmp.eq.s32.totalorder %s24, 1
    %p110 = por %p108, %p109
    %p111 = scmp.ne.s32.totalorder %s102, %s103
    %p112 = scmp.eq.s32.totalorder %s24, 0
    %p113 = por %p111, %p112
    %p114 = scmp.ne.s32.totalorder %s102, %s103
    %p115 = scmp.eq.s32.totalorder %s25, 1
    %p116 = por %p114, %p115
    %p118 = scmp.ne.s32.totalorder %s103, %s117
    %p119 = scmp.eq.s32.totalorder %s25, 0
    %p120 = por %p118, %p119
    %s122 = sadd.s32 %s121, 1
    %p125 = scmp.eq.s32.totalorder %s19, 1
    %p126 = scmp.ne.s32.totalorder %s121, %s123
    %p127 = scmp.eq.s32.totalorder %s19, 0
    %p128 = por %p126, %p127
    %p129 = scmp.ne.s32.totalorder %s121, %s123
    %p130 = scmp.eq.s32.totalorder %s24, 1
    %p131 = por %p129, %p130
    %p132 = scmp.ne.s32.totalorder %s123, %s124
    %p133 = scmp.eq.s32.totalorder %s24, 0
    %p134 = por %p132, %p133
    %p135 = scmp.ne.s32.totalorder %s123, %s124
    %p136 = scmp.eq.s32.totalorder %s25, 1
    %p137 = por %p135, %p136
    %p139 = scmp.ne.s32.totalorder %s124, %s138
    %p140 = scmp.eq.s32.totalorder %s25, 0
    %p141 = por %p139, %p140
    %s143 = sadd.s32 %s142, 1
    %p146 = scmp.eq.s32.totalorder %s19, 1
    %p147 = scmp.ne.s32.totalorder %s142, %s144
    %p148 = scmp.eq.s32.totalorder %s19, 0
    %p149 = por %p147, %p148
    %p150 = scmp.ne.s32.totalorder %s142, %s144
    %p151 = scmp.eq.s32.totalorder %s24, 1
    %p152 = por %p150, %p151
    %p153 = scmp.ne.s32.totalorder %s144, %s145
    %p154 = scmp.eq.s32.totalorder %s24, 0
    %p155 = por %p153, %p154
    %p156 = scmp.ne.s32.totalorder %s144, %s145
    %p157 = scmp.eq.s32.totalorder %s25, 1
    %p158 = por %p156, %p157
    %p160 = scmp.ne.s32.totalorder %s145, %s159
    %p161 = scmp.eq.s32.totalorder %s25, 0
    %p162 = por %p160, %p161
    %s164 = sadd.s32 %s163, 1
    %p167 = scmp.eq.s32.totalorder %s19, 1
    %p168 = scmp.ne.s32.totalorder %s163, %s165
    %p169 = scmp.eq.s32.totalorder %s19, 0
    %p170 = por %p168, %p169
    %p171 = scmp.ne.s32.totalorder %s163, %s165
    %p172 = scmp.eq.s32.totalorder %s24, 1
    %p173 = por %p171, %p172
    %p174 = scmp.ne.s32.totalorder %s165, %s166
    %p175 = scmp.eq.s32.totalorder %s24, 0
    %p176 = por %p174, %p175
    %p177 = scmp.ne.s32.totalorder %s165, %s166
    %p178 = scmp.eq.s32.totalorder %s25, 1
    %p179 = por %p177, %p178
    %p181 = scmp.ne.s32.totalorder %s166, %s180
    %p182 = scmp.eq.s32.totalorder %s25, 0
    %p183 = por %p181, %p182
    %s185 = sadd.s32 %s184, 1
    %p188 = scmp.eq.s32.totalorder %s19, 1
    %p189 = scmp.ne.s32.totalorder %s184, %s186
    %p190 = scmp.eq.s32.totalorder %s19, 0
    %p191 = por %p189, %p190
    %p192 = scmp.ne.s32.totalorder %s184, %s186
    %p193 = scmp.eq.s32.totalorder %s24, 1
    %p194 = por %p192, %p193
    %p195 = scmp.ne.s32.totalorder %s186, %s187
    %p196 = scmp.eq.s32.totalorder %s24, 0
    %p197 = por %p195, %p196
    %p198 = scmp.ne.s32.totalorder %s186, %s187
    %p199 = scmp.eq.s32.totalorder %s25, 1
    %p200 = por %p198, %p199
    %p202 = scmp.ne.s32.totalorder %s187, %s201
    %p203 = scmp.eq.s32.totalorder %s25, 0
    %p204 = por %p202, %p203
    %s206 = sadd.s32 %s205, 1
    %p209 = scmp.eq.s32.totalorder %s19, 1
    %p210 = scmp.ne.s32.totalorder %s205, %s207
    %p211 = scmp.eq.s32.totalorder %s19, 0
    %p212 = por %p210, %p211
    %p213 = scmp.ne.s32.totalorder %s205, %s207
    %p214 = scmp.eq.s32.totalorder %s24, 1
    %p215 = por %p213, %p214
    %p216 = scmp.ne.s32.totalorder %s207, %s208
    %p217 = scmp.eq.s32.totalorder %s24, 0
    %p218 = por %p216, %p217
    %p219 = scmp.ne.s32.totalorder %s207, %s208
    %p220 = scmp.eq.s32.totalorder %s25, 1
    %p221 = por %p219, %p220
    %p223 = scmp.ne.s32.totalorder %s208, %s222
    %p224 = scmp.eq.s32.totalorder %s25, 0
    %p225 = por %p223, %p224
    %s227 = sadd.s32 %s226, 1
    %p230 = scmp.eq.s32.totalorder %s19, 1
    %p231 = scmp.ne.s32.totalorder %s226, %s228
    %p232 = scmp.eq.s32.totalorder %s19, 0
    %p233 = por %p231, %p232
    %p234 = scmp.ne.s32.totalorder %s226, %s228
    %p235 = scmp.eq.s32.totalorder %s24, 1
    %p236 = por %p234, %p235
    %p237 = scmp.ne.s32.totalorder %s228, %s229
    %p238 = scmp.eq.s32.totalorder %s24, 0
    %p239 = por %p237, %p238
    %p240 = scmp.ne.s32.totalorder %s228, %s229
    %p241 = scmp.eq.s32.totalorder %s25, 1
    %p242 = por %p240, %p241
    %p244 = scmp.ne.s32.totalorder %s229, %s243
    %p245 = scmp.eq.s32.totalorder %s25, 0
    %p246 = por %p244, %p245
    %s248 = sadd.s32 %s247, 1
    %p251 = scmp.eq.s32.totalorder %s19, 1
    %p252 = scmp.ne.s32.totalorder %s247, %s249
    %p253 = scmp.eq.s32.totalorder %s19, 0
    %p254 = por %p252, %p253
    %p255 = scmp.ne.s32.totalorder %s247, %s249
    %p256 = scmp.eq.s32.totalorder %s24, 1
    %p257 = por %p255, %p256
    %p258 = scmp.ne.s32.totalorder %s249, %s250
    %p259 = scmp.eq.s32.totalorder %s24, 0
    %p260 = por %p258, %p259
    %p261 = scmp.ne.s32.totalorder %s249, %s250
    %p262 = scmp.eq.s32.totalorder %s25, 1
    %p263 = por %p261, %p262
    %p265 = scmp.ne.s32.totalorder %s250, %s264
    %p266 = scmp.eq.s32.totalorder %s25, 0
    %p267 = por %p265, %p266
    %s269 = sadd.s32 %s268, 1
    %p272 = scmp.eq.s32.totalorder %s19, 1
    %p273 = scmp.ne.s32.totalorder %s268, %s270
    %p274 = scmp.eq.s32.totalorder %s19, 0
    %p275 = por %p273, %p274
    %p276 = scmp.ne.s32.totalorder %s268, %s270
    %p277 = scmp.eq.s32.totalorder %s24, 1
    %p278 = por %p276, %p277
    %p279 = scmp.ne.s32.totalorder %s270, %s271
    %p280 = scmp.eq.s32.totalorder %s24, 0
    %p281 = por %p279, %p280
    %p282 = scmp.ne.s32.totalorder %s270, %s271
    %p283 = scmp.eq.s32.totalorder %s25, 1
    %p284 = por %p282, %p283
    %p286 = scmp.ne.s32.totalorder %s271, %s285
    %p287 = scmp.eq.s32.totalorder %s25, 0
    %p288 = por %p286, %p287
    %s290 = sadd.s32 %s289, 1
    %p293 = scmp.eq.s32.totalorder %s19, 1
    %p294 = scmp.ne.s32.totalorder %s289, %s291
    %p295 = scmp.eq.s32.totalorder %s19, 0
    %p296 = por %p294, %p295
    %p297 = scmp.ne.s32.totalorder %s289, %s291
    %p298 = scmp.eq.s32.totalorder %s24, 1
    %p299 = por %p297, %p298
    %p300 = scmp.ne.s32.totalorder %s291, %s292
    %p301 = scmp.eq.s32.totalorder %s24, 0
    %p302 = por %p300, %p301
    %p303 = scmp.ne.s32.totalorder %s291, %s292
    %p304 = scmp.eq.s32.totalorder %s25, 1
    %p305 = por %p303, %p304
    %p307 = scmp.ne.s32.totalorder %s292, %s306
    %p308 = scmp.eq.s32.totalorder %s25, 0
    %p309 = por %p307, %p308
    %s310 = ssub.s32 %s19, %s26
    %p311 = scmp.eq.s32.totalorder %s310, 0
    %s313 = sadd.s32 %s312, 1
    %s314 = scalar_select %p311, %s312, %s313
    %p317 = pneg %p311
    %p318 = scmp.eq.s32.totalorder %s19, 1
    %p319 = por %p317, %p318
    %p320 = scmp.ne.s32.totalorder %s312, %s315
    %p321 = scmp.eq.s32.totalorder %s19, 0
    %p322 = por %p320, %p321
    %p323 = scmp.ne.s32.totalorder %s312, %s315
    %p324 = scmp.eq.s32.totalorder %s24, 1
    %p325 = por %p323, %p324
    %p326 = scmp.ne.s32.totalorder %s315, %s316
    %p327 = scmp.eq.s32.totalorder %s24, 0
    %p328 = por %p326, %p327
    %p329 = scmp.ne.s32.totalorder %s315, %s316
    %p330 = scmp.eq.s32.totalorder %s25, 1
    %p331 = por %p329, %p330
    %p333 = scmp.ne.s32.totalorder %s316, %s332
    %p334 = scmp.eq.s32.totalorder %s25, 0
    %p335 = por %p333, %p334
    %p336 = scmp.le.s32.totalorder 1, %s19
    %p337 = scmp.lt.s32.totalorder %s19, 3
    %p338 = pnand %p336, %p337
    %p339 = pneg %p338
    // Predicated region
    $region9: #{fuse_forward.1} parent=5 // pred_check
      _
    $region10: #{fuse_forward.1} parent=5 // pred_check_branch
      %341 = sbr.rel (%p338) target = $region12
    $region11: #{fuse_forward.1} parent=5 // pred_region
      %s342 = ssub.s32 %s19, 1
      // Predicated region
      $region13: #{fuse_forward.1} parent=11 // pred_check
        %p343 = pneg %p92
      $region14: #{fuse_forward.1} parent=11 // pred_check_branch
        %345 = sbr.rel (%p343) target = $region16
      $region15: #{fuse_forward.1} parent=11 // pred_region
        _
      $region16: #{fuse_forward.1} parent=11 // pred_fallthru
        _
      // Predicated region
      $region17: #{fuse_forward.1} parent=11 // pred_check
        %p346 = pneg %p113
      $region18: #{fuse_forward.1} parent=11 // pred_check_branch
        %348 = sbr.rel (%p346) target = $region20
      $region19: #{fuse_forward.1} parent=11 // pred_region
        _
      $region20: #{fuse_forward.1} parent=11 // pred_fallthru
        _
      // Predicated region
      $region21: #{fuse_forward.1} parent=11 // pred_check
        %p349 = pneg %p134
      $region22: #{fuse_forward.1} parent=11 // pred_check_branch
        %351 = sbr.rel (%p349) target = $region24
      $region23: #{fuse_forward.1} parent=11 // pred_region
        _
      $region24: #{fuse_forward.1} parent=11 // pred_fallthru
        _
      // Predicated region
      $region25: #{fuse_forward.1} parent=11 // pred_check
        %p352 = pneg %p155
      $region26: #{fuse_forward.1} parent=11 // pred_check_branch
        %354 = sbr.rel (%p352) target = $region28
      $region27: #{fuse_forward.1} parent=11 // pred_region
        _
      $region28: #{fuse_forward.1} parent=11 // pred_fallthru
        _
      // Predicated region
      $region29: #{fuse_forward.1} parent=11 // pred_check
        %p355 = pneg %p176
      $region30: #{fuse_forward.1} parent=11 // pred_check_branch
        %357 = sbr.rel (%p355) target = $region32
      $region31: #{fuse_forward.1} parent=11 // pred_region
        _
      $region32: #{fuse_forward.1} parent=11 // pred_fallthru
        _
      // Predicated region
      $region33: #{fuse_forward.1} parent=11 // pred_check
        %p358 = pneg %p197
      $region34: #{fuse_forward.1} parent=11 // pred_check_branch
        %360 = sbr.rel (%p358) target = $region36
      $region35: #{fuse_forward.1} parent=11 // pred_region
        _
      $region36: #{fuse_forward.1} parent=11 // pred_fallthru
        _
      // Predicated region
      $region37: #{fuse_forward.1} parent=11 // pred_check
        %p361 = pneg %p218
      $region38: #{fuse_forward.1} parent=11 // pred_check_branch
        %363 = sbr.rel (%p361) target = $region40
      $region39: #{fuse_forward.1} parent=11 // pred_region
        _
      $region40: #{fuse_forward.1} parent=11 // pred_fallthru
        _
      // Predicated region
      $region41: #{fuse_forward.1} parent=11 // pred_check
        %p364 = pneg %p239
      $region42: #{fuse_forward.1} parent=11 // pred_check_branch
        %366 = sbr.rel (%p364) target = $region44
      $region43: #{fuse_forward.1} parent=11 // pred_region
        _
      $region44: #{fuse_forward.1} parent=11 // pred_fallthru
        _
      // Predicated region
      $region45: #{fuse_forward.1} parent=11 // pred_check
        %p367 = pneg %p260
      $region46: #{fuse_forward.1} parent=11 // pred_check_branch
        %369 = sbr.rel (%p367) target = $region48
      $region47: #{fuse_forward.1} parent=11 // pred_region
        _
      $region48: #{fuse_forward.1} parent=11 // pred_fallthru
        _
      // Predicated region
      $region49: #{fuse_forward.1} parent=11 // pred_check
        %p370 = pneg %p281
      $region50: #{fuse_forward.1} parent=11 // pred_check_branch
        %372 = sbr.rel (%p370) target = $region52
      $region51: #{fuse_forward.1} parent=11 // pred_region
        _
      $region52: #{fuse_forward.1} parent=11 // pred_fallthru
        _
      // Predicated region
      $region53: #{fuse_forward.1} parent=11 // pred_check
        %p373 = pneg %p302
      $region54: #{fuse_forward.1} parent=11 // pred_check_branch
        %375 = sbr.rel (%p373) target = $region56
      $region55: #{fuse_forward.1} parent=11 // pred_region
        _
      $region56: #{fuse_forward.1} parent=11 // pred_fallthru
        _
    $region12: #{fuse_forward.1} parent=5 // pred_fallthru
      _
    %p376 = scmp.lt.s32.totalorder %s19, 2
    // Predicated region
    $region57: #{fuse_forward.1} parent=5 // pred_check
      %p377 = pneg %p376
    $region58: #{fuse_forward.1} parent=5 // pred_check_branch
      %379 = sbr.rel (%p377) target = $region60
    $region59: #{fuse_forward.1} parent=5 // pred_region
      // Predicated region
      $region61: #{fuse_forward.1} parent=59 // pred_check
        %p380 = pneg %p39
      $region62: #{fuse_forward.1} parent=59 // pred_check_branch
        %382 = sbr.rel (%p380) target = $region64
      $region63: #{fuse_forward.1} parent=59 // pred_region
        %p383 = scmp.lt.s32.totalorder %s19, 1
        %s384 = scalar_select %p383, %s19, 1
        %s385 = smul.addr %s384, 16
        %s386 = smul.addr %s385, 8
        %s387 = scalar_lea.vmem %s0, %s386
      $region64: #{fuse_forward.1} parent=59 // pred_fallthru
        _
      // Predicated region
      $region65: #{fuse_forward.1} parent=59 // pred_check
        %p388 = pneg %p65
      $region66: #{fuse_forward.1} parent=59 // pred_check_branch
        %390 = sbr.rel (%p388) target = $region68
      $region67: #{fuse_forward.1} parent=59 // pred_region
        %p391 = scmp.lt.s32.totalorder %s19, 1
        %s392 = scalar_select %p391, %s19, 1
        %s393 = smul.addr %s392, 16
        %s394 = smul.addr %s393, 8
        %s395 = scalar_lea.vmem %s1, %s394
      $region68: #{fuse_forward.1} parent=59 // pred_fallthru
        _
    $region60: #{fuse_forward.1} parent=5 // pred_fallthru
      _
    %p396 = scmp.le.s32.totalorder 1, %s19
    %p397 = scmp.lt.s32.totalorder %s19, 3
    %p398 = pnand %p396, %p397
    %p399 = pneg %p398
    // Predicated region
    $region69: #{fuse_forward.1} parent=5 // pred_check
      _
    $region70: #{fuse_forward.1} parent=5 // pred_check_branch
      %401 = sbr.rel (%p398) target = $region72
    $region71: #{fuse_forward.1} parent=5 // pred_region
      %s402 = ssub.s32 %s19, 1
      %p403 = scmp.lt.s32.totalorder %s24, 1
      %s404 = scalar_select %p403, %s24, 1
      %s405 = smul.addr %s404, 16
      %s406 = smul.addr %s405, 8
      %s407 = scalar_lea.vmem %s0, %s406
      %p408 = pneg %p45
      %p409 = pneg %p42
      %p410 = scmp.lt.s32.totalorder %s24, 1
      %s411 = scalar_select %p410, %s24, 1
      %s412 = smul.addr %s411, 16
      %s413 = smul.addr %s412, 8
      %s414 = scalar_lea.vmem %s1, %s413
      %p415 = pneg %p71
      %p416 = pneg %p68
      %p417 = pneg %p92
      %p418 = pneg %p89
      %p419 = pneg %p113
      %p420 = pneg %p110
      %p421 = pneg %p134
      %p422 = pneg %p131
      %p423 = pneg %p155
      %p424 = pneg %p152
      %p425 = pneg %p176
      %p426 = pneg %p173
      %p427 = pneg %p197
      %p428 = pneg %p194
      %p429 = pneg %p218
      %p430 = pneg %p215
      %p431 = pneg %p239
      %p432 = pneg %p236
      %p433 = pneg %p260
      %p434 = pneg %p257
      %p435 = pneg %p281
      %p436 = pneg %p278
      %p437 = pneg %p302
      %p438 = pneg %p299
      %p439 = pneg %p328
      %p440 = pneg %p325
      %p441 = scmp.lt.s32.totalorder %s24, 1
      %s442 = scalar_select %p441, %s24, 1
      %s443 = smul.addr %s442, 16
      %s444 = smul.addr %s443, 8
      %s445 = scalar_lea.vmem %s13, %s444
      %p446 = scmp.lt.s32.totalorder %s24, 1
      %s447 = scalar_select %p446, %s24, 1
      %s448 = smul.addr %s447, 16
      %s449 = smul.addr %s448, 8
      %s450 = scalar_lea.vmem %s0, %s449
      %p451 = scmp.lt.s32.totalorder %s24, 1
      %s452 = scalar_select %p451, %s24, 1
      %s453 = smul.addr %s452, 16
      %s454 = smul.addr %s453, 8
      %s455 = scalar_lea.vmem %s1, %s454
      %p456 = scmp.lt.s32.totalorder %s24, 1
      %s457 = scalar_select %p456, %s24, 1
      %s458 = smul.addr %s457, 16
      %s459 = smul.addr %s458, 8
      %s460 = scalar_lea.vmem %s13, %s459
      %v461 = vld [vmem:[%s455] sm:$0xff]
      %v462 = vld [vmem:[%s455 + $0x8] sm:$0xff]
      %v463 = vld [vmem:[%s455 + $0x10] sm:$0xff]
      %v464 = vld [vmem:[%s455 + $0x18] sm:$0xff]
      %v465 = vld [vmem:[%s455 + $0x20] sm:$0xff]
      %v466 = vld [vmem:[%s455 + $0x28] sm:$0xff]
      %v467 = vld [vmem:[%s455 + $0x30] sm:$0xff]
      %v468 = vld [vmem:[%s455 + $0x38] sm:$0xff]
      %v469 = vld [vmem:[%s455 + $0x40] sm:$0xff]
      %v470 = vld [vmem:[%s455 + $0x48] sm:$0xff]
      %v471 = vld [vmem:[%s455 + $0x50] sm:$0xff]
      %v472 = vld [vmem:[%s455 + $0x58] sm:$0xff]
      %v473 = vld [vmem:[%s455 + $0x60] sm:$0xff]
      %v474 = vld [vmem:[%s455 + $0x68] sm:$0xff]
      %v475 = vld [vmem:[%s455 + $0x70] sm:$0xff]
      %v476 = vld [vmem:[%s455 + $0x78] sm:$0xff]
      %v477 = vld [vmem:[%s6] sm:$0xff]
      %v478 = vld [vmem:[%s6 + $0x8] sm:$0xff]
      %v479 = vld [vmem:[%s7] sm:$0xff]
      %v480 = vld [vmem:[%s7 + $0x8] sm:$0xff]
      %482 = vset.pattern.permute.xlu0 0
      %483 = vperm.xlu0 %482, %v479
      %v484 = vpop.permute.xlu0 %483
      %487 = vset.pattern.permute.xlu0 0
      %488 = vperm.xlu0 %487, %v480
      %v489 = vpop.permute.xlu0 %488
      %vm491 = vcmask 523264
      %v493 = vsel %vm491, %v477, 0
      %v496 = vsel %vm491, %v478, 0
      %498 = vmatpush.msra.mxu0 0.0
      %499 = vmatpush.msra.mxu0 0.0
      %500 = vmatpush.msra.mxu0 0.0
      %501 = vmatpush.msra.mxu0 0.0
      %502 = vmatpush.msra.mxu0 0.0
      %503 = vmatpush.msra.mxu0 0.0
      %504 = vmatpush.msra.mxu0 0.0
      %505 = vmatpush.msra.mxu0 0.0
      %506 = vmatpush.msra.mxu0 %v475
      %507 = vmatpush.msra.mxu0 %v473
      %508 = vmatpush.msra.mxu0 %v471
      %509 = vmatpush.msra.mxu0 %v469
      %510 = vmatpush.msra.mxu0 %v467
      %511 = vmatpush.msra.mxu0 %v465
      %512 = vmatpush.msra.mxu0 %v463
      %513 = vmatpush.msra.mxu0 %v461
      %514 = vmatmul.f32.gmra.mxu0 %v493
      %v515 = vpop.f32.mrf.mxu0
      %v516 = vadd.f32 %v484, %v515
      %517 = vmatmul.f32.gmra.mxu0 %v496
      %v518 = vpop.f32.mrf.mxu0
      %v519 = vadd.f32 %v489, %v518
      %520 = vdwg.mxu0
      %521 = vmatpush.msra.mxu0 0.0
      %522 = vmatpush.msra.mxu0 0.0
      %523 = vmatpush.msra.mxu0 0.0
      %524 = vmatpush.msra.mxu0 0.0
      %525 = vmatpush.msra.mxu0 0.0
      %526 = vmatpush.msra.mxu0 0.0
      %527 = vmatpush.msra.mxu0 0.0
      %528 = vmatpush.msra.mxu0 0.0
      %529 = vmatpush.msra.mxu0 %v476
      %530 = vmatpush.msra.mxu0 %v474
      %531 = vmatpush.msra.mxu0 %v472
      %532 = vmatpush.msra.mxu0 %v470
      %533 = vmatpush.msra.mxu0 %v468
      %534 = vmatpush.msra.mxu0 %v466
      %535 = vmatpush.msra.mxu0 %v464
      %536 = vmatpush.msra.mxu0 %v462
      %537 = vmatmul.f32.gmra.mxu0 %v493
      %v538 = vpop.f32.mrf.mxu0
      %v539 = vadd.f32 %v484, %v538
      %540 = vmatmul.f32.gmra.mxu0 %v496
      %v541 = vpop.f32.mrf.mxu0
      %v542 = vadd.f32 %v489, %v541
      %543 = vdwg.mxu0
      %v544 = vmax.f32 %v516, 0.0
      %v545 = vmax.f32 %v539, 0.0
      %v546 = vmax.f32 %v519, 0.0
      %v547 = vmax.f32 %v542, 0.0
      %v548 = vld [vmem:[%s8] sm:$0xff]
      %v549 = vld [vmem:[%s8 + $0x8] sm:$0xff]
      %v550 = vld [vmem:[%s8 + $0x10] sm:$0xff]
      %v551 = vld [vmem:[%s8 + $0x18] sm:$0xff]
      %v552 = vld [vmem:[%s8 + $0x20] sm:$0xff]
      %v553 = vld [vmem:[%s8 + $0x28] sm:$0xff]
      %v554 = vld [vmem:[%s8 + $0x30] sm:$0xff]
      %v555 = vld [vmem:[%s8 + $0x38] sm:$0xff]
      %v556 = vld [vmem:[%s9] sm:$0xff]
      %v557 = vld [vmem:[%s9 + $0x8] sm:$0xff]
      %v558 = vld [vmem:[%s9 + $0x10] sm:$0xff]
      %v559 = vld [vmem:[%s9 + $0x18] sm:$0xff]
      %v560 = vld [vmem:[%s9 + $0x20] sm:$0xff]
      %v561 = vld [vmem:[%s9 + $0x28] sm:$0xff]
      %v562 = vld [vmem:[%s9 + $0x30] sm:$0xff]
      %v563 = vld [vmem:[%s9 + $0x38] sm:$0xff]
      %565 = vset.pattern.permute.xlu0 0
      %566 = vperm.xlu0 %565, %v556
      %v567 = vpop.permute.xlu0 %566
      %570 = vset.pattern.permute.xlu0 0
      %571 = vperm.xlu0 %570, %v557
      %v572 = vpop.permute.xlu0 %571
      %575 = vset.pattern.permute.xlu0 0
      %576 = vperm.xlu0 %575, %v558
      %v577 = vpop.permute.xlu0 %576
      %580 = vset.pattern.permute.xlu0 0
      %581 = vperm.xlu0 %580, %v559
      %v582 = vpop.permute.xlu0 %581
      %585 = vset.pattern.permute.xlu0 0
      %586 = vperm.xlu0 %585, %v560
      %v587 = vpop.permute.xlu0 %586
      %590 = vset.pattern.permute.xlu0 0
      %591 = vperm.xlu0 %590, %v561
      %v592 = vpop.permute.xlu0 %591
      %595 = vset.pattern.permute.xlu0 0
      %596 = vperm.xlu0 %595, %v562
      %v597 = vpop.permute.xlu0 %596
      %600 = vset.pattern.permute.xlu0 0
      %601 = vperm.xlu0 %600, %v563
      %v602 = vpop.permute.xlu0 %601
      %vm604 = vcmask 130048
      %v606 = vsel %vm604, %v548, 0
      %v609 = vsel %vm604, %v549, 0
      %v612 = vsel %vm604, %v550, 0
      %v615 = vsel %vm604, %v551, 0
      %v618 = vsel %vm604, %v552, 0
      %v621 = vsel %vm604, %v553, 0
      %v624 = vsel %vm604, %v554, 0
      %v627 = vsel %vm604, %v555, 0
      %629 = vmatpush.msra.mxu0 0.0
      %630 = vmatpush.msra.mxu0 0.0
      %631 = vmatpush.msra.mxu0 0.0
      %632 = vmatpush.msra.mxu0 0.0
      %633 = vmatpush.msra.mxu0 0.0
      %634 = vmatpush.msra.mxu0 0.0
      %635 = vmatpush.msra.mxu0 0.0
      %636 = vmatpush.msra.mxu0 0.0
      %637 = vmatpush.msra.mxu0 0.0
      %638 = vmatpush.msra.mxu0 0.0
      %639 = vmatpush.msra.mxu0 0.0
      %640 = vmatpush.msra.mxu0 0.0
      %641 = vmatpush.msra.mxu0 0.0
      %642 = vmatpush.msra.mxu0 0.0
      %643 = vmatpush.msra.mxu0 %v546
      %644 = vmatpush.msra.mxu0 %v544
      %645 = vmatmul.f32.gmra.mxu0 %v606
      %v646 = vpop.f32.mrf.mxu0
      %v647 = vadd.f32 %v567, %v646
      %648 = vmatmul.f32.gmra.mxu0 %v609
      %v649 = vpop.f32.mrf.mxu0
      %v650 = vadd.f32 %v572, %v649
      %651 = vmatmul.f32.gmra.mxu0 %v612
      %v652 = vpop.f32.mrf.mxu0
      %v653 = vadd.f32 %v577, %v652
      %654 = vmatmul.f32.gmra.mxu0 %v615
      %v655 = vpop.f32.mrf.mxu0
      %v656 = vadd.f32 %v582, %v655
      %657 = vmatmul.f32.gmra.mxu0 %v618
      %v658 = vpop.f32.mrf.mxu0
      %v659 = vadd.f32 %v587, %v658
      %660 = vmatmul.f32.gmra.mxu0 %v621
      %v661 = vpop.f32.mrf.mxu0
      %v662 = vadd.f32 %v592, %v661
      %663 = vmatmul.f32.gmra.mxu0 %v624
      %v664 = vpop.f32.mrf.mxu0
      %v665 = vadd.f32 %v597, %v664
      %666 = vmatmul.f32.gmra.mxu0 %v627
      %v667 = vpop.f32.mrf.mxu0
      %v668 = vadd.f32 %v602, %v667
      %669 = vdwg.mxu0
      %670 = vmatpush.msra.mxu0 0.0
      %671 = vmatpush.msra.mxu0 0.0
      %672 = vmatpush.msra.mxu0 0.0
      %673 = vmatpush.msra.mxu0 0.0
      %674 = vmatpush.msra.mxu0 0.0
      %675 = vmatpush.msra.mxu0 0.0
      %676 = vmatpush.msra.mxu0 0.0
      %677 = vmatpush.msra.mxu0 0.0
      %678 = vmatpush.msra.mxu0 0.0
      %679 = vmatpush.msra.mxu0 0.0
      %680 = vmatpush.msra.mxu0 0.0
      %681 = vmatpush.msra.mxu0 0.0
      %682 = vmatpush.msra.mxu0 0.0
      %683 = vmatpush.msra.mxu0 0.0
      %684 = vmatpush.msra.mxu0 %v547
      %685 = vmatpush.msra.mxu0 %v545
      %686 = vmatmul.f32.gmra.mxu0 %v606
      %v687 = vpop.f32.mrf.mxu0
      %v688 = vadd.f32 %v567, %v687
      %689 = vmatmul.f32.gmra.mxu0 %v609
      %v690 = vpop.f32.mrf.mxu0
      %v691 = vadd.f32 %v572, %v690
      %692 = vmatmul.f32.gmra.mxu0 %v612
      %v693 = vpop.f32.mrf.mxu0
      %v694 = vadd.f32 %v577, %v693
      %695 = vmatmul.f32.gmra.mxu0 %v615
      %v696 = vpop.f32.mrf.mxu0
      %v697 = vadd.f32 %v582, %v696
      %698 = vmatmul.f32.gmra.mxu0 %v618
      %v699 = vpop.f32.mrf.mxu0
      %v700 = vadd.f32 %v587, %v699
      %701 = vmatmul.f32.gmra.mxu0 %v621
      %v702 = vpop.f32.mrf.mxu0
      %v703 = vadd.f32 %v592, %v702
      %704 = vmatmul.f32.gmra.mxu0 %v624
      %v705 = vpop.f32.mrf.mxu0
      %v706 = vadd.f32 %v597, %v705
      %707 = vmatmul.f32.gmra.mxu0 %v627
      %v708 = vpop.f32.mrf.mxu0
      %v709 = vadd.f32 %v602, %v708
      %710 = vdwg.mxu0
      %v711 = vmul.f32 %v647, 0.5
      %v712 = vmul.f32 %v688, 0.5
      %v713 = vmul.f32 %v650, 0.5
      %v714 = vmul.f32 %v691, 0.5
      %v715 = vmul.f32 %v653, 0.5
      %v716 = vmul.f32 %v694, 0.5
      %v717 = vmul.f32 %v656, 0.5
      %v718 = vmul.f32 %v697, 0.5
      %v719 = vmul.f32 %v659, 0.5
      %v720 = vmul.f32 %v700, 0.5
      %v721 = vmul.f32 %v662, 0.5
      %v722 = vmul.f32 %v703, 0.5
      %v723 = vmul.f32 %v665, 0.5
      %v724 = vmul.f32 %v706, 0.5
      %v725 = vmul.f32 %v668, 0.5
      %v726 = vmul.f32 %v709, 0.5
      %v727 = vtanh.pop %v711
      %v728 = vtanh.pop %v712
      %v729 = vtanh.pop %v713
      %v730 = vtanh.pop %v714
      %v731 = vtanh.pop %v715
      %v732 = vtanh.pop %v716
      %v733 = vtanh.pop %v717
      %v734 = vtanh.pop %v718
      %v735 = vtanh.pop %v719
      %v736 = vtanh.pop %v720
      %v737 = vtanh.pop %v721
      %v738 = vtanh.pop %v722
      %v739 = vtanh.pop %v723
      %v740 = vtanh.pop %v724
      %v741 = vtanh.pop %v725
      %v742 = vtanh.pop %v726
      %v743 = vadd.f32 %v727, 1.0
      %v744 = vadd.f32 %v728, 1.0
      %v745 = vadd.f32 %v729, 1.0
      %v746 = vadd.f32 %v730, 1.0
      %v747 = vadd.f32 %v731, 1.0
      %v748 = vadd.f32 %v732, 1.0
      %v749 = vadd.f32 %v733, 1.0
      %v750 = vadd.f32 %v734, 1.0
      %v751 = vadd.f32 %v735, 1.0
      %v752 = vadd.f32 %v736, 1.0
      %v753 = vadd.f32 %v737, 1.0
      %v754 = vadd.f32 %v738, 1.0
      %v755 = vadd.f32 %v739, 1.0
      %v756 = vadd.f32 %v740, 1.0
      %v757 = vadd.f32 %v741, 1.0
      %v758 = vadd.f32 %v742, 1.0
      %v759 = vmul.f32 %v743, 0.5
      %v760 = vmul.f32 %v744, 0.5
      %v761 = vmul.f32 %v745, 0.5
      %v762 = vmul.f32 %v746, 0.5
      %v763 = vmul.f32 %v747, 0.5
      %v764 = vmul.f32 %v748, 0.5
      %v765 = vmul.f32 %v749, 0.5
      %v766 = vmul.f32 %v750, 0.5
      %v767 = vmul.f32 %v751, 0.5
      %v768 = vmul.f32 %v752, 0.5
      %v769 = vmul.f32 %v753, 0.5
      %v770 = vmul.f32 %v754, 0.5
      %v771 = vmul.f32 %v755, 0.5
      %v772 = vmul.f32 %v756, 0.5
      %v773 = vmul.f32 %v757, 0.5
      %v774 = vmul.f32 %v758, 0.5
      %v775 = vld [vmem:[%s12] ss:$2 sm:$0x3]
      %s776 = scalar_lea.vmem %s12, 1
      %v777 = vld [vmem:[%s776] ss:$2 sm:$0x3]
      %vm778 = vcmask 1048320
      %779 = vst.msk [vmem:[#allocation2] sm:$0xff] %vm778, 0.0
      %780 = vst.msk [vmem:[#allocation2 + $0x20] sm:$0xff] %vm778, 0.0
      %781 = vst.msk [vmem:[#allocation2 + $0x40] sm:$0xff] %vm778, 0.0
      %782 = vst.msk [vmem:[#allocation2 + $0x60] sm:$0xff] %vm778, 0.0
      %783 = vst.msk [vmem:[#allocation2 + $0x80] sm:$0xff] %vm778, 0.0
      %784 = vst.msk [vmem:[#allocation2 + $0xa0] sm:$0xff] %vm778, 0.0
      %785 = vst.msk [vmem:[#allocation2 + $0xc0] sm:$0xff] %vm778, 0.0
      %786 = vst.msk [vmem:[#allocation2 + $0xe0] sm:$0xff] %vm778, 0.0
      %vm787 = vcmask 261120
      %788 = vst.msk [vmem:[#allocation2 + $0x18] sm:$0xff] %vm787, 0.0
      %789 = vst.msk [vmem:[#allocation2 + $0x38] sm:$0xff] %vm787, 0.0
      %790 = vst.msk [vmem:[#allocation2 + $0x58] sm:$0xff] %vm787, 0.0
      %791 = vst.msk [vmem:[#allocation2 + $0x78] sm:$0xff] %vm787, 0.0
      %792 = vst.msk [vmem:[#allocation2 + $0x98] sm:$0xff] %vm787, 0.0
      %793 = vst.msk [vmem:[#allocation2 + $0xb8] sm:$0xff] %vm787, 0.0
      %794 = vst.msk [vmem:[#allocation2 + $0xd8] sm:$0xff] %vm787, 0.0
      %795 = vst.msk [vmem:[#allocation2 + $0xf8] sm:$0xff] %vm787, 0.0
      %v796 = vld [vmem:[%s450] sm:$0xff]
      %v797 = vld [vmem:[%s450 + $0x8] sm:$0xff]
      %v798 = vld [vmem:[%s450 + $0x10] sm:$0xff]
      %v799 = vld [vmem:[%s450 + $0x18] sm:$0xff]
      %v800 = vld [vmem:[%s450 + $0x20] sm:$0xff]
      %v801 = vld [vmem:[%s450 + $0x28] sm:$0xff]
      %v802 = vld [vmem:[%s450 + $0x30] sm:$0xff]
      %v803 = vld [vmem:[%s450 + $0x38] sm:$0xff]
      %v804 = vld [vmem:[%s450 + $0x40] sm:$0xff]
      %v805 = vld [vmem:[%s450 + $0x48] sm:$0xff]
      %v806 = vld [vmem:[%s450 + $0x50] sm:$0xff]
      %v807 = vld [vmem:[%s450 + $0x58] sm:$0xff]
      %v808 = vld [vmem:[%s450 + $0x60] sm:$0xff]
      %v809 = vld [vmem:[%s450 + $0x68] sm:$0xff]
      %v810 = vld [vmem:[%s450 + $0x70] sm:$0xff]
      %v811 = vld [vmem:[%s450 + $0x78] sm:$0xff]
      %v812 = vld [vmem:[%s455] sm:$0xff]
      %v813 = vld [vmem:[%s455 + $0x8] sm:$0xff]
      %v814 = vld [vmem:[%s455 + $0x10] sm:$0xff]
      %v815 = vld [vmem:[%s455 + $0x18] sm:$0xff]
      %v816 = vld [vmem:[%s455 + $0x20] sm:$0xff]
      %v817 = vld [vmem:[%s455 + $0x28] sm:$0xff]
      %v818 = vld [vmem:[%s455 + $0x30] sm:$0xff]
      %v819 = vld [vmem:[%s455 + $0x38] sm:$0xff]
      %v820 = vld [vmem:[%s455 + $0x40] sm:$0xff]
      %v821 = vld [vmem:[%s455 + $0x48] sm:$0xff]
      %v822 = vld [vmem:[%s455 + $0x50] sm:$0xff]
      %v823 = vld [vmem:[%s455 + $0x58] sm:$0xff]
      %v824 = vld [vmem:[%s455 + $0x60] sm:$0xff]
      %v825 = vld [vmem:[%s455 + $0x68] sm:$0xff]
      %v826 = vld [vmem:[%s455 + $0x70] sm:$0xff]
      %v827 = vld [vmem:[%s455 + $0x78] sm:$0xff]
      %v828 = vadd.f32 %v796, %v797
      %829 = vadd.xlane.f32.xlu0 %v828
      %v830 = vpop.xlane.xlu0 %829
      %v831 = vadd.f32 %v798, %v799
      %832 = vadd.xlane.f32.xlu0 %v831
      %v833 = vpop.xlane.xlu0 %832
      %v834 = vadd.f32 %v800, %v801
      %835 = vadd.xlane.f32.xlu0 %v834
      %v836 = vpop.xlane.xlu0 %835
      %v837 = vadd.f32 %v802, %v803
      %838 = vadd.xlane.f32.xlu0 %v837
      %v839 = vpop.xlane.xlu0 %838
      %v840 = vadd.f32 %v804, %v805
      %841 = vadd.xlane.f32.xlu0 %v840
      %v842 = vpop.xlane.xlu0 %841
      %v843 = vadd.f32 %v806, %v807
      %844 = vadd.xlane.f32.xlu0 %v843
      %v845 = vpop.xlane.xlu0 %844
      %v846 = vadd.f32 %v808, %v809
      %847 = vadd.xlane.f32.xlu0 %v846
      %v848 = vpop.xlane.xlu0 %847
      %v849 = vadd.f32 %v810, %v811
      %850 = vadd.xlane.f32.xlu0 %v849
      %v851 = vpop.xlane.xlu0 %850
      %v852 = vrcp.pop 256.0
      %v853 = vmul.f32 256.0, %v852
      %v854 = vsub.f32 1.0, %v853
      %v855 = vmul.f32 %v852, %v854
      %v856 = vadd.f32 %v852, %v855
      %vm857 = vweird.f32 %v852
      %v858 = vsel %vm857, %v852, %v856
      %v859 = vmul.f32 %v830, %v858
      %v860 = vmul.f32 %v833, %v858
      %v861 = vmul.f32 %v836, %v858
      %v862 = vmul.f32 %v839, %v858
      %v863 = vmul.f32 %v842, %v858
      %v864 = vmul.f32 %v845, %v858
      %v865 = vmul.f32 %v848, %v858
      %v866 = vmul.f32 %v851, %v858
      %v867 = vld [vmem:[%s2] sm:$0xff]
      %v868 = vld [vmem:[%s2 + $0x8] sm:$0xff]
      %v869 = vld [vmem:[%s2 + $0x10] sm:$0xff]
      %v870 = vld [vmem:[%s2 + $0x18] sm:$0xff]
      %v871 = vld [vmem:[%s2 + $0x20] sm:$0xff]
      %v872 = vld [vmem:[%s2 + $0x28] sm:$0xff]
      %v873 = vld [vmem:[%s2 + $0x30] sm:$0xff]
      %v874 = vld [vmem:[%s2 + $0x38] sm:$0xff]
      %v875 = vmul.f32 %v867, %v859
      %v876 = vmul.f32 %v868, %v860
      %v877 = vmul.f32 %v869, %v861
      %v878 = vmul.f32 %v870, %v862
      %v879 = vmul.f32 %v871, %v863
      %v880 = vmul.f32 %v872, %v864
      %v881 = vmul.f32 %v873, %v865
      %v882 = vmul.f32 %v874, %v866
      %v883 = vsel %vm604, %v875, 0.0
      %v884 = vsel %vm604, %v876, 0.0
      %v885 = vadd.f32 %v883, %v884
      %v886 = vsel %vm604, %v877, 0.0
      %v887 = vadd.f32 %v885, %v886
      %v888 = vsel %vm604, %v878, 0.0
      %v889 = vadd.f32 %v887, %v888
      %v890 = vsel %vm604, %v879, 0.0
      %v891 = vadd.f32 %v889, %v890
      %v892 = vsel %vm604, %v880, 0.0
      %v893 = vadd.f32 %v891, %v892
      %v894 = vsel %vm604, %v881, 0.0
      %v895 = vadd.f32 %v893, %v894
      %v896 = vsel %vm604, %v882, 0.0
      %v897 = vadd.f32 %v895, %v896
      %v898 = vrot.slane %v897, 4
      %v899 = vadd.f32 %v897, %v898
      %v900 = vrot.slane %v899, 2
      %v901 = vadd.f32 %v899, %v900
      %v902 = vrot.slane %v901, 1
      %v903 = vadd.f32 %v901, %v902
      %v904 = vld [vmem:[%s3] sm:$0x1]
      %v905 = vadd.f32 %v903, %v904
      %v906 = vmax.f32 %v905, 0.0
      %v907 = vld [vmem:[%s4] sm:$0xff]
      %v908 = vld [vmem:[%s4 + $0x8] sm:$0xff]
      %v909 = vld [vmem:[%s4 + $0x10] sm:$0xff]
      %v910 = vld [vmem:[%s4 + $0x18] sm:$0xff]
      %v911 = vld [vmem:[%s4 + $0x20] sm:$0xff]
      %v912 = vld [vmem:[%s4 + $0x28] sm:$0xff]
      %v913 = vld [vmem:[%s4 + $0x30] sm:$0xff]
      %v914 = vld [vmem:[%s4 + $0x38] sm:$0xff]
      %v915 = vperm.slane %v906, 0
      %v916 = vmul.f32 %v907, %v915
      %v917 = vmul.f32 %v908, %v915
      %v918 = vmul.f32 %v909, %v915
      %v919 = vmul.f32 %v910, %v915
      %v920 = vmul.f32 %v911, %v915
      %v921 = vmul.f32 %v912, %v915
      %v922 = vmul.f32 %v913, %v915
      %v923 = vmul.f32 %v914, %v915
      %v924 = vsel %vm604, %v916, 0.0
      %925 = vadd.xlane.f32.xlu0 %v924
      %v926 = vpop.xlane.xlu0 %925
      %v927 = vsel %vm604, %v917, 0.0
      %928 = vadd.xlane.f32.xlu0 %v927
      %v929 = vpop.xlane.xlu0 %928
      %v930 = vsel %vm604, %v918, 0.0
      %931 = vadd.xlane.f32.xlu0 %v930
      %v932 = vpop.xlane.xlu0 %931
      %v933 = vsel %vm604, %v919, 0.0
      %934 = vadd.xlane.f32.xlu0 %v933
      %v935 = vpop.xlane.xlu0 %934
      %v936 = vsel %vm604, %v920, 0.0
      %937 = vadd.xlane.f32.xlu0 %v936
      %v938 = vpop.xlane.xlu0 %937
      %v939 = vsel %vm604, %v921, 0.0
      %940 = vadd.xlane.f32.xlu0 %v939
      %v941 = vpop.xlane.xlu0 %940
      %v942 = vsel %vm604, %v922, 0.0
      %943 = vadd.xlane.f32.xlu0 %v942
      %v944 = vpop.xlane.xlu0 %943
      %v945 = vsel %vm604, %v923, 0.0
      %946 = vadd.xlane.f32.xlu0 %v945
      %v947 = vpop.xlane.xlu0 %946
      %v948 = vld [vmem:[%s5] sm:$0xff]
      %v949 = vld [vmem:[%s5 + $0x8] sm:$0xff]
      %v950 = vld [vmem:[%s5 + $0x10] sm:$0xff]
      %v951 = vld [vmem:[%s5 + $0x18] sm:$0xff]
      %v952 = vld [vmem:[%s5 + $0x20] sm:$0xff]
      %v953 = vld [vmem:[%s5 + $0x28] sm:$0xff]
      %v954 = vld [vmem:[%s5 + $0x30] sm:$0xff]
      %v955 = vld [vmem:[%s5 + $0x38] sm:$0xff]
      %v956 = vadd.f32 %v926, %v948
      %v957 = vadd.f32 %v929, %v949
      %v958 = vadd.f32 %v932, %v950
      %v959 = vadd.f32 %v935, %v951
      %v960 = vadd.f32 %v938, %v952
      %v961 = vadd.f32 %v941, %v953
      %v962 = vadd.f32 %v944, %v954
      %v963 = vadd.f32 %v947, %v955
      %v964 = vmul.f32 %v956, 0.5
      %v965 = vmul.f32 %v957, 0.5
      %v966 = vmul.f32 %v958, 0.5
      %v967 = vmul.f32 %v959, 0.5
      %v968 = vmul.f32 %v960, 0.5
      %v969 = vmul.f32 %v961, 0.5
      %v970 = vmul.f32 %v962, 0.5
      %v971 = vmul.f32 %v963, 0.5
      %v972 = vtanh.pop %v964
      %v973 = vtanh.pop %v965
      %v974 = vtanh.pop %v966
      %v975 = vtanh.pop %v967
      %v976 = vtanh.pop %v968
      %v977 = vtanh.pop %v969
      %v978 = vtanh.pop %v970
      %v979 = vtanh.pop %v971
      %v980 = vadd.f32 %v972, 1.0
      %v981 = vadd.f32 %v973, 1.0
      %v982 = vadd.f32 %v974, 1.0
      %v983 = vadd.f32 %v975, 1.0
      %v984 = vadd.f32 %v976, 1.0
      %v985 = vadd.f32 %v977, 1.0
      %v986 = vadd.f32 %v978, 1.0
      %v987 = vadd.f32 %v979, 1.0
      %v988 = vmul.f32 %v980, 0.5
      %v989 = vmul.f32 %v981, 0.5
      %v990 = vmul.f32 %v982, 0.5
      %v991 = vmul.f32 %v983, 0.5
      %v992 = vmul.f32 %v984, 0.5
      %v993 = vmul.f32 %v985, 0.5
      %v994 = vmul.f32 %v986, 0.5
      %v995 = vmul.f32 %v987, 0.5
      %v996 = vmul.f32 %v812, 2.0
      %v997 = vmul.f32 %v813, 2.0
      %v998 = vmul.f32 %v814, 2.0
      %v999 = vmul.f32 %v815, 2.0
      %v1000 = vmul.f32 %v816, 2.0
      %v1001 = vmul.f32 %v817, 2.0
      %v1002 = vmul.f32 %v818, 2.0
      %v1003 = vmul.f32 %v819, 2.0
      %v1004 = vmul.f32 %v820, 2.0
      %v1005 = vmul.f32 %v821, 2.0
      %v1006 = vmul.f32 %v822, 2.0
      %v1007 = vmul.f32 %v823, 2.0
      %v1008 = vmul.f32 %v824, 2.0
      %v1009 = vmul.f32 %v825, 2.0
      %v1010 = vmul.f32 %v826, 2.0
      %v1011 = vmul.f32 %v827, 2.0
      %1013 = vset.pattern.permute.xlu0 0
      %1014 = vperm.xlu0 %1013, %v988
      %v1015 = vpop.permute.xlu0 %1014
      %1018 = vset.pattern.permute.xlu0 0
      %1019 = vperm.xlu0 %1018, %v989
      %v1020 = vpop.permute.xlu0 %1019
      %1023 = vset.pattern.permute.xlu0 0
      %1024 = vperm.xlu0 %1023, %v990
      %v1025 = vpop.permute.xlu0 %1024
      %1028 = vset.pattern.permute.xlu0 0
      %1029 = vperm.xlu0 %1028, %v991
      %v1030 = vpop.permute.xlu0 %1029
      %1033 = vset.pattern.permute.xlu0 0
      %1034 = vperm.xlu0 %1033, %v992
      %v1035 = vpop.permute.xlu0 %1034
      %1038 = vset.pattern.permute.xlu0 0
      %1039 = vperm.xlu0 %1038, %v993
      %v1040 = vpop.permute.xlu0 %1039
      %1043 = vset.pattern.permute.xlu0 0
      %1044 = vperm.xlu0 %1043, %v994
      %v1045 = vpop.permute.xlu0 %1044
      %1048 = vset.pattern.permute.xlu0 0
      %1049 = vperm.xlu0 %1048, %v995
      %v1050 = vpop.permute.xlu0 %1049
      %v1052 = vmul.f32 %v996, %v1015
      %v1053 = vmul.f32 %v997, %v1015
      %v1054 = vmul.f32 %v998, %v1020
      %v1055 = vmul.f32 %v999, %v1020
      %v1056 = vmul.f32 %v1000, %v1025
      %v1057 = vmul.f32 %v1001, %v1025
      %v1058 = vmul.f32 %v1002, %v1030
      %v1059 = vmul.f32 %v1003, %v1030
      %v1060 = vmul.f32 %v1004, %v1035
      %v1061 = vmul.f32 %v1005, %v1035
      %v1062 = vmul.f32 %v1006, %v1040
      %v1063 = vmul.f32 %v1007, %v1040
      %v1064 = vmul.f32 %v1008, %v1045
      %v1065 = vmul.f32 %v1009, %v1045
      %v1066 = vmul.f32 %v1010, %v1050
      %v1067 = vmul.f32 %v1011, %v1050
      %v1068 = vmul.f32 %v796, 2.0
      %v1069 = vmul.f32 %v797, 2.0
      %v1070 = vmul.f32 %v798, 2.0
      %v1071 = vmul.f32 %v799, 2.0
      %v1072 = vmul.f32 %v800, 2.0
      %v1073 = vmul.f32 %v801, 2.0
      %v1074 = vmul.f32 %v802, 2.0
      %v1075 = vmul.f32 %v803, 2.0
      %v1076 = vmul.f32 %v804, 2.0
      %v1077 = vmul.f32 %v805, 2.0
      %v1078 = vmul.f32 %v806, 2.0
      %v1079 = vmul.f32 %v807, 2.0
      %v1080 = vmul.f32 %v808, 2.0
      %v1081 = vmul.f32 %v809, 2.0
      %v1082 = vmul.f32 %v810, 2.0
      %v1083 = vmul.f32 %v811, 2.0
      %v1084 = vmul.f32 %v1068, %v759
      %v1085 = vmul.f32 %v1069, %v760
      %v1086 = vmul.f32 %v1070, %v761
      %v1087 = vmul.f32 %v1071, %v762
      %v1088 = vmul.f32 %v1072, %v763
      %v1089 = vmul.f32 %v1073, %v764
      %v1090 = vmul.f32 %v1074, %v765
      %v1091 = vmul.f32 %v1075, %v766
      %v1092 = vmul.f32 %v1076, %v767
      %v1093 = vmul.f32 %v1077, %v768
      %v1094 = vmul.f32 %v1078, %v769
      %v1095 = vmul.f32 %v1079, %v770
      %v1096 = vmul.f32 %v1080, %v771
      %v1097 = vmul.f32 %v1081, %v772
      %v1098 = vmul.f32 %v1082, %v773
      %v1099 = vmul.f32 %v1083, %v774
      %v1100 = vadd.f32 %v1052, %v1084
      %v1101 = vadd.f32 %v1053, %v1085
      %v1102 = vadd.f32 %v1054, %v1086
      %v1103 = vadd.f32 %v1055, %v1087
      %v1104 = vadd.f32 %v1056, %v1088
      %v1105 = vadd.f32 %v1057, %v1089
      %v1106 = vadd.f32 %v1058, %v1090
      %v1107 = vadd.f32 %v1059, %v1091
      %v1108 = vadd.f32 %v1060, %v1092
      %v1109 = vadd.f32 %v1061, %v1093
      %v1110 = vadd.f32 %v1062, %v1094
      %v1111 = vadd.f32 %v1063, %v1095
      %v1112 = vadd.f32 %v1064, %v1096
      %v1113 = vadd.f32 %v1065, %v1097
      %v1114 = vadd.f32 %v1066, %v1098
      %v1115 = vadd.f32 %v1067, %v1099
      %1116 = vst [vmem:[#allocation2 + $0x8] sm:$0xff] %v1100
      %1117 = vst [vmem:[#allocation2 + $0x10] sm:$0xff] %v1101
      %1118 = vst [vmem:[#allocation2 + $0x28] sm:$0xff] %v1102
      %1119 = vst [vmem:[#allocation2 + $0x30] sm:$0xff] %v1103
      %1120 = vst [vmem:[#allocation2 + $0x48] sm:$0xff] %v1104
      %1121 = vst [vmem:[#allocation2 + $0x50] sm:$0xff] %v1105
      %1122 = vst [vmem:[#allocation2 + $0x68] sm:$0xff] %v1106
      %1123 = vst [vmem:[#allocation2 + $0x70] sm:$0xff] %v1107
      %1124 = vst [vmem:[#allocation2 + $0x88] sm:$0xff] %v1108
      %1125 = vst [vmem:[#allocation2 + $0x90] sm:$0xff] %v1109
      %1126 = vst [vmem:[#allocation2 + $0xa8] sm:$0xff] %v1110
      %1127 = vst [vmem:[#allocation2 + $0xb0] sm:$0xff] %v1111
      %1128 = vst [vmem:[#allocation2 + $0xc8] sm:$0xff] %v1112
      %1129 = vst [vmem:[#allocation2 + $0xd0] sm:$0xff] %v1113
      %1130 = vst [vmem:[#allocation2 + $0xe8] sm:$0xff] %v1114
      %1131 = vst [vmem:[#allocation2 + $0xf0] sm:$0xff] %v1115
      %v1132 = vld [vmem:[#allocation2] sm:$0xff]
      %v1133 = vld [vmem:[#allocation2 + $0x8] sm:$0xff]
      %v1134 = vld [vmem:[#allocation2 + $0x10] sm:$0xff]
      %v1135 = vld [vmem:[#allocation2 + $0x20] sm:$0xff]
      %v1136 = vld [vmem:[#allocation2 + $0x28] sm:$0xff]
      %v1137 = vld [vmem:[#allocation2 + $0x30] sm:$0xff]
      %v1138 = vld [vmem:[#allocation2 + $0x40] sm:$0xff]
      %v1139 = vld [vmem:[#allocation2 + $0x48] sm:$0xff]
      %v1140 = vld [vmem:[#allocation2 + $0x50] sm:$0xff]
      %v1141 = vld [vmem:[#allocation2 + $0x60] sm:$0xff]
      %v1142 = vld [vmem:[#allocation2 + $0x68] sm:$0xff]
      %v1143 = vld [vmem:[#allocation2 + $0x70] sm:$0xff]
      %v1144 = vld [vmem:[#allocation2 + $0x80] sm:$0xff]
      %v1145 = vld [vmem:[#allocation2 + $0x88] sm:$0xff]
      %v1146 = vld [vmem:[#allocation2 + $0x90] sm:$0xff]
      %v1147 = vld [vmem:[#allocation2 + $0xa0] sm:$0xff]
      %v1148 = vld [vmem:[#allocation2 + $0xa8] sm:$0xff]
      %v1149 = vld [vmem:[#allocation2 + $0xb0] sm:$0xff]
      %v1150 = vld [vmem:[#allocation2 + $0xc0] sm:$0xff]
      %v1151 = vld [vmem:[#allocation2 + $0xc8] sm:$0xff]
      %v1152 = vld [vmem:[#allocation2 + $0xd0] sm:$0xff]
      %v1153 = vld [vmem:[#allocation2 + $0xe0] sm:$0xff]
      %v1154 = vld [vmem:[#allocation2 + $0xe8] sm:$0xff]
      %v1155 = vld [vmem:[#allocation2 + $0xf0] sm:$0xff]
      %v1157 = vperm.slane %v775, 0
      %v1158 = vperm.slane %v775, 1
      %1159 = vrot.lane.b32.xlu0 %v1157, 111
      %v1160 = vpop.permute.xlu0 %1159
      %1161 = vrot.lane.b32.xlu0 %v1158, 111
      %v1162 = vpop.permute.xlu0 %1161
      %vm1163 = vcmask 908288
      %v1164 = vsel %vm1163, %v1160, %v1162
      %v1168 = vmul.f32 %v1132, %v1160
      %v1169 = vmul.f32 %v1133, %v1164
      %v1170 = vmul.f32 %v1134, %v1162
      %v1171 = vmul.f32 %v1135, %v1160
      %v1172 = vmul.f32 %v1136, %v1164
      %v1173 = vmul.f32 %v1137, %v1162
      %v1174 = vmul.f32 %v1138, %v1160
      %v1175 = vmul.f32 %v1139, %v1164
      %v1176 = vmul.f32 %v1140, %v1162
      %v1177 = vmul.f32 %v1141, %v1160
      %v1178 = vmul.f32 %v1142, %v1164
      %v1179 = vmul.f32 %v1143, %v1162
      %v1180 = vmul.f32 %v1144, %v1160
      %v1181 = vmul.f32 %v1145, %v1164
      %v1182 = vmul.f32 %v1146, %v1162
      %v1183 = vmul.f32 %v1147, %v1160
      %v1184 = vmul.f32 %v1148, %v1164
      %v1185 = vmul.f32 %v1149, %v1162
      %v1186 = vmul.f32 %v1150, %v1160
      %v1187 = vmul.f32 %v1151, %v1164
      %v1188 = vmul.f32 %v1152, %v1162
      %v1189 = vmul.f32 %v1153, %v1160
      %v1190 = vmul.f32 %v1154, %v1164
      %v1191 = vmul.f32 %v1155, %v1162
      %1216 = vrot.lane.b32.xlu0 %v1168, 17
      %v1217 = vpop.permute.xlu0 %1216
      %1218 = vrot.lane.b32.xlu0 %v1169, 17
      %v1219 = vpop.permute.xlu0 %1218
      %1220 = vrot.lane.b32.xlu0 %v1170, 17
      %v1221 = vpop.permute.xlu0 %1220
      %1222 = vrot.lane.b32.xlu0 %v1171, 17
      %v1223 = vpop.permute.xlu0 %1222
      %1224 = vrot.lane.b32.xlu0 %v1172, 17
      %v1225 = vpop.permute.xlu0 %1224
      %1226 = vrot.lane.b32.xlu0 %v1173, 17
      %v1227 = vpop.permute.xlu0 %1226
      %1228 = vrot.lane.b32.xlu0 %v1174, 17
      %v1229 = vpop.permute.xlu0 %1228
      %1230 = vrot.lane.b32.xlu0 %v1175, 17
      %v1231 = vpop.permute.xlu0 %1230
      %1232 = vrot.lane.b32.xlu0 %v1176, 17
      %v1233 = vpop.permute.xlu0 %1232
      %1234 = vrot.lane.b32.xlu0 %v1177, 17
      %v1235 = vpop.permute.xlu0 %1234
      %1236 = vrot.lane.b32.xlu0 %v1178, 17
      %v1237 = vpop.permute.xlu0 %1236
      %1238 = vrot.lane.b32.xlu0 %v1179, 17
      %v1239 = vpop.permute.xlu0 %1238
      %1240 = vrot.lane.b32.xlu0 %v1180, 17
      %v1241 = vpop.permute.xlu0 %1240
      %1242 = vrot.lane.b32.xlu0 %v1181, 17
      %v1243 = vpop.permute.xlu0 %1242
      %1244 = vrot.lane.b32.xlu0 %v1182, 17
      %v1245 = vpop.permute.xlu0 %1244
      %1246 = vrot.lane.b32.xlu0 %v1183, 17
      %v1247 = vpop.permute.xlu0 %1246
      %1248 = vrot.lane.b32.xlu0 %v1184, 17
      %v1249 = vpop.permute.xlu0 %1248
      %1250 = vrot.lane.b32.xlu0 %v1185, 17
      %v1251 = vpop.permute.xlu0 %1250
      %1252 = vrot.lane.b32.xlu0 %v1186, 17
      %v1253 = vpop.permute.xlu0 %1252
      %1254 = vrot.lane.b32.xlu0 %v1187, 17
      %v1255 = vpop.permute.xlu0 %1254
      %1256 = vrot.lane.b32.xlu0 %v1188, 17
      %v1257 = vpop.permute.xlu0 %1256
      %1258 = vrot.lane.b32.xlu0 %v1189, 17
      %v1259 = vpop.permute.xlu0 %1258
      %1260 = vrot.lane.b32.xlu0 %v1190, 17
      %v1261 = vpop.permute.xlu0 %1260
      %1262 = vrot.lane.b32.xlu0 %v1191, 17
      %v1263 = vpop.permute.xlu0 %1262
      %vm1264 = vcmask 138240
      %v1265 = vsel %vm1264, %v1217, %v1219
      %v1266 = vsel %vm1264, %v1219, %v1221
      %v1267 = vsel %vm1264, %v1223, %v1225
      %v1268 = vsel %vm1264, %v1225, %v1227
      %v1269 = vsel %vm1264, %v1229, %v1231
      %v1270 = vsel %vm1264, %v1231, %v1233
      %v1271 = vsel %vm1264, %v1235, %v1237
      %v1272 = vsel %vm1264, %v1237, %v1239
      %v1273 = vsel %vm1264, %v1241, %v1243
      %v1274 = vsel %vm1264, %v1243, %v1245
      %v1275 = vsel %vm1264, %v1247, %v1249
      %v1276 = vsel %vm1264, %v1249, %v1251
      %v1277 = vsel %vm1264, %v1253, %v1255
      %v1278 = vsel %vm1264, %v1255, %v1257
      %v1279 = vsel %vm1264, %v1259, %v1261
      %v1280 = vsel %vm1264, %v1261, %v1263
      %1297 = vst [vmem:[#allocation3] sm:$0xff] %v1265
      %1298 = vst [vmem:[#allocation3 + $0x8] sm:$0xff] %v1266
      %1299 = vst [vmem:[#allocation3 + $0x10] sm:$0xff] %v1267
      %1300 = vst [vmem:[#allocation3 + $0x18] sm:$0xff] %v1268
      %1301 = vst [vmem:[#allocation3 + $0x20] sm:$0xff] %v1269
      %1302 = vst [vmem:[#allocation3 + $0x28] sm:$0xff] %v1270
      %1303 = vst [vmem:[#allocation3 + $0x30] sm:$0xff] %v1271
      %1304 = vst [vmem:[#allocation3 + $0x38] sm:$0xff] %v1272
      %1305 = vst [vmem:[#allocation3 + $0x40] sm:$0xff] %v1273
      %1306 = vst [vmem:[#allocation3 + $0x48] sm:$0xff] %v1274
      %1307 = vst [vmem:[#allocation3 + $0x50] sm:$0xff] %v1275
      %1308 = vst [vmem:[#allocation3 + $0x58] sm:$0xff] %v1276
      %1309 = vst [vmem:[#allocation3 + $0x60] sm:$0xff] %v1277
      %1310 = vst [vmem:[#allocation3 + $0x68] sm:$0xff] %v1278
      %1311 = vst [vmem:[#allocation3 + $0x70] sm:$0xff] %v1279
      %1312 = vst [vmem:[#allocation3 + $0x78] sm:$0xff] %v1280
      %v1313 = vld [vmem:[#allocation2] sm:$0xff]
      %v1314 = vld [vmem:[#allocation2 + $0x8] sm:$0xff]
      %v1315 = vld [vmem:[#allocation2 + $0x10] sm:$0xff]
      %v1316 = vld [vmem:[#allocation2 + $0x20] sm:$0xff]
      %v1317 = vld [vmem:[#allocation2 + $0x28] sm:$0xff]
      %v1318 = vld [vmem:[#allocation2 + $0x30] sm:$0xff]
      %v1319 = vld [vmem:[#allocation2 + $0x40] sm:$0xff]
      %v1320 = vld [vmem:[#allocation2 + $0x48] sm:$0xff]
      %v1321 = vld [vmem:[#allocation2 + $0x50] sm:$0xff]
      %v1322 = vld [vmem:[#allocation2 + $0x60] sm:$0xff]
      %v1323 = vld [vmem:[#allocation2 + $0x68] sm:$0xff]
      %v1324 = vld [vmem:[#allocation2 + $0x70] sm:$0xff]
      %v1325 = vld [vmem:[#allocation2 + $0x80] sm:$0xff]
      %v1326 = vld [vmem:[#allocation2 + $0x88] sm:$0xff]
      %v1327 = vld [vmem:[#allocation2 + $0x90] sm:$0xff]
      %v1328 = vld [vmem:[#allocation2 + $0xa0] sm:$0xff]
      %v1329 = vld [vmem:[#allocation2 + $0xa8] sm:$0xff]
      %v1330 = vld [vmem:[#allocation2 + $0xb0] sm:$0xff]
      %v1331 = vld [vmem:[#allocation2 + $0xc0] sm:$0xff]
      %v1332 = vld [vmem:[#allocation2 + $0xc8] sm:$0xff]
      %v1333 = vld [vmem:[#allocation2 + $0xd0] sm:$0xff]
      %v1334 = vld [vmem:[#allocation2 + $0xe0] sm:$0xff]
      %v1335 = vld [vmem:[#allocation2 + $0xe8] sm:$0xff]
      %v1336 = vld [vmem:[#allocation2 + $0xf0] sm:$0xff]
      %1361 = vrot.lane.b32.xlu0 %v1313, 16
      %v1362 = vpop.permute.xlu0 %1361
      %1363 = vrot.lane.b32.xlu0 %v1314, 16
      %v1364 = vpop.permute.xlu0 %1363
      %1365 = vrot.lane.b32.xlu0 %v1315, 16
      %v1366 = vpop.permute.xlu0 %1365
      %1367 = vrot.lane.b32.xlu0 %v1316, 16
      %v1368 = vpop.permute.xlu0 %1367
      %1369 = vrot.lane.b32.xlu0 %v1317, 16
      %v1370 = vpop.permute.xlu0 %1369
      %1371 = vrot.lane.b32.xlu0 %v1318, 16
      %v1372 = vpop.permute.xlu0 %1371
      %1373 = vrot.lane.b32.xlu0 %v1319, 16
      %v1374 = vpop.permute.xlu0 %1373
      %1375 = vrot.lane.b32.xlu0 %v1320, 16
      %v1376 = vpop.permute.xlu0 %1375
      %1377 = vrot.lane.b32.xlu0 %v1321, 16
      %v1378 = vpop.permute.xlu0 %1377
      %1379 = vrot.lane.b32.xlu0 %v1322, 16
      %v1380 = vpop.permute.xlu0 %1379
      %1381 = vrot.lane.b32.xlu0 %v1323, 16
      %v1382 = vpop.permute.xlu0 %1381
      %1383 = vrot.lane.b32.xlu0 %v1324, 16
      %v1384 = vpop.permute.xlu0 %1383
      %1385 = vrot.lane.b32.xlu0 %v1325, 16
      %v1386 = vpop.permute.xlu0 %1385
      %1387 = vrot.lane.b32.xlu0 %v1326, 16
      %v1388 = vpop.permute.xlu0 %1387
      %1389 = vrot.lane.b32.xlu0 %v1327, 16
      %v1390 = vpop.permute.xlu0 %1389
      %1391 = vrot.lane.b32.xlu0 %v1328, 16
      %v1392 = vpop.permute.xlu0 %1391
      %1393 = vrot.lane.b32.xlu0 %v1329, 16
      %v1394 = vpop.permute.xlu0 %1393
      %1395 = vrot.lane.b32.xlu0 %v1330, 16
      %v1396 = vpop.permute.xlu0 %1395
      %1397 = vrot.lane.b32.xlu0 %v1331, 16
      %v1398 = vpop.permute.xlu0 %1397
      %1399 = vrot.lane.b32.xlu0 %v1332, 16
      %v1400 = vpop.permute.xlu0 %1399
      %1401 = vrot.lane.b32.xlu0 %v1333, 16
      %v1402 = vpop.permute.xlu0 %1401
      %1403 = vrot.lane.b32.xlu0 %v1334, 16
      %v1404 = vpop.permute.xlu0 %1403
      %1405 = vrot.lane.b32.xlu0 %v1335, 16
      %v1406 = vpop.permute.xlu0 %1405
      %1407 = vrot.lane.b32.xlu0 %v1336, 16
      %v1408 = vpop.permute.xlu0 %1407
      %v1409 = vsel %vm604, %v1362, %v1364
      %v1410 = vsel %vm604, %v1364, %v1366
      %v1411 = vsel %vm604, %v1368, %v1370
      %v1412 = vsel %vm604, %v1370, %v1372
      %v1413 = vsel %vm604, %v1374, %v1376
      %v1414 = vsel %vm604, %v1376, %v1378
      %v1415 = vsel %vm604, %v1380, %v1382
      %v1416 = vsel %vm604, %v1382, %v1384
      %v1417 = vsel %vm604, %v1386, %v1388
      %v1418 = vsel %vm604, %v1388, %v1390
      %v1419 = vsel %vm604, %v1392, %v1394
      %v1420 = vsel %vm604, %v1394, %v1396
      %v1421 = vsel %vm604, %v1398, %v1400
      %v1422 = vsel %vm604, %v1400, %v1402
      %v1423 = vsel %vm604, %v1404, %v1406
      %v1424 = vsel %vm604, %v1406, %v1408
      %1441 = vst [vmem:[#allocation3 + $0x80] sm:$0xff] %v1409
      %1442 = vst [vmem:[#allocation3 + $0x88] sm:$0xff] %v1410
      %1443 = vst [vmem:[#allocation3 + $0x90] sm:$0xff] %v1411
      %1444 = vst [vmem:[#allocation3 + $0x98] sm:$0xff] %v1412
      %1445 = vst [vmem:[#allocation3 + $0xa0] sm:$0xff] %v1413
      %1446 = vst [vmem:[#allocation3 + $0xa8] sm:$0xff] %v1414
      %1447 = vst [vmem:[#allocation3 + $0xb0] sm:$0xff] %v1415
      %1448 = vst [vmem:[#allocation3 + $0xb8] sm:$0xff] %v1416
      %1449 = vst [vmem:[#allocation3 + $0xc0] sm:$0xff] %v1417
      %1450 = vst [vmem:[#allocation3 + $0xc8] sm:$0xff] %v1418
      %1451 = vst [vmem:[#allocation3 + $0xd0] sm:$0xff] %v1419
      %1452 = vst [vmem:[#allocation3 + $0xd8] sm:$0xff] %v1420
      %1453 = vst [vmem:[#allocation3 + $0xe0] sm:$0xff] %v1421
      %1454 = vst [vmem:[#allocation3 + $0xe8] sm:$0xff] %v1422
      %1455 = vst [vmem:[#allocation3 + $0xf0] sm:$0xff] %v1423
      %1456 = vst [vmem:[#allocation3 + $0xf8] sm:$0xff] %v1424
      %v1457 = vld [vmem:[#allocation2] sm:$0xff]
      %v1458 = vld [vmem:[#allocation2 + $0x8] sm:$0xff]
      %v1459 = vld [vmem:[#allocation2 + $0x10] sm:$0xff]
      %v1460 = vld [vmem:[#allocation2 + $0x20] sm:$0xff]
      %v1461 = vld [vmem:[#allocation2 + $0x28] sm:$0xff]
      %v1462 = vld [vmem:[#allocation2 + $0x30] sm:$0xff]
      %v1463 = vld [vmem:[#allocation2 + $0x40] sm:$0xff]
      %v1464 = vld [vmem:[#allocation2 + $0x48] sm:$0xff]
      %v1465 = vld [vmem:[#allocation2 + $0x50] sm:$0xff]
      %v1466 = vld [vmem:[#allocation2 + $0x60] sm:$0xff]
      %v1467 = vld [vmem:[#allocation2 + $0x68] sm:$0xff]
      %v1468 = vld [vmem:[#allocation2 + $0x70] sm:$0xff]
      %v1469 = vld [vmem:[#allocation2 + $0x80] sm:$0xff]
      %v1470 = vld [vmem:[#allocation2 + $0x88] sm:$0xff]
      %v1471 = vld [vmem:[#allocation2 + $0x90] sm:$0xff]
      %v1472 = vld [vmem:[#allocation2 + $0xa0] sm:$0xff]
      %v1473 = vld [vmem:[#allocation2 + $0xa8] sm:$0xff]
      %v1474 = vld [vmem:[#allocation2 + $0xb0] sm:$0xff]
      %v1475 = vld [vmem:[#allocation2 + $0xc0] sm:$0xff]
      %v1476 = vld [vmem:[#allocation2 + $0xc8] sm:$0xff]
      %v1477 = vld [vmem:[#allocation2 + $0xd0] sm:$0xff]
      %v1478 = vld [vmem:[#allocation2 + $0xe0] sm:$0xff]
      %v1479 = vld [vmem:[#allocation2 + $0xe8] sm:$0xff]
      %v1480 = vld [vmem:[#allocation2 + $0xf0] sm:$0xff]
      %v1482 = vperm.slane %v777, 0
      %v1483 = vperm.slane %v777, 1
      %1484 = vrot.lane.b32.xlu0 %v1482, 113
      %v1485 = vpop.permute.xlu0 %1484
      %1486 = vrot.lane.b32.xlu0 %v1483, 113
      %v1487 = vpop.permute.xlu0 %1486
      %vm1488 = vcmask 924672
      %v1489 = vsel %vm1488, %v1485, %v1487
      %v1493 = vmul.f32 %v1457, %v1485
      %v1494 = vmul.f32 %v1458, %v1489
      %v1495 = vmul.f32 %v1459, %v1487
      %v1496 = vmul.f32 %v1460, %v1485
      %v1497 = vmul.f32 %v1461, %v1489
      %v1498 = vmul.f32 %v1462, %v1487
      %v1499 = vmul.f32 %v1463, %v1485
      %v1500 = vmul.f32 %v1464, %v1489
      %v1501 = vmul.f32 %v1465, %v1487
      %v1502 = vmul.f32 %v1466, %v1485
      %v1503 = vmul.f32 %v1467, %v1489
      %v1504 = vmul.f32 %v1468, %v1487
      %v1505 = vmul.f32 %v1469, %v1485
      %v1506 = vmul.f32 %v1470, %v1489
      %v1507 = vmul.f32 %v1471, %v1487
      %v1508 = vmul.f32 %v1472, %v1485
      %v1509 = vmul.f32 %v1473, %v1489
      %v1510 = vmul.f32 %v1474, %v1487
      %v1511 = vmul.f32 %v1475, %v1485
      %v1512 = vmul.f32 %v1476, %v1489
      %v1513 = vmul.f32 %v1477, %v1487
      %v1514 = vmul.f32 %v1478, %v1485
      %v1515 = vmul.f32 %v1479, %v1489
      %v1516 = vmul.f32 %v1480, %v1487
      %1541 = vrot.lane.b32.xlu0 %v1493, 15
      %v1542 = vpop.permute.xlu0 %1541
      %1543 = vrot.lane.b32.xlu0 %v1494, 15
      %v1544 = vpop.permute.xlu0 %1543
      %1545 = vrot.lane.b32.xlu0 %v1495, 15
      %v1546 = vpop.permute.xlu0 %1545
      %1547 = vrot.lane.b32.xlu0 %v1496, 15
      %v1548 = vpop.permute.xlu0 %1547
      %1549 = vrot.lane.b32.xlu0 %v1497, 15
      %v1550 = vpop.permute.xlu0 %1549
      %1551 = vrot.lane.b32.xlu0 %v1498, 15
      %v1552 = vpop.permute.xlu0 %1551
      %1553 = vrot.lane.b32.xlu0 %v1499, 15
      %v1554 = vpop.permute.xlu0 %1553
      %1555 = vrot.lane.b32.xlu0 %v1500, 15
      %v1556 = vpop.permute.xlu0 %1555
      %1557 = vrot.lane.b32.xlu0 %v1501, 15
      %v1558 = vpop.permute.xlu0 %1557
      %1559 = vrot.lane.b32.xlu0 %v1502, 15
      %v1560 = vpop.permute.xlu0 %1559
      %1561 = vrot.lane.b32.xlu0 %v1503, 15
      %v1562 = vpop.permute.xlu0 %1561
      %1563 = vrot.lane.b32.xlu0 %v1504, 15
      %v1564 = vpop.permute.xlu0 %1563
      %1565 = vrot.lane.b32.xlu0 %v1505, 15
      %v1566 = vpop.permute.xlu0 %1565
      %1567 = vrot.lane.b32.xlu0 %v1506, 15
      %v1568 = vpop.permute.xlu0 %1567
      %1569 = vrot.lane.b32.xlu0 %v1507, 15
      %v1570 = vpop.permute.xlu0 %1569
      %1571 = vrot.lane.b32.xlu0 %v1508, 15
      %v1572 = vpop.permute.xlu0 %1571
      %1573 = vrot.lane.b32.xlu0 %v1509, 15
      %v1574 = vpop.permute.xlu0 %1573
      %1575 = vrot.lane.b32.xlu0 %v1510, 15
      %v1576 = vpop.permute.xlu0 %1575
      %1577 = vrot.lane.b32.xlu0 %v1511, 15
      %v1578 = vpop.permute.xlu0 %1577
      %1579 = vrot.lane.b32.xlu0 %v1512, 15
      %v1580 = vpop.permute.xlu0 %1579
      %1581 = vrot.lane.b32.xlu0 %v1513, 15
      %v1582 = vpop.permute.xlu0 %1581
      %1583 = vrot.lane.b32.xlu0 %v1514, 15
      %v1584 = vpop.permute.xlu0 %1583
      %1585 = vrot.lane.b32.xlu0 %v1515, 15
      %v1586 = vpop.permute.xlu0 %1585
      %1587 = vrot.lane.b32.xlu0 %v1516, 15
      %v1588 = vpop.permute.xlu0 %1587
      %vm1589 = vcmask 121856
      %v1590 = vsel %vm1589, %v1542, %v1544
      %v1591 = vsel %vm1589, %v1544, %v1546
      %v1592 = vsel %vm1589, %v1548, %v1550
      %v1593 = vsel %vm1589, %v1550, %v1552
      %v1594 = vsel %vm1589, %v1554, %v1556
      %v1595 = vsel %vm1589, %v1556, %v1558
      %v1596 = vsel %vm1589, %v1560, %v1562
      %v1597 = vsel %vm1589, %v1562, %v1564
      %v1598 = vsel %vm1589, %v1566, %v1568
      %v1599 = vsel %vm1589, %v1568, %v1570
      %v1600 = vsel %vm1589, %v1572, %v1574
      %v1601 = vsel %vm1589, %v1574, %v1576
      %v1602 = vsel %vm1589, %v1578, %v1580
      %v1603 = vsel %vm1589, %v1580, %v1582
      %v1604 = vsel %vm1589, %v1584, %v1586
      %v1605 = vsel %vm1589, %v1586, %v1588
      %1622 = vst [vmem:[#allocation3 + $0x100] sm:$0xff] %v1590
      %1623 = vst [vmem:[#allocation3 + $0x108] sm:$0xff] %v1591
      %1624 = vst [vmem:[#allocation3 + $0x110] sm:$0xff] %v1592
      %1625 = vst [vmem:[#allocation3 + $0x118] sm:$0xff] %v1593
      %1626 = vst [vmem:[#allocation3 + $0x120] sm:$0xff] %v1594
      %1627 = vst [vmem:[#allocation3 + $0x128] sm:$0xff] %v1595
      %1628 = vst [vmem:[#allocation3 + $0x130] sm:$0xff] %v1596
      %1629 = vst [vmem:[#allocation3 + $0x138] sm:$0xff] %v1597
      %1630 = vst [vmem:[#allocation3 + $0x140] sm:$0xff] %v1598
      %1631 = vst [vmem:[#allocation3 + $0x148] sm:$0xff] %v1599
      %1632 = vst [vmem:[#allocation3 + $0x150] sm:$0xff] %v1600
      %1633 = vst [vmem:[#allocation3 + $0x158] sm:$0xff] %v1601
      %1634 = vst [vmem:[#allocation3 + $0x160] sm:$0xff] %v1602
      %1635 = vst [vmem:[#allocation3 + $0x168] sm:$0xff] %v1603
      %1636 = vst [vmem:[#allocation3 + $0x170] sm:$0xff] %v1604
      %1637 = vst [vmem:[#allocation3 + $0x178] sm:$0xff] %v1605
      %v1638 = vld [vmem:[#allocation2] sm:$0xff]
      %v1639 = vld [vmem:[#allocation2 + $0x8] sm:$0xff]
      %v1640 = vld [vmem:[#allocation2 + $0x10] sm:$0xff]
      %v1641 = vld [vmem:[#allocation2 + $0x20] sm:$0xff]
      %v1642 = vld [vmem:[#allocation2 + $0x28] sm:$0xff]
      %v1643 = vld [vmem:[#allocation2 + $0x30] sm:$0xff]
      %v1644 = vld [vmem:[#allocation2 + $0x40] sm:$0xff]
      %v1645 = vld [vmem:[#allocation2 + $0x48] sm:$0xff]
      %v1646 = vld [vmem:[#allocation2 + $0x50] sm:$0xff]
      %v1647 = vld [vmem:[#allocation2 + $0x60] sm:$0xff]
      %v1648 = vld [vmem:[#allocation2 + $0x68] sm:$0xff]
      %v1649 = vld [vmem:[#allocation2 + $0x70] sm:$0xff]
      %v1650 = vld [vmem:[#allocation2 + $0x80] sm:$0xff]
      %v1651 = vld [vmem:[#allocation2 + $0x88] sm:$0xff]
      %v1652 = vld [vmem:[#allocation2 + $0x90] sm:$0xff]
      %v1653 = vld [vmem:[#allocation2 + $0xa0] sm:$0xff]
      %v1654 = vld [vmem:[#allocation2 + $0xa8] sm:$0xff]
      %v1655 = vld [vmem:[#allocation2 + $0xb0] sm:$0xff]
      %v1656 = vld [vmem:[#allocation2 + $0xc0] sm:$0xff]
      %v1657 = vld [vmem:[#allocation2 + $0xc8] sm:$0xff]
      %v1658 = vld [vmem:[#allocation2 + $0xd0] sm:$0xff]
      %v1659 = vld [vmem:[#allocation2 + $0xe0] sm:$0xff]
      %v1660 = vld [vmem:[#allocation2 + $0xe8] sm:$0xff]
      %v1661 = vld [vmem:[#allocation2 + $0xf0] sm:$0xff]
      %1662 = vrot.lane.b32.xlu0 %v1157, 127
      %v1663 = vpop.permute.xlu0 %1662
      %1664 = vrot.lane.b32.xlu0 %v1158, 127
      %v1665 = vpop.permute.xlu0 %1664
      %vm1666 = vcmask 1039360
      %v1667 = vsel %vm1666, %v1663, %v1665
      %v1671 = vmul.f32 %v1638, %v1663
      %v1672 = vmul.f32 %v1639, %v1667
      %v1673 = vmul.f32 %v1640, %v1665
      %v1674 = vmul.f32 %v1641, %v1663
      %v1675 = vmul.f32 %v1642, %v1667
      %v1676 = vmul.f32 %v1643, %v1665
      %v1677 = vmul.f32 %v1644, %v1663
      %v1678 = vmul.f32 %v1645, %v1667
      %v1679 = vmul.f32 %v1646, %v1665
      %v1680 = vmul.f32 %v1647, %v1663
      %v1681 = vmul.f32 %v1648, %v1667
      %v1682 = vmul.f32 %v1649, %v1665
      %v1683 = vmul.f32 %v1650, %v1663
      %v1684 = vmul.f32 %v1651, %v1667
      %v1685 = vmul.f32 %v1652, %v1665
      %v1686 = vmul.f32 %v1653, %v1663
      %v1687 = vmul.f32 %v1654, %v1667
      %v1688 = vmul.f32 %v1655, %v1665
      %v1689 = vmul.f32 %v1656, %v1663
      %v1690 = vmul.f32 %v1657, %v1667
      %v1691 = vmul.f32 %v1658, %v1665
      %v1692 = vmul.f32 %v1659, %v1663
      %v1693 = vmul.f32 %v1660, %v1667
      %v1694 = vmul.f32 %v1661, %v1665
      %1719 = vrot.lane.b32.xlu0 %v1671, 1
      %v1720 = vpop.permute.xlu0 %1719
      %1721 = vrot.lane.b32.xlu0 %v1672, 1
      %v1722 = vpop.permute.xlu0 %1721
      %1723 = vrot.lane.b32.xlu0 %v1673, 1
      %v1724 = vpop.permute.xlu0 %1723
      %1725 = vrot.lane.b32.xlu0 %v1674, 1
      %v1726 = vpop.permute.xlu0 %1725
      %1727 = vrot.lane.b32.xlu0 %v1675, 1
      %v1728 = vpop.permute.xlu0 %1727
      %1729 = vrot.lane.b32.xlu0 %v1676, 1
      %v1730 = vpop.permute.xlu0 %1729
      %1731 = vrot.lane.b32.xlu0 %v1677, 1
      %v1732 = vpop.permute.xlu0 %1731
      %1733 = vrot.lane.b32.xlu0 %v1678, 1
      %v1734 = vpop.permute.xlu0 %1733
      %1735 = vrot.lane.b32.xlu0 %v1679, 1
      %v1736 = vpop.permute.xlu0 %1735
      %1737 = vrot.lane.b32.xlu0 %v1680, 1
      %v1738 = vpop.permute.xlu0 %1737
      %1739 = vrot.lane.b32.xlu0 %v1681, 1
      %v1740 = vpop.permute.xlu0 %1739
      %1741 = vrot.lane.b32.xlu0 %v1682, 1
      %v1742 = vpop.permute.xlu0 %1741
      %1743 = vrot.lane.b32.xlu0 %v1683, 1
      %v1744 = vpop.permute.xlu0 %1743
      %1745 = vrot.lane.b32.xlu0 %v1684, 1
      %v1746 = vpop.permute.xlu0 %1745
      %1747 = vrot.lane.b32.xlu0 %v1685, 1
      %v1748 = vpop.permute.xlu0 %1747
      %1749 = vrot.lane.b32.xlu0 %v1686, 1
      %v1750 = vpop.permute.xlu0 %1749
      %1751 = vrot.lane.b32.xlu0 %v1687, 1
      %v1752 = vpop.permute.xlu0 %1751
      %1753 = vrot.lane.b32.xlu0 %v1688, 1
      %v1754 = vpop.permute.xlu0 %1753
      %1755 = vrot.lane.b32.xlu0 %v1689, 1
      %v1756 = vpop.permute.xlu0 %1755
      %1757 = vrot.lane.b32.xlu0 %v1690, 1
      %v1758 = vpop.permute.xlu0 %1757
      %1759 = vrot.lane.b32.xlu0 %v1691, 1
      %v1760 = vpop.permute.xlu0 %1759
      %1761 = vrot.lane.b32.xlu0 %v1692, 1
      %v1762 = vpop.permute.xlu0 %1761
      %1763 = vrot.lane.b32.xlu0 %v1693, 1
      %v1764 = vpop.permute.xlu0 %1763
      %1765 = vrot.lane.b32.xlu0 %v1694, 1
      %v1766 = vpop.permute.xlu0 %1765
      %vm1767 = vcmask 7168
      %v1768 = vsel %vm1767, %v1720, %v1722
      %v1769 = vsel %vm1767, %v1722, %v1724
      %v1770 = vsel %vm1767, %v1726, %v1728
      %v1771 = vsel %vm1767, %v1728, %v1730
      %v1772 = vsel %vm1767, %v1732, %v1734
      %v1773 = vsel %vm1767, %v1734, %v1736
      %v1774 = vsel %vm1767, %v1738, %v1740
      %v1775 = vsel %vm1767, %v1740, %v1742
      %v1776 = vsel %vm1767, %v1744, %v1746
      %v1777 = vsel %vm1767, %v1746, %v1748
      %v1778 = vsel %vm1767, %v1750, %v1752
      %v1779 = vsel %vm1767, %v1752, %v1754
      %v1780 = vsel %vm1767, %v1756, %v1758
      %v1781 = vsel %vm1767, %v1758, %v1760
      %v1782 = vsel %vm1767, %v1762, %v1764
      %v1783 = vsel %vm1767, %v1764, %v1766
      %1800 = vst [vmem:[#allocation3 + $0x180] sm:$0xff] %v1768
      %1801 = vst [vmem:[#allocation3 + $0x188] sm:$0xff] %v1769
      %1802 = vst [vmem:[#allocation3 + $0x190] sm:$0xff] %v1770
      %1803 = vst [vmem:[#allocation3 + $0x198] sm:$0xff] %v1771
      %1804 = vst [vmem:[#allocation3 + $0x1a0] sm:$0xff] %v1772
      %1805 = vst [vmem:[#allocation3 + $0x1a8] sm:$0xff] %v1773
      %1806 = vst [vmem:[#allocation3 + $0x1b0] sm:$0xff] %v1774
      %1807 = vst [vmem:[#allocation3 + $0x1b8] sm:$0xff] %v1775
      %1808 = vst [vmem:[#allocation3 + $0x1c0] sm:$0xff] %v1776
      %1809 = vst [vmem:[#allocation3 + $0x1c8] sm:$0xff] %v1777
      %1810 = vst [vmem:[#allocation3 + $0x1d0] sm:$0xff] %v1778
      %1811 = vst [vmem:[#allocation3 + $0x1d8] sm:$0xff] %v1779
      %1812 = vst [vmem:[#allocation3 + $0x1e0] sm:$0xff] %v1780
      %1813 = vst [vmem:[#allocation3 + $0x1e8] sm:$0xff] %v1781
      %1814 = vst [vmem:[#allocation3 + $0x1f0] sm:$0xff] %v1782
      %1815 = vst [vmem:[#allocation3 + $0x1f8] sm:$0xff] %v1783
      %v1816 = vld [vmem:[#allocation2 + $0x8] sm:$0xff]
      %v1817 = vld [vmem:[#allocation2 + $0x10] sm:$0xff]
      %v1818 = vld [vmem:[#allocation2 + $0x28] sm:$0xff]
      %v1819 = vld [vmem:[#allocation2 + $0x30] sm:$0xff]
      %v1820 = vld [vmem:[#allocation2 + $0x48] sm:$0xff]
      %v1821 = vld [vmem:[#allocation2 + $0x50] sm:$0xff]
      %v1822 = vld [vmem:[#allocation2 + $0x68] sm:$0xff]
      %v1823 = vld [vmem:[#allocation2 + $0x70] sm:$0xff]
      %v1824 = vld [vmem:[#allocation2 + $0x88] sm:$0xff]
      %v1825 = vld [vmem:[#allocation2 + $0x90] sm:$0xff]
      %v1826 = vld [vmem:[#allocation2 + $0xa8] sm:$0xff]
      %v1827 = vld [vmem:[#allocation2 + $0xb0] sm:$0xff]
      %v1828 = vld [vmem:[#allocation2 + $0xc8] sm:$0xff]
      %v1829 = vld [vmem:[#allocation2 + $0xd0] sm:$0xff]
      %v1830 = vld [vmem:[#allocation2 + $0xe8] sm:$0xff]
      %v1831 = vld [vmem:[#allocation2 + $0xf0] sm:$0xff]
      %1832 = vst [vmem:[#allocation3 + $0x200] sm:$0xff] %v1816
      %1833 = vst [vmem:[#allocation3 + $0x208] sm:$0xff] %v1817
      %1834 = vst [vmem:[#allocation3 + $0x210] sm:$0xff] %v1818
      %1835 = vst [vmem:[#allocation3 + $0x218] sm:$0xff] %v1819
      %1836 = vst [vmem:[#allocation3 + $0x220] sm:$0xff] %v1820
      %1837 = vst [vmem:[#allocation3 + $0x228] sm:$0xff] %v1821
      %1838 = vst [vmem:[#allocation3 + $0x230] sm:$0xff] %v1822
      %1839 = vst [vmem:[#allocation3 + $0x238] sm:$0xff] %v1823
      %1840 = vst [vmem:[#allocation3 + $0x240] sm:$0xff] %v1824
      %1841 = vst [vmem:[#allocation3 + $0x248] sm:$0xff] %v1825
      %1842 = vst [vmem:[#allocation3 + $0x250] sm:$0xff] %v1826
      %1843 = vst [vmem:[#allocation3 + $0x258] sm:$0xff] %v1827
      %1844 = vst [vmem:[#allocation3 + $0x260] sm:$0xff] %v1828
      %1845 = vst [vmem:[#allocation3 + $0x268] sm:$0xff] %v1829
      %1846 = vst [vmem:[#allocation3 + $0x270] sm:$0xff] %v1830
      %1847 = vst [vmem:[#allocation3 + $0x278] sm:$0xff] %v1831
      %v1848 = vld [vmem:[#allocation2 + $0x8] sm:$0xff]
      %v1849 = vld [vmem:[#allocation2 + $0x10] sm:$0xff]
      %v1850 = vld [vmem:[#allocation2 + $0x18] sm:$0xff]
      %v1851 = vld [vmem:[#allocation2 + $0x28] sm:$0xff]
      %v1852 = vld [vmem:[#allocation2 + $0x30] sm:$0xff]
      %v1853 = vld [vmem:[#allocation2 + $0x38] sm:$0xff]
      %v1854 = vld [vmem:[#allocation2 + $0x48] sm:$0xff]
      %v1855 = vld [vmem:[#allocation2 + $0x50] sm:$0xff]
      %v1856 = vld [vmem:[#allocation2 + $0x58] sm:$0xff]
      %v1857 = vld [vmem:[#allocation2 + $0x68] sm:$0xff]
      %v1858 = vld [vmem:[#allocation2 + $0x70] sm:$0xff]
      %v1859 = vld [vmem:[#allocation2 + $0x78] sm:$0xff]
      %v1860 = vld [vmem:[#allocation2 + $0x88] sm:$0xff]
      %v1861 = vld [vmem:[#allocation2 + $0x90] sm:$0xff]
      %v1862 = vld [vmem:[#allocation2 + $0x98] sm:$0xff]
      %v1863 = vld [vmem:[#allocation2 + $0xa8] sm:$0xff]
      %v1864 = vld [vmem:[#allocation2 + $0xb0] sm:$0xff]
      %v1865 = vld [vmem:[#allocation2 + $0xb8] sm:$0xff]
      %v1866 = vld [vmem:[#allocation2 + $0xc8] sm:$0xff]
      %v1867 = vld [vmem:[#allocation2 + $0xd0] sm:$0xff]
      %v1868 = vld [vmem:[#allocation2 + $0xd8] sm:$0xff]
      %v1869 = vld [vmem:[#allocation2 + $0xe8] sm:$0xff]
      %v1870 = vld [vmem:[#allocation2 + $0xf0] sm:$0xff]
      %v1871 = vld [vmem:[#allocation2 + $0xf8] sm:$0xff]
      %1872 = vrot.lane.b32.xlu0 %v1482, 1
      %v1873 = vpop.permute.xlu0 %1872
      %1874 = vrot.lane.b32.xlu0 %v1483, 1
      %v1875 = vpop.permute.xlu0 %1874
      %v1876 = vsel %vm1767, %v1873, %v1875
      %v1880 = vmul.f32 %v1848, %v1873
      %v1881 = vmul.f32 %v1849, %v1876
      %v1882 = vmul.f32 %v1850, %v1875
      %v1883 = vmul.f32 %v1851, %v1873
      %v1884 = vmul.f32 %v1852, %v1876
      %v1885 = vmul.f32 %v1853, %v1875
      %v1886 = vmul.f32 %v1854, %v1873
      %v1887 = vmul.f32 %v1855, %v1876
      %v1888 = vmul.f32 %v1856, %v1875
      %v1889 = vmul.f32 %v1857, %v1873
      %v1890 = vmul.f32 %v1858, %v1876
      %v1891 = vmul.f32 %v1859, %v1875
      %v1892 = vmul.f32 %v1860, %v1873
      %v1893 = vmul.f32 %v1861, %v1876
      %v1894 = vmul.f32 %v1862, %v1875
      %v1895 = vmul.f32 %v1863, %v1873
      %v1896 = vmul.f32 %v1864, %v1876
      %v1897 = vmul.f32 %v1865, %v1875
      %v1898 = vmul.f32 %v1866, %v1873
      %v1899 = vmul.f32 %v1867, %v1876
      %v1900 = vmul.f32 %v1868, %v1875
      %v1901 = vmul.f32 %v1869, %v1873
      %v1902 = vmul.f32 %v1870, %v1876
      %v1903 = vmul.f32 %v1871, %v1875
      %1928 = vrot.lane.b32.xlu0 %v1880, 127
      %v1929 = vpop.permute.xlu0 %1928
      %1930 = vrot.lane.b32.xlu0 %v1881, 127
      %v1931 = vpop.permute.xlu0 %1930
      %1932 = vrot.lane.b32.xlu0 %v1882, 127
      %v1933 = vpop.permute.xlu0 %1932
      %1934 = vrot.lane.b32.xlu0 %v1883, 127
      %v1935 = vpop.permute.xlu0 %1934
      %1936 = vrot.lane.b32.xlu0 %v1884, 127
      %v1937 = vpop.permute.xlu0 %1936
      %1938 = vrot.lane.b32.xlu0 %v1885, 127
      %v1939 = vpop.permute.xlu0 %1938
      %1940 = vrot.lane.b32.xlu0 %v1886, 127
      %v1941 = vpop.permute.xlu0 %1940
      %1942 = vrot.lane.b32.xlu0 %v1887, 127
      %v1943 = vpop.permute.xlu0 %1942
      %1944 = vrot.lane.b32.xlu0 %v1888, 127
      %v1945 = vpop.permute.xlu0 %1944
      %1946 = vrot.lane.b32.xlu0 %v1889, 127
      %v1947 = vpop.permute.xlu0 %1946
      %1948 = vrot.lane.b32.xlu0 %v1890, 127
      %v1949 = vpop.permute.xlu0 %1948
      %1950 = vrot.lane.b32.xlu0 %v1891, 127
      %v1951 = vpop.permute.xlu0 %1950
      %1952 = vrot.lane.b32.xlu0 %v1892, 127
      %v1953 = vpop.permute.xlu0 %1952
      %1954 = vrot.lane.b32.xlu0 %v1893, 127
      %v1955 = vpop.permute.xlu0 %1954
      %1956 = vrot.lane.b32.xlu0 %v1894, 127
      %v1957 = vpop.permute.xlu0 %1956
      %1958 = vrot.lane.b32.xlu0 %v1895, 127
      %v1959 = vpop.permute.xlu0 %1958
      %1960 = vrot.lane.b32.xlu0 %v1896, 127
      %v1961 = vpop.permute.xlu0 %1960
      %1962 = vrot.lane.b32.xlu0 %v1897, 127
      %v1963 = vpop.permute.xlu0 %1962
      %1964 = vrot.lane.b32.xlu0 %v1898, 127
      %v1965 = vpop.permute.xlu0 %1964
      %1966 = vrot.lane.b32.xlu0 %v1899, 127
      %v1967 = vpop.permute.xlu0 %1966
      %1968 = vrot.lane.b32.xlu0 %v1900, 127
      %v1969 = vpop.permute.xlu0 %1968
      %1970 = vrot.lane.b32.xlu0 %v1901, 127
      %v1971 = vpop.permute.xlu0 %1970
      %1972 = vrot.lane.b32.xlu0 %v1902, 127
      %v1973 = vpop.permute.xlu0 %1972
      %1974 = vrot.lane.b32.xlu0 %v1903, 127
      %v1975 = vpop.permute.xlu0 %1974
      %v1976 = vsel %vm1666, %v1929, %v1931
      %v1977 = vsel %vm1666, %v1931, %v1933
      %v1978 = vsel %vm1666, %v1935, %v1937
      %v1979 = vsel %vm1666, %v1937, %v1939
      %v1980 = vsel %vm1666, %v1941, %v1943
      %v1981 = vsel %vm1666, %v1943, %v1945
      %v1982 = vsel %vm1666, %v1947, %v1949
      %v1983 = vsel %vm1666, %v1949, %v1951
      %v1984 = vsel %vm1666, %v1953, %v1955
      %v1985 = vsel %vm1666, %v1955, %v1957
      %v1986 = vsel %vm1666, %v1959, %v1961
      %v1987 = vsel %vm1666, %v1961, %v1963
      %v1988 = vsel %vm1666, %v1965, %v1967
      %v1989 = vsel %vm1666, %v1967, %v1969
      %v1990 = vsel %vm1666, %v1971, %v1973
      %v1991 = vsel %vm1666, %v1973, %v1975
      %2008 = vst [vmem:[#allocation3 + $0x280] sm:$0xff] %v1976
      %2009 = vst [vmem:[#allocation3 + $0x288] sm:$0xff] %v1977
      %2010 = vst [vmem:[#allocation3 + $0x290] sm:$0xff] %v1978
      %2011 = vst [vmem:[#allocation3 + $0x298] sm:$0xff] %v1979
      %2012 = vst [vmem:[#allocation3 + $0x2a0] sm:$0xff] %v1980
      %2013 = vst [vmem:[#allocation3 + $0x2a8] sm:$0xff] %v1981
      %2014 = vst [vmem:[#allocation3 + $0x2b0] sm:$0xff] %v1982
      %2015 = vst [vmem:[#allocation3 + $0x2b8] sm:$0xff] %v1983
      %2016 = vst [vmem:[#allocation3 + $0x2c0] sm:$0xff] %v1984
      %2017 = vst [vmem:[#allocation3 + $0x2c8] sm:$0xff] %v1985
      %2018 = vst [vmem:[#allocation3 + $0x2d0] sm:$0xff] %v1986
      %2019 = vst [vmem:[#allocation3 + $0x2d8] sm:$0xff] %v1987
      %2020 = vst [vmem:[#allocation3 + $0x2e0] sm:$0xff] %v1988
      %2021 = vst [vmem:[#allocation3 + $0x2e8] sm:$0xff] %v1989
      %2022 = vst [vmem:[#allocation3 + $0x2f0] sm:$0xff] %v1990
      %2023 = vst [vmem:[#allocation3 + $0x2f8] sm:$0xff] %v1991
      %v2024 = vld [vmem:[#allocation2 + $0x8] sm:$0xff]
      %v2025 = vld [vmem:[#allocation2 + $0x10] sm:$0xff]
      %v2026 = vld [vmem:[#allocation2 + $0x18] sm:$0xff]
      %v2027 = vld [vmem:[#allocation2 + $0x28] sm:$0xff]
      %v2028 = vld [vmem:[#allocation2 + $0x30] sm:$0xff]
      %v2029 = vld [vmem:[#allocation2 + $0x38] sm:$0xff]
      %v2030 = vld [vmem:[#allocation2 + $0x48] sm:$0xff]
      %v2031 = vld [vmem:[#allocation2 + $0x50] sm:$0xff]
      %v2032 = vld [vmem:[#allocation2 + $0x58] sm:$0xff]
      %v2033 = vld [vmem:[#allocation2 + $0x68] sm:$0xff]
      %v2034 = vld [vmem:[#allocation2 + $0x70] sm:$0xff]
      %v2035 = vld [vmem:[#allocation2 + $0x78] sm:$0xff]
      %v2036 = vld [vmem:[#allocation2 + $0x88] sm:$0xff]
      %v2037 = vld [vmem:[#allocation2 + $0x90] sm:$0xff]
      %v2038 = vld [vmem:[#allocation2 + $0x98] sm:$0xff]
      %v2039 = vld [vmem:[#allocation2 + $0xa8] sm:$0xff]
      %v2040 = vld [vmem:[#allocation2 + $0xb0] sm:$0xff]
      %v2041 = vld [vmem:[#allocation2 + $0xb8] sm:$0xff]
      %v2042 = vld [vmem:[#allocation2 + $0xc8] sm:$0xff]
      %v2043 = vld [vmem:[#allocation2 + $0xd0] sm:$0xff]
      %v2044 = vld [vmem:[#allocation2 + $0xd8] sm:$0xff]
      %v2045 = vld [vmem:[#allocation2 + $0xe8] sm:$0xff]
      %v2046 = vld [vmem:[#allocation2 + $0xf0] sm:$0xff]
      %v2047 = vld [vmem:[#allocation2 + $0xf8] sm:$0xff]
      %2048 = vrot.lane.b32.xlu0 %v1157, 15
      %v2049 = vpop.permute.xlu0 %2048
      %2050 = vrot.lane.b32.xlu0 %v1158, 15
      %v2051 = vpop.permute.xlu0 %2050
      %v2052 = vsel %vm1589, %v2049, %v2051
      %v2056 = vmul.f32 %v2024, %v2049
      %v2057 = vmul.f32 %v2025, %v2052
      %v2058 = vmul.f32 %v2026, %v2051
      %v2059 = vmul.f32 %v2027, %v2049
      %v2060 = vmul.f32 %v2028, %v2052
      %v2061 = vmul.f32 %v2029, %v2051
      %v2062 = vmul.f32 %v2030, %v2049
      %v2063 = vmul.f32 %v2031, %v2052
      %v2064 = vmul.f32 %v2032, %v2051
      %v2065 = vmul.f32 %v2033, %v2049
      %v2066 = vmul.f32 %v2034, %v2052
      %v2067 = vmul.f32 %v2035, %v2051
      %v2068 = vmul.f32 %v2036, %v2049
      %v2069 = vmul.f32 %v2037, %v2052
      %v2070 = vmul.f32 %v2038, %v2051
      %v2071 = vmul.f32 %v2039, %v2049
      %v2072 = vmul.f32 %v2040, %v2052
      %v2073 = vmul.f32 %v2041, %v2051
      %v2074 = vmul.f32 %v2042, %v2049
      %v2075 = vmul.f32 %v2043, %v2052
      %v2076 = vmul.f32 %v2044, %v2051
      %v2077 = vmul.f32 %v2045, %v2049
      %v2078 = vmul.f32 %v2046, %v2052
      %v2079 = vmul.f32 %v2047, %v2051
      %2104 = vrot.lane.b32.xlu0 %v2056, 113
      %v2105 = vpop.permute.xlu0 %2104
      %2106 = vrot.lane.b32.xlu0 %v2057, 113
      %v2107 = vpop.permute.xlu0 %2106
      %2108 = vrot.lane.b32.xlu0 %v2058, 113
      %v2109 = vpop.permute.xlu0 %2108
      %2110 = vrot.lane.b32.xlu0 %v2059, 113
      %v2111 = vpop.permute.xlu0 %2110
      %2112 = vrot.lane.b32.xlu0 %v2060, 113
      %v2113 = vpop.permute.xlu0 %2112
      %2114 = vrot.lane.b32.xlu0 %v2061, 113
      %v2115 = vpop.permute.xlu0 %2114
      %2116 = vrot.lane.b32.xlu0 %v2062, 113
      %v2117 = vpop.permute.xlu0 %2116
      %2118 = vrot.lane.b32.xlu0 %v2063, 113
      %v2119 = vpop.permute.xlu0 %2118
      %2120 = vrot.lane.b32.xlu0 %v2064, 113
      %v2121 = vpop.permute.xlu0 %2120
      %2122 = vrot.lane.b32.xlu0 %v2065, 113
      %v2123 = vpop.permute.xlu0 %2122
      %2124 = vrot.lane.b32.xlu0 %v2066, 113
      %v2125 = vpop.permute.xlu0 %2124
      %2126 = vrot.lane.b32.xlu0 %v2067, 113
      %v2127 = vpop.permute.xlu0 %2126
      %2128 = vrot.lane.b32.xlu0 %v2068, 113
      %v2129 = vpop.permute.xlu0 %2128
      %2130 = vrot.lane.b32.xlu0 %v2069, 113
      %v2131 = vpop.permute.xlu0 %2130
      %2132 = vrot.lane.b32.xlu0 %v2070, 113
      %v2133 = vpop.permute.xlu0 %2132
      %2134 = vrot.lane.b32.xlu0 %v2071, 113
      %v2135 = vpop.permute.xlu0 %2134
      %2136 = vrot.lane.b32.xlu0 %v2072, 113
      %v2137 = vpop.permute.xlu0 %2136
      %2138 = vrot.lane.b32.xlu0 %v2073, 113
      %v2139 = vpop.permute.xlu0 %2138
      %2140 = vrot.lane.b32.xlu0 %v2074, 113
      %v2141 = vpop.permute.xlu0 %2140
      %2142 = vrot.lane.b32.xlu0 %v2075, 113
      %v2143 = vpop.permute.xlu0 %2142
      %2144 = vrot.lane.b32.xlu0 %v2076, 113
      %v2145 = vpop.permute.xlu0 %2144
      %2146 = vrot.lane.b32.xlu0 %v2077, 113
      %v2147 = vpop.permute.xlu0 %2146
      %2148 = vrot.lane.b32.xlu0 %v2078, 113
      %v2149 = vpop.permute.xlu0 %2148
      %2150 = vrot.lane.b32.xlu0 %v2079, 113
      %v2151 = vpop.permute.xlu0 %2150
      %v2152 = vsel %vm1488, %v2105, %v2107
      %v2153 = vsel %vm1488, %v2107, %v2109
      %v2154 = vsel %vm1488, %v2111, %v2113
      %v2155 = vsel %vm1488, %v2113, %v2115
      %v2156 = vsel %vm1488, %v2117, %v2119
      %v2157 = vsel %vm1488, %v2119, %v2121
      %v2158 = vsel %vm1488, %v2123, %v2125
      %v2159 = vsel %vm1488, %v2125, %v2127
      %v2160 = vsel %vm1488, %v2129, %v2131
      %v2161 = vsel %vm1488, %v2131, %v2133
      %v2162 = vsel %vm1488, %v2135, %v2137
      %v2163 = vsel %vm1488, %v2137, %v2139
      %v2164 = vsel %vm1488, %v2141, %v2143
      %v2165 = vsel %vm1488, %v2143, %v2145
      %v2166 = vsel %vm1488, %v2147, %v2149
      %v2167 = vsel %vm1488, %v2149, %v2151
      %2184 = vst [vmem:[#allocation3 + $0x300] sm:$0xff] %v2152
      %2185 = vst [vmem:[#allocation3 + $0x308] sm:$0xff] %v2153
      %2186 = vst [vmem:[#allocation3 + $0x310] sm:$0xff] %v2154
      %2187 = vst [vmem:[#allocation3 + $0x318] sm:$0xff] %v2155
      %2188 = vst [vmem:[#allocation3 + $0x320] sm:$0xff] %v2156
      %2189 = vst [vmem:[#allocation3 + $0x328] sm:$0xff] %v2157
      %2190 = vst [vmem:[#allocation3 + $0x330] sm:$0xff] %v2158
      %2191 = vst [vmem:[#allocation3 + $0x338] sm:$0xff] %v2159
      %2192 = vst [vmem:[#allocation3 + $0x340] sm:$0xff] %v2160
      %2193 = vst [vmem:[#allocation3 + $0x348] sm:$0xff] %v2161
      %2194 = vst [vmem:[#allocation3 + $0x350] sm:$0xff] %v2162
      %2195 = vst [vmem:[#allocation3 + $0x358] sm:$0xff] %v2163
      %2196 = vst [vmem:[#allocation3 + $0x360] sm:$0xff] %v2164
      %2197 = vst [vmem:[#allocation3 + $0x368] sm:$0xff] %v2165
      %2198 = vst [vmem:[#allocation3 + $0x370] sm:$0xff] %v2166
      %2199 = vst [vmem:[#allocation3 + $0x378] sm:$0xff] %v2167
      %v2200 = vld [vmem:[#allocation2 + $0x8] sm:$0xff]
      %v2201 = vld [vmem:[#allocation2 + $0x10] sm:$0xff]
      %v2202 = vld [vmem:[#allocation2 + $0x18] sm:$0xff]
      %v2203 = vld [vmem:[#allocation2 + $0x28] sm:$0xff]
      %v2204 = vld [vmem:[#allocation2 + $0x30] sm:$0xff]
      %v2205 = vld [vmem:[#allocation2 + $0x38] sm:$0xff]
      %v2206 = vld [vmem:[#allocation2 + $0x48] sm:$0xff]
      %v2207 = vld [vmem:[#allocation2 + $0x50] sm:$0xff]
      %v2208 = vld [vmem:[#allocation2 + $0x58] sm:$0xff]
      %v2209 = vld [vmem:[#allocation2 + $0x68] sm:$0xff]
      %v2210 = vld [vmem:[#allocation2 + $0x70] sm:$0xff]
      %v2211 = vld [vmem:[#allocation2 + $0x78] sm:$0xff]
      %v2212 = vld [vmem:[#allocation2 + $0x88] sm:$0xff]
      %v2213 = vld [vmem:[#allocation2 + $0x90] sm:$0xff]
      %v2214 = vld [vmem:[#allocation2 + $0x98] sm:$0xff]
      %v2215 = vld [vmem:[#allocation2 + $0xa8] sm:$0xff]
      %v2216 = vld [vmem:[#allocation2 + $0xb0] sm:$0xff]
      %v2217 = vld [vmem:[#allocation2 + $0xb8] sm:$0xff]
      %v2218 = vld [vmem:[#allocation2 + $0xc8] sm:$0xff]
      %v2219 = vld [vmem:[#allocation2 + $0xd0] sm:$0xff]
      %v2220 = vld [vmem:[#allocation2 + $0xd8] sm:$0xff]
      %v2221 = vld [vmem:[#allocation2 + $0xe8] sm:$0xff]
      %v2222 = vld [vmem:[#allocation2 + $0xf0] sm:$0xff]
      %v2223 = vld [vmem:[#allocation2 + $0xf8] sm:$0xff]
      %2248 = vrot.lane.b32.xlu0 %v2200, 112
      %v2249 = vpop.permute.xlu0 %2248
      %2250 = vrot.lane.b32.xlu0 %v2201, 112
      %v2251 = vpop.permute.xlu0 %2250
      %2252 = vrot.lane.b32.xlu0 %v2202, 112
      %v2253 = vpop.permute.xlu0 %2252
      %2254 = vrot.lane.b32.xlu0 %v2203, 112
      %v2255 = vpop.permute.xlu0 %2254
      %2256 = vrot.lane.b32.xlu0 %v2204, 112
      %v2257 = vpop.permute.xlu0 %2256
      %2258 = vrot.lane.b32.xlu0 %v2205, 112
      %v2259 = vpop.permute.xlu0 %2258
      %2260 = vrot.lane.b32.xlu0 %v2206, 112
      %v2261 = vpop.permute.xlu0 %2260
      %2262 = vrot.lane.b32.xlu0 %v2207, 112
      %v2263 = vpop.permute.xlu0 %2262
      %2264 = vrot.lane.b32.xlu0 %v2208, 112
      %v2265 = vpop.permute.xlu0 %2264
      %2266 = vrot.lane.b32.xlu0 %v2209, 112
      %v2267 = vpop.permute.xlu0 %2266
      %2268 = vrot.lane.b32.xlu0 %v2210, 112
      %v2269 = vpop.permute.xlu0 %2268
      %2270 = vrot.lane.b32.xlu0 %v2211, 112
      %v2271 = vpop.permute.xlu0 %2270
      %2272 = vrot.lane.b32.xlu0 %v2212, 112
      %v2273 = vpop.permute.xlu0 %2272
      %2274 = vrot.lane.b32.xlu0 %v2213, 112
      %v2275 = vpop.permute.xlu0 %2274
      %2276 = vrot.lane.b32.xlu0 %v2214, 112
      %v2277 = vpop.permute.xlu0 %2276
      %2278 = vrot.lane.b32.xlu0 %v2215, 112
      %v2279 = vpop.permute.xlu0 %2278
      %2280 = vrot.lane.b32.xlu0 %v2216, 112
      %v2281 = vpop.permute.xlu0 %2280
      %2282 = vrot.lane.b32.xlu0 %v2217, 112
      %v2283 = vpop.permute.xlu0 %2282
      %2284 = vrot.lane.b32.xlu0 %v2218, 112
      %v2285 = vpop.permute.xlu0 %2284
      %2286 = vrot.lane.b32.xlu0 %v2219, 112
      %v2287 = vpop.permute.xlu0 %2286
      %2288 = vrot.lane.b32.xlu0 %v2220, 112
      %v2289 = vpop.permute.xlu0 %2288
      %2290 = vrot.lane.b32.xlu0 %v2221, 112
      %v2291 = vpop.permute.xlu0 %2290
      %2292 = vrot.lane.b32.xlu0 %v2222, 112
      %v2293 = vpop.permute.xlu0 %2292
      %2294 = vrot.lane.b32.xlu0 %v2223, 112
      %v2295 = vpop.permute.xlu0 %2294
      %vm2296 = vcmask 916480
      %v2297 = vsel %vm2296, %v2249, %v2251
      %v2298 = vsel %vm2296, %v2251, %v2253
      %v2299 = vsel %vm2296, %v2255, %v2257
      %v2300 = vsel %vm2296, %v2257, %v2259
      %v2301 = vsel %vm2296, %v2261, %v2263
      %v2302 = vsel %vm2296, %v2263, %v2265
      %v2303 = vsel %vm2296, %v2267, %v2269
      %v2304 = vsel %vm2296, %v2269, %v2271
      %v2305 = vsel %vm2296, %v2273, %v2275
      %v2306 = vsel %vm2296, %v2275, %v2277
      %v2307 = vsel %vm2296, %v2279, %v2281
      %v2308 = vsel %vm2296, %v2281, %v2283
      %v2309 = vsel %vm2296, %v2285, %v2287
      %v2310 = vsel %vm2296, %v2287, %v2289
      %v2311 = vsel %vm2296, %v2291, %v2293
      %v2312 = vsel %vm2296, %v2293, %v2295
      %2329 = vst [vmem:[#allocation3 + $0x380] sm:$0xff] %v2297
      %2330 = vst [vmem:[#allocation3 + $0x388] sm:$0xff] %v2298
      %2331 = vst [vmem:[#allocation3 + $0x390] sm:$0xff] %v2299
      %2332 = vst [vmem:[#allocation3 + $0x398] sm:$0xff] %v2300
      %2333 = vst [vmem:[#allocation3 + $0x3a0] sm:$0xff] %v2301
      %2334 = vst [vmem:[#allocation3 + $0x3a8] sm:$0xff] %v2302
      %2335 = vst [vmem:[#allocation3 + $0x3b0] sm:$0xff] %v2303
      %2336 = vst [vmem:[#allocation3 + $0x3b8] sm:$0xff] %v2304
      %2337 = vst [vmem:[#allocation3 + $0x3c0] sm:$0xff] %v2305
      %2338 = vst [vmem:[#allocation3 + $0x3c8] sm:$0xff] %v2306
      %2339 = vst [vmem:[#allocation3 + $0x3d0] sm:$0xff] %v2307
      %2340 = vst [vmem:[#allocation3 + $0x3d8] sm:$0xff] %v2308
      %2341 = vst [vmem:[#allocation3 + $0x3e0] sm:$0xff] %v2309
      %2342 = vst [vmem:[#allocation3 + $0x3e8] sm:$0xff] %v2310
      %2343 = vst [vmem:[#allocation3 + $0x3f0] sm:$0xff] %v2311
      %2344 = vst [vmem:[#allocation3 + $0x3f8] sm:$0xff] %v2312
      %v2345 = vld [vmem:[#allocation2 + $0x8] sm:$0xff]
      %v2346 = vld [vmem:[#allocation2 + $0x10] sm:$0xff]
      %v2347 = vld [vmem:[#allocation2 + $0x18] sm:$0xff]
      %v2348 = vld [vmem:[#allocation2 + $0x28] sm:$0xff]
      %v2349 = vld [vmem:[#allocation2 + $0x30] sm:$0xff]
      %v2350 = vld [vmem:[#allocation2 + $0x38] sm:$0xff]
      %v2351 = vld [vmem:[#allocation2 + $0x48] sm:$0xff]
      %v2352 = vld [vmem:[#allocation2 + $0x50] sm:$0xff]
      %v2353 = vld [vmem:[#allocation2 + $0x58] sm:$0xff]
      %v2354 = vld [vmem:[#allocation2 + $0x68] sm:$0xff]
      %v2355 = vld [vmem:[#allocation2 + $0x70] sm:$0xff]
      %v2356 = vld [vmem:[#allocation2 + $0x78] sm:$0xff]
      %v2357 = vld [vmem:[#allocation2 + $0x88] sm:$0xff]
      %v2358 = vld [vmem:[#allocation2 + $0x90] sm:$0xff]
      %v2359 = vld [vmem:[#allocation2 + $0x98] sm:$0xff]
      %v2360 = vld [vmem:[#allocation2 + $0xa8] sm:$0xff]
      %v2361 = vld [vmem:[#allocation2 + $0xb0] sm:$0xff]
      %v2362 = vld [vmem:[#allocation2 + $0xb8] sm:$0xff]
      %v2363 = vld [vmem:[#allocation2 + $0xc8] sm:$0xff]
      %v2364 = vld [vmem:[#allocation2 + $0xd0] sm:$0xff]
      %v2365 = vld [vmem:[#allocation2 + $0xd8] sm:$0xff]
      %v2366 = vld [vmem:[#allocation2 + $0xe8] sm:$0xff]
      %v2367 = vld [vmem:[#allocation2 + $0xf0] sm:$0xff]
      %v2368 = vld [vmem:[#allocation2 + $0xf8] sm:$0xff]
      %2369 = vrot.lane.b32.xlu0 %v1482, 17
      %v2370 = vpop.permute.xlu0 %2369
      %2371 = vrot.lane.b32.xlu0 %v1483, 17
      %v2372 = vpop.permute.xlu0 %2371
      %v2373 = vsel %vm1264, %v2370, %v2372
      %v2377 = vmul.f32 %v2345, %v2370
      %v2378 = vmul.f32 %v2346, %v2373
      %v2379 = vmul.f32 %v2347, %v2372
      %v2380 = vmul.f32 %v2348, %v2370
      %v2381 = vmul.f32 %v2349, %v2373
      %v2382 = vmul.f32 %v2350, %v2372
      %v2383 = vmul.f32 %v2351, %v2370
      %v2384 = vmul.f32 %v2352, %v2373
      %v2385 = vmul.f32 %v2353, %v2372
      %v2386 = vmul.f32 %v2354, %v2370
      %v2387 = vmul.f32 %v2355, %v2373
      %v2388 = vmul.f32 %v2356, %v2372
      %v2389 = vmul.f32 %v2357, %v2370
      %v2390 = vmul.f32 %v2358, %v2373
      %v2391 = vmul.f32 %v2359, %v2372
      %v2392 = vmul.f32 %v2360, %v2370
      %v2393 = vmul.f32 %v2361, %v2373
      %v2394 = vmul.f32 %v2362, %v2372
      %v2395 = vmul.f32 %v2363, %v2370
      %v2396 = vmul.f32 %v2364, %v2373
      %v2397 = vmul.f32 %v2365, %v2372
      %v2398 = vmul.f32 %v2366, %v2370
      %v2399 = vmul.f32 %v2367, %v2373
      %v2400 = vmul.f32 %v2368, %v2372
      %2425 = vrot.lane.b32.xlu0 %v2377, 111
      %v2426 = vpop.permute.xlu0 %2425
      %2427 = vrot.lane.b32.xlu0 %v2378, 111
      %v2428 = vpop.permute.xlu0 %2427
      %2429 = vrot.lane.b32.xlu0 %v2379, 111
      %v2430 = vpop.permute.xlu0 %2429
      %2431 = vrot.lane.b32.xlu0 %v2380, 111
      %v2432 = vpop.permute.xlu0 %2431
      %2433 = vrot.lane.b32.xlu0 %v2381, 111
      %v2434 = vpop.permute.xlu0 %2433
      %2435 = vrot.lane.b32.xlu0 %v2382, 111
      %v2436 = vpop.permute.xlu0 %2435
      %2437 = vrot.lane.b32.xlu0 %v2383, 111
      %v2438 = vpop.permute.xlu0 %2437
      %2439 = vrot.lane.b32.xlu0 %v2384, 111
      %v2440 = vpop.permute.xlu0 %2439
      %2441 = vrot.lane.b32.xlu0 %v2385, 111
      %v2442 = vpop.permute.xlu0 %2441
      %2443 = vrot.lane.b32.xlu0 %v2386, 111
      %v2444 = vpop.permute.xlu0 %2443
      %2445 = vrot.lane.b32.xlu0 %v2387, 111
      %v2446 = vpop.permute.xlu0 %2445
      %2447 = vrot.lane.b32.xlu0 %v2388, 111
      %v2448 = vpop.permute.xlu0 %2447
      %2449 = vrot.lane.b32.xlu0 %v2389, 111
      %v2450 = vpop.permute.xlu0 %2449
      %2451 = vrot.lane.b32.xlu0 %v2390, 111
      %v2452 = vpop.permute.xlu0 %2451
      %2453 = vrot.lane.b32.xlu0 %v2391, 111
      %v2454 = vpop.permute.xlu0 %2453
      %2455 = vrot.lane.b32.xlu0 %v2392, 111
      %v2456 = vpop.permute.xlu0 %2455
      %2457 = vrot.lane.b32.xlu0 %v2393, 111
      %v2458 = vpop.permute.xlu0 %2457
      %2459 = vrot.lane.b32.xlu0 %v2394, 111
      %v2460 = vpop.permute.xlu0 %2459
      %2461 = vrot.lane.b32.xlu0 %v2395, 111
      %v2462 = vpop.permute.xlu0 %2461
      %2463 = vrot.lane.b32.xlu0 %v2396, 111
      %v2464 = vpop.permute.xlu0 %2463
      %2465 = vrot.lane.b32.xlu0 %v2397, 111
      %v2466 = vpop.permute.xlu0 %2465
      %2467 = vrot.lane.b32.xlu0 %v2398, 111
      %v2468 = vpop.permute.xlu0 %2467
      %2469 = vrot.lane.b32.xlu0 %v2399, 111
      %v2470 = vpop.permute.xlu0 %2469
      %2471 = vrot.lane.b32.xlu0 %v2400, 111
      %v2472 = vpop.permute.xlu0 %2471
      %v2473 = vsel %vm1163, %v2426, %v2428
      %v2474 = vsel %vm1163, %v2428, %v2430
      %v2475 = vsel %vm1163, %v2432, %v2434
      %v2476 = vsel %vm1163, %v2434, %v2436
      %v2477 = vsel %vm1163, %v2438, %v2440
      %v2478 = vsel %vm1163, %v2440, %v2442
      %v2479 = vsel %vm1163, %v2444, %v2446
      %v2480 = vsel %vm1163, %v2446, %v2448
      %v2481 = vsel %vm1163, %v2450, %v2452
      %v2482 = vsel %vm1163, %v2452, %v2454
      %v2483 = vsel %vm1163, %v2456, %v2458
      %v2484 = vsel %vm1163, %v2458, %v2460
      %v2485 = vsel %vm1163, %v2462, %v2464
      %v2486 = vsel %vm1163, %v2464, %v2466
      %v2487 = vsel %vm1163, %v2468, %v2470
      %v2488 = vsel %vm1163, %v2470, %v2472
      %2505 = vst [vmem:[#allocation3 + $0x400] sm:$0xff] %v2473
      %2506 = vst [vmem:[#allocation3 + $0x408] sm:$0xff] %v2474
      %2507 = vst [vmem:[#allocation3 + $0x410] sm:$0xff] %v2475
      %2508 = vst [vmem:[#allocation3 + $0x418] sm:$0xff] %v2476
      %2509 = vst [vmem:[#allocation3 + $0x420] sm:$0xff] %v2477
      %2510 = vst [vmem:[#allocation3 + $0x428] sm:$0xff] %v2478
      %2511 = vst [vmem:[#allocation3 + $0x430] sm:$0xff] %v2479
      %2512 = vst [vmem:[#allocation3 + $0x438] sm:$0xff] %v2480
      %2513 = vst [vmem:[#allocation3 + $0x440] sm:$0xff] %v2481
      %2514 = vst [vmem:[#allocation3 + $0x448] sm:$0xff] %v2482
      %2515 = vst [vmem:[#allocation3 + $0x450] sm:$0xff] %v2483
      %2516 = vst [vmem:[#allocation3 + $0x458] sm:$0xff] %v2484
      %2517 = vst [vmem:[#allocation3 + $0x460] sm:$0xff] %v2485
      %2518 = vst [vmem:[#allocation3 + $0x468] sm:$0xff] %v2486
      %2519 = vst [vmem:[#allocation3 + $0x470] sm:$0xff] %v2487
      %2520 = vst [vmem:[#allocation3 + $0x478] sm:$0xff] %v2488
      %v2521 = vld [vmem:[%s10] sm:$0xff]
      %v2522 = vld [vmem:[%s10 + $0x8] sm:$0xff]
      %v2523 = vld [vmem:[%s10 + $0x10] sm:$0xff]
      %v2524 = vld [vmem:[%s10 + $0x18] sm:$0xff]
      %v2525 = vld [vmem:[%s10 + $0x20] sm:$0xff]
      %v2526 = vld [vmem:[%s10 + $0x28] sm:$0xff]
      %v2527 = vld [vmem:[%s10 + $0x30] sm:$0xff]
      %v2528 = vld [vmem:[%s10 + $0x38] sm:$0xff]
      %v2529 = vld [vmem:[%s10 + $0x40] sm:$0xff]
      %v2530 = vld [vmem:[%s10 + $0x48] sm:$0xff]
      %v2531 = vld [vmem:[%s10 + $0x50] sm:$0xff]
      %v2532 = vld [vmem:[%s10 + $0x58] sm:$0xff]
      %v2533 = vld [vmem:[%s10 + $0x60] sm:$0xff]
      %v2534 = vld [vmem:[%s10 + $0x68] sm:$0xff]
      %v2535 = vld [vmem:[%s10 + $0x70] sm:$0xff]
      %v2536 = vld [vmem:[%s10 + $0x78] sm:$0xff]
      %v2537 = vld [vmem:[%s10 + $0x80] sm:$0xff]
      %v2538 = vld [vmem:[%s10 + $0x88] sm:$0xff]
      %v2539 = vld [vmem:[%s10 + $0x90] sm:$0xff]
      %v2540 = vld [vmem:[%s10 + $0x98] sm:$0xff]
      %v2541 = vld [vmem:[%s10 + $0xa0] sm:$0xff]
      %v2542 = vld [vmem:[%s10 + $0xa8] sm:$0xff]
      %v2543 = vld [vmem:[%s10 + $0xb0] sm:$0xff]
      %v2544 = vld [vmem:[%s10 + $0xb8] sm:$0xff]
      %v2545 = vld [vmem:[%s10 + $0xc0] sm:$0xff]
      %v2546 = vld [vmem:[%s10 + $0xc8] sm:$0xff]
      %v2547 = vld [vmem:[%s10 + $0xd0] sm:$0xff]
      %v2548 = vld [vmem:[%s10 + $0xd8] sm:$0xff]
      %v2549 = vld [vmem:[%s10 + $0xe0] sm:$0xff]
      %v2550 = vld [vmem:[%s10 + $0xe8] sm:$0xff]
      %v2551 = vld [vmem:[%s10 + $0xf0] sm:$0xff]
      %v2552 = vld [vmem:[%s10 + $0xf8] sm:$0xff]
      %v2553 = vld [vmem:[%s10 + $0x100] sm:$0xff]
      %v2554 = vld [vmem:[%s10 + $0x108] sm:$0xff]
      %v2555 = vld [vmem:[%s10 + $0x110] sm:$0xff]
      %v2556 = vld [vmem:[%s10 + $0x118] sm:$0xff]
      %v2557 = vld [vmem:[%s10 + $0x120] sm:$0xff]
      %v2558 = vld [vmem:[%s10 + $0x128] sm:$0xff]
      %v2559 = vld [vmem:[%s10 + $0x130] sm:$0xff]
      %v2560 = vld [vmem:[%s10 + $0x138] sm:$0xff]
      %v2561 = vld [vmem:[#allocation3] sm:$0xff]
      %v2562 = vld [vmem:[#allocation3 + $0x8] sm:$0xff]
      %v2563 = vld [vmem:[#allocation3 + $0x10] sm:$0xff]
      %v2564 = vld [vmem:[#allocation3 + $0x18] sm:$0xff]
      %v2565 = vld [vmem:[#allocation3 + $0x20] sm:$0xff]
      %v2566 = vld [vmem:[#allocation3 + $0x28] sm:$0xff]
      %v2567 = vld [vmem:[#allocation3 + $0x30] sm:$0xff]
      %v2568 = vld [vmem:[#allocation3 + $0x38] sm:$0xff]
      %v2569 = vld [vmem:[#allocation3 + $0x40] sm:$0xff]
      %v2570 = vld [vmem:[#allocation3 + $0x48] sm:$0xff]
      %v2571 = vld [vmem:[#allocation3 + $0x50] sm:$0xff]
      %v2572 = vld [vmem:[#allocation3 + $0x58] sm:$0xff]
      %v2573 = vld [vmem:[#allocation3 + $0x60] sm:$0xff]
      %v2574 = vld [vmem:[#allocation3 + $0x68] sm:$0xff]
      %v2575 = vld [vmem:[#allocation3 + $0x70] sm:$0xff]
      %v2576 = vld [vmem:[#allocation3 + $0x78] sm:$0xff]
      %v2577 = vld [vmem:[#allocation3 + $0x80] sm:$0xff]
      %v2578 = vld [vmem:[#allocation3 + $0x88] sm:$0xff]
      %v2579 = vld [vmem:[#allocation3 + $0x90] sm:$0xff]
      %v2580 = vld [vmem:[#allocation3 + $0x98] sm:$0xff]
      %v2581 = vld [vmem:[#allocation3 + $0xa0] sm:$0xff]
      %v2582 = vld [vmem:[#allocation3 + $0xa8] sm:$0xff]
      %v2583 = vld [vmem:[#allocation3 + $0xb0] sm:$0xff]
      %v2584 = vld [vmem:[#allocation3 + $0xb8] sm:$0xff]
      %v2585 = vld [vmem:[#allocation3 + $0xc0] sm:$0xff]
      %v2586 = vld [vmem:[#allocation3 + $0xc8] sm:$0xff]
      %v2587 = vld [vmem:[#allocation3 + $0xd0] sm:$0xff]
      %v2588 = vld [vmem:[#allocation3 + $0xd8] sm:$0xff]
      %v2589 = vld [vmem:[#allocation3 + $0xe0] sm:$0xff]
      %v2590 = vld [vmem:[#allocation3 + $0xe8] sm:$0xff]
      %v2591 = vld [vmem:[#allocation3 + $0xf0] sm:$0xff]
      %v2592 = vld [vmem:[#allocation3 + $0xf8] sm:$0xff]
      %v2593 = vld [vmem:[#allocation3 + $0x100] sm:$0xff]
      %v2594 = vld [vmem:[#allocation3 + $0x108] sm:$0xff]
      %v2595 = vld [vmem:[#allocation3 + $0x110] sm:$0xff]
      %v2596 = vld [vmem:[#allocation3 + $0x118] sm:$0xff]
      %v2597 = vld [vmem:[#allocation3 + $0x120] sm:$0xff]
      %v2598 = vld [vmem:[#allocation3 + $0x128] sm:$0xff]
      %v2599 = vld [vmem:[#allocation3 + $0x130] sm:$0xff]
      %v2600 = vld [vmem:[#allocation3 + $0x138] sm:$0xff]
      %v2601 = vld [vmem:[#allocation3 + $0x140] sm:$0xff]
      %v2602 = vld [vmem:[#allocation3 + $0x148] sm:$0xff]
      %v2603 = vld [vmem:[#allocation3 + $0x150] sm:$0xff]
      %v2604 = vld [vmem:[#allocation3 + $0x158] sm:$0xff]
      %v2605 = vld [vmem:[#allocation3 + $0x160] sm:$0xff]
      %v2606 = vld [vmem:[#allocation3 + $0x168] sm:$0xff]
      %v2607 = vld [vmem:[#allocation3 + $0x170] sm:$0xff]
      %v2608 = vld [vmem:[#allocation3 + $0x178] sm:$0xff]
      %v2609 = vld [vmem:[#allocation3 + $0x180] sm:$0xff]
      %v2610 = vld [vmem:[#allocation3 + $0x188] sm:$0xff]
      %v2611 = vld [vmem:[#allocation3 + $0x190] sm:$0xff]
      %v2612 = vld [vmem:[#allocation3 + $0x198] sm:$0xff]
      %v2613 = vld [vmem:[#allocation3 + $0x1a0] sm:$0xff]
      %v2614 = vld [vmem:[#allocation3 + $0x1a8] sm:$0xff]
      %v2615 = vld [vmem:[#allocation3 + $0x1b0] sm:$0xff]
      %v2616 = vld [vmem:[#allocation3 + $0x1b8] sm:$0xff]
      %v2617 = vld [vmem:[#allocation3 + $0x1c0] sm:$0xff]
      %v2618 = vld [vmem:[#allocation3 + $0x1c8] sm:$0xff]
      %v2619 = vld [vmem:[#allocation3 + $0x1d0] sm:$0xff]
      %v2620 = vld [vmem:[#allocation3 + $0x1d8] sm:$0xff]
      %v2621 = vld [vmem:[#allocation3 + $0x1e0] sm:$0xff]
      %v2622 = vld [vmem:[#allocation3 + $0x1e8] sm:$0xff]
      %v2623 = vld [vmem:[#allocation3 + $0x1f0] sm:$0xff]
      %v2624 = vld [vmem:[#allocation3 + $0x1f8] sm:$0xff]
      %v2625 = vld [vmem:[#allocation3 + $0x200] sm:$0xff]
      %v2626 = vld [vmem:[#allocation3 + $0x208] sm:$0xff]
      %v2627 = vld [vmem:[#allocation3 + $0x210] sm:$0xff]
      %v2628 = vld [vmem:[#allocation3 + $0x218] sm:$0xff]
      %v2629 = vld [vmem:[#allocation3 + $0x220] sm:$0xff]
      %v2630 = vld [vmem:[#allocation3 + $0x228] sm:$0xff]
      %v2631 = vld [vmem:[#allocation3 + $0x230] sm:$0xff]
      %v2632 = vld [vmem:[#allocation3 + $0x238] sm:$0xff]
      %v2633 = vld [vmem:[#allocation3 + $0x240] sm:$0xff]
      %v2634 = vld [vmem:[#allocation3 + $0x248] sm:$0xff]
      %v2635 = vld [vmem:[#allocation3 + $0x250] sm:$0xff]
      %v2636 = vld [vmem:[#allocation3 + $0x258] sm:$0xff]
      %v2637 = vld [vmem:[#allocation3 + $0x260] sm:$0xff]
      %v2638 = vld [vmem:[#allocation3 + $0x268] sm:$0xff]
      %v2639 = vld [vmem:[#allocation3 + $0x270] sm:$0xff]
      %v2640 = vld [vmem:[#allocation3 + $0x278] sm:$0xff]
      %v2641 = vld [vmem:[#allocation3 + $0x280] sm:$0xff]
      %v2642 = vld [vmem:[#allocation3 + $0x288] sm:$0xff]
      %v2643 = vld [vmem:[#allocation3 + $0x290] sm:$0xff]
      %v2644 = vld [vmem:[#allocation3 + $0x298] sm:$0xff]
      %v2645 = vld [vmem:[#allocation3 + $0x2a0] sm:$0xff]
      %v2646 = vld [vmem:[#allocation3 + $0x2a8] sm:$0xff]
      %v2647 = vld [vmem:[#allocation3 + $0x2b0] sm:$0xff]
      %v2648 = vld [vmem:[#allocation3 + $0x2b8] sm:$0xff]
      %v2649 = vld [vmem:[#allocation3 + $0x2c0] sm:$0xff]
      %v2650 = vld [vmem:[#allocation3 + $0x2c8] sm:$0xff]
      %v2651 = vld [vmem:[#allocation3 + $0x2d0] sm:$0xff]
      %v2652 = vld [vmem:[#allocation3 + $0x2d8] sm:$0xff]
      %v2653 = vld [vmem:[#allocation3 + $0x2e0] sm:$0xff]
      %v2654 = vld [vmem:[#allocation3 + $0x2e8] sm:$0xff]
      %v2655 = vld [vmem:[#allocation3 + $0x2f0] sm:$0xff]
      %v2656 = vld [vmem:[#allocation3 + $0x2f8] sm:$0xff]
      %v2657 = vld [vmem:[#allocation3 + $0x300] sm:$0xff]
      %v2658 = vld [vmem:[#allocation3 + $0x308] sm:$0xff]
      %v2659 = vld [vmem:[#allocation3 + $0x310] sm:$0xff]
      %v2660 = vld [vmem:[#allocation3 + $0x318] sm:$0xff]
      %v2661 = vld [vmem:[#allocation3 + $0x320] sm:$0xff]
      %v2662 = vld [vmem:[#allocation3 + $0x328] sm:$0xff]
      %v2663 = vld [vmem:[#allocation3 + $0x330] sm:$0xff]
      %v2664 = vld [vmem:[#allocation3 + $0x338] sm:$0xff]
      %v2665 = vld [vmem:[#allocation3 + $0x340] sm:$0xff]
      %v2666 = vld [vmem:[#allocation3 + $0x348] sm:$0xff]
      %v2667 = vld [vmem:[#allocation3 + $0x350] sm:$0xff]
      %v2668 = vld [vmem:[#allocation3 + $0x358] sm:$0xff]
      %v2669 = vld [vmem:[#allocation3 + $0x360] sm:$0xff]
      %v2670 = vld [vmem:[#allocation3 + $0x368] sm:$0xff]
      %v2671 = vld [vmem:[#allocation3 + $0x370] sm:$0xff]
      %v2672 = vld [vmem:[#allocation3 + $0x378] sm:$0xff]
      %v2673 = vld [vmem:[#allocation3 + $0x380] sm:$0xff]
      %v2674 = vld [vmem:[#allocation3 + $0x388] sm:$0xff]
      %v2675 = vld [vmem:[#allocation3 + $0x390] sm:$0xff]
      %v2676 = vld [vmem:[#allocation3 + $0x398] sm:$0xff]
      %v2677 = vld [vmem:[#allocation3 + $0x3a0] sm:$0xff]
      %v2678 = vld [vmem:[#allocation3 + $0x3a8] sm:$0xff]
      %v2679 = vld [vmem:[#allocation3 + $0x3b0] sm:$0xff]
      %v2680 = vld [vmem:[#allocation3 + $0x3b8] sm:$0xff]
      %v2681 = vld [vmem:[#allocation3 + $0x3c0] sm:$0xff]
      %v2682 = vld [vmem:[#allocation3 + $0x3c8] sm:$0xff]
      %v2683 = vld [vmem:[#allocation3 + $0x3d0] sm:$0xff]
      %v2684 = vld [vmem:[#allocation3 + $0x3d8] sm:$0xff]
      %v2685 = vld [vmem:[#allocation3 + $0x3e0] sm:$0xff]
      %v2686 = vld [vmem:[#allocation3 + $0x3e8] sm:$0xff]
      %v2687 = vld [vmem:[#allocation3 + $0x3f0] sm:$0xff]
      %v2688 = vld [vmem:[#allocation3 + $0x3f8] sm:$0xff]
      %v2689 = vld [vmem:[#allocation3 + $0x400] sm:$0xff]
      %v2690 = vld [vmem:[#allocation3 + $0x408] sm:$0xff]
      %v2691 = vld [vmem:[#allocation3 + $0x410] sm:$0xff]
      %v2692 = vld [vmem:[#allocation3 + $0x418] sm:$0xff]
      %v2693 = vld [vmem:[#allocation3 + $0x420] sm:$0xff]
      %v2694 = vld [vmem:[#allocation3 + $0x428] sm:$0xff]
      %v2695 = vld [vmem:[#allocation3 + $0x430] sm:$0xff]
      %v2696 = vld [vmem:[#allocation3 + $0x438] sm:$0xff]
      %v2697 = vld [vmem:[#allocation3 + $0x440] sm:$0xff]
      %v2698 = vld [vmem:[#allocation3 + $0x448] sm:$0xff]
      %v2699 = vld [vmem:[#allocation3 + $0x450] sm:$0xff]
      %v2700 = vld [vmem:[#allocation3 + $0x458] sm:$0xff]
      %v2701 = vld [vmem:[#allocation3 + $0x460] sm:$0xff]
      %v2702 = vld [vmem:[#allocation3 + $0x468] sm:$0xff]
      %v2703 = vld [vmem:[#allocation3 + $0x470] sm:$0xff]
      %v2704 = vld [vmem:[#allocation3 + $0x478] sm:$0xff]
      %v2705 = vld [vmem:[%s11] sm:$0xff]
      %v2706 = vld [vmem:[%s11 + $0x8] sm:$0xff]
      %v2707 = vld [vmem:[%s11 + $0x10] sm:$0xff]
      %v2708 = vld [vmem:[%s11 + $0x18] sm:$0xff]
      %v2709 = vld [vmem:[%s11 + $0x20] sm:$0xff]
      %v2710 = vld [vmem:[%s11 + $0x28] sm:$0xff]
      %v2711 = vld [vmem:[%s11 + $0x30] sm:$0xff]
      %v2712 = vld [vmem:[%s11 + $0x38] sm:$0xff]
      %2714 = vset.pattern.permute.xlu0 0
      %2715 = vperm.xlu0 %2714, %v2705
      %v2716 = vpop.permute.xlu0 %2715
      %2719 = vset.pattern.permute.xlu0 0
      %2720 = vperm.xlu0 %2719, %v2706
      %v2721 = vpop.permute.xlu0 %2720
      %2724 = vset.pattern.permute.xlu0 0
      %2725 = vperm.xlu0 %2724, %v2707
      %v2726 = vpop.permute.xlu0 %2725
      %2729 = vset.pattern.permute.xlu0 0
      %2730 = vperm.xlu0 %2729, %v2708
      %v2731 = vpop.permute.xlu0 %2730
      %2734 = vset.pattern.permute.xlu0 0
      %2735 = vperm.xlu0 %2734, %v2709
      %v2736 = vpop.permute.xlu0 %2735
      %2739 = vset.pattern.permute.xlu0 0
      %2740 = vperm.xlu0 %2739, %v2710
      %v2741 = vpop.permute.xlu0 %2740
      %2744 = vset.pattern.permute.xlu0 0
      %2745 = vperm.xlu0 %2744, %v2711
      %v2746 = vpop.permute.xlu0 %2745
      %2749 = vset.pattern.permute.xlu0 0
      %2750 = vperm.xlu0 %2749, %v2712
      %v2751 = vpop.permute.xlu0 %2750
      %v2754 = vsel %vm491, %v2525, 0
      %v2757 = vsel %vm491, %v2530, 0
      %v2760 = vsel %vm491, %v2535, 0
      %v2763 = vsel %vm491, %v2540, 0
      %v2766 = vsel %vm491, %v2545, 0
      %v2769 = vsel %vm491, %v2550, 0
      %v2772 = vsel %vm491, %v2555, 0
      %v2775 = vsel %vm491, %v2560, 0
      %2777 = vmatpush.msra.mxu0 %v2591
      %2778 = vmatpush.msra.mxu0 %v2589
      %2779 = vmatpush.msra.mxu0 %v2587
      %2780 = vmatpush.msra.mxu0 %v2585
      %2781 = vmatpush.msra.mxu0 %v2583
      %2782 = vmatpush.msra.mxu0 %v2581
      %2783 = vmatpush.msra.mxu0 %v2579
      %2784 = vmatpush.msra.mxu0 %v2577
      %2785 = vmatpush.msra.mxu0 %v2575
      %2786 = vmatpush.msra.mxu0 %v2573
      %2787 = vmatpush.msra.mxu0 %v2571
      %2788 = vmatpush.msra.mxu0 %v2569
      %2789 = vmatpush.msra.mxu0 %v2567
      %2790 = vmatpush.msra.mxu0 %v2565
      %2791 = vmatpush.msra.mxu0 %v2563
      %2792 = vmatpush.msra.mxu0 %v2561
      %2793 = vmatmul.f32.gmra.mxu0 %v2521
      %v2794 = vpop.f32.mrf.mxu0
      %v2795 = vadd.f32 %v2716, %v2794
      %2796 = vmatmul.f32.gmra.mxu0 %v2526
      %v2797 = vpop.f32.mrf.mxu0
      %v2798 = vadd.f32 %v2721, %v2797
      %2799 = vmatmul.f32.gmra.mxu0 %v2531
      %v2800 = vpop.f32.mrf.mxu0
      %v2801 = vadd.f32 %v2726, %v2800
      %2802 = vmatmul.f32.gmra.mxu0 %v2536
      %v2803 = vpop.f32.mrf.mxu0
      %v2804 = vadd.f32 %v2731, %v2803
      %2805 = vmatmul.f32.gmra.mxu0 %v2541
      %v2806 = vpop.f32.mrf.mxu0
      %v2807 = vadd.f32 %v2736, %v2806
      %2808 = vmatmul.f32.gmra.mxu0 %v2546
      %v2809 = vpop.f32.mrf.mxu0
      %v2810 = vadd.f32 %v2741, %v2809
      %2811 = vmatmul.f32.gmra.mxu0 %v2551
      %v2812 = vpop.f32.mrf.mxu0
      %v2813 = vadd.f32 %v2746, %v2812
      %2814 = vmatmul.f32.gmra.mxu0 %v2556
      %v2815 = vpop.f32.mrf.mxu0
      %v2816 = vadd.f32 %v2751, %v2815
      %2817 = vdwg.mxu0
      %2818 = vmatpush.msra.mxu0 %v2623
      %2819 = vmatpush.msra.mxu0 %v2621
      %2820 = vmatpush.msra.mxu0 %v2619
      %2821 = vmatpush.msra.mxu0 %v2617
      %2822 = vmatpush.msra.mxu0 %v2615
      %2823 = vmatpush.msra.mxu0 %v2613
      %2824 = vmatpush.msra.mxu0 %v2611
      %2825 = vmatpush.msra.mxu0 %v2609
      %2826 = vmatpush.msra.mxu0 %v2607
      %2827 = vmatpush.msra.mxu0 %v2605
      %2828 = vmatpush.msra.mxu0 %v2603
      %2829 = vmatpush.msra.mxu0 %v2601
      %2830 = vmatpush.msra.mxu0 %v2599
      %2831 = vmatpush.msra.mxu0 %v2597
      %2832 = vmatpush.msra.mxu0 %v2595
      %2833 = vmatpush.msra.mxu0 %v2593
      %2834 = vmatmul.f32.gmra.mxu0 %v2522
      %v2835 = vpop.f32.mrf.mxu0
      %v2836 = vadd.f32 %v2795, %v2835
      %2837 = vmatmul.f32.gmra.mxu0 %v2527
      %v2838 = vpop.f32.mrf.mxu0
      %v2839 = vadd.f32 %v2798, %v2838
      %2840 = vmatmul.f32.gmra.mxu0 %v2532
      %v2841 = vpop.f32.mrf.mxu0
      %v2842 = vadd.f32 %v2801, %v2841
      %2843 = vmatmul.f32.gmra.mxu0 %v2537
      %v2844 = vpop.f32.mrf.mxu0
      %v2845 = vadd.f32 %v2804, %v2844
      %2846 = vmatmul.f32.gmra.mxu0 %v2542
      %v2847 = vpop.f32.mrf.mxu0
      %v2848 = vadd.f32 %v2807, %v2847
      %2849 = vmatmul.f32.gmra.mxu0 %v2547
      %v2850 = vpop.f32.mrf.mxu0
      %v2851 = vadd.f32 %v2810, %v2850
      %2852 = vmatmul.f32.gmra.mxu0 %v2552
      %v2853 = vpop.f32.mrf.mxu0
      %v2854 = vadd.f32 %v2813, %v2853
      %2855 = vmatmul.f32.gmra.mxu0 %v2557
      %v2856 = vpop.f32.mrf.mxu0
      %v2857 = vadd.f32 %v2816, %v2856
      %2858 = vdwg.mxu0
      %2859 = vmatpush.msra.mxu0 %v2655
      %2860 = vmatpush.msra.mxu0 %v2653
      %2861 = vmatpush.msra.mxu0 %v2651
      %2862 = vmatpush.msra.mxu0 %v2649
      %2863 = vmatpush.msra.mxu0 %v2647
      %2864 = vmatpush.msra.mxu0 %v2645
      %2865 = vmatpush.msra.mxu0 %v2643
      %2866 = vmatpush.msra.mxu0 %v2641
      %2867 = vmatpush.msra.mxu0 %v2639
      %2868 = vmatpush.msra.mxu0 %v2637
      %2869 = vmatpush.msra.mxu0 %v2635
      %2870 = vmatpush.msra.mxu0 %v2633
      %2871 = vmatpush.msra.mxu0 %v2631
      %2872 = vmatpush.msra.mxu0 %v2629
      %2873 = vmatpush.msra.mxu0 %v2627
      %2874 = vmatpush.msra.mxu0 %v2625
      %2875 = vmatmul.f32.gmra.mxu0 %v2523
      %v2876 = vpop.f32.mrf.mxu0
      %v2877 = vadd.f32 %v2836, %v2876
      %2878 = vmatmul.f32.gmra.mxu0 %v2528
      %v2879 = vpop.f32.mrf.mxu0
      %v2880 = vadd.f32 %v2839, %v2879
      %2881 = vmatmul.f32.gmra.mxu0 %v2533
      %v2882 = vpop.f32.mrf.mxu0
      %v2883 = vadd.f32 %v2842, %v2882
      %2884 = vmatmul.f32.gmra.mxu0 %v2538
      %v2885 = vpop.f32.mrf.mxu0
      %v2886 = vadd.f32 %v2845, %v2885
      %2887 = vmatmul.f32.gmra.mxu0 %v2543
      %v2888 = vpop.f32.mrf.mxu0
      %v2889 = vadd.f32 %v2848, %v2888
      %2890 = vmatmul.f32.gmra.mxu0 %v2548
      %v2891 = vpop.f32.mrf.mxu0
      %v2892 = vadd.f32 %v2851, %v2891
      %2893 = vmatmul.f32.gmra.mxu0 %v2553
      %v2894 = vpop.f32.mrf.mxu0
      %v2895 = vadd.f32 %v2854, %v2894
      %2896 = vmatmul.f32.gmra.mxu0 %v2558
      %v2897 = vpop.f32.mrf.mxu0
      %v2898 = vadd.f32 %v2857, %v2897
      %2899 = vdwg.mxu0
      %2900 = vmatpush.msra.mxu0 %v2687
      %2901 = vmatpush.msra.mxu0 %v2685
      %2902 = vmatpush.msra.mxu0 %v2683
      %2903 = vmatpush.msra.mxu0 %v2681
      %2904 = vmatpush.msra.mxu0 %v2679
      %2905 = vmatpush.msra.mxu0 %v2677
      %2906 = vmatpush.msra.mxu0 %v2675
      %2907 = vmatpush.msra.mxu0 %v2673
      %2908 = vmatpush.msra.mxu0 %v2671
      %2909 = vmatpush.msra.mxu0 %v2669
      %2910 = vmatpush.msra.mxu0 %v2667
      %2911 = vmatpush.msra.mxu0 %v2665
      %2912 = vmatpush.msra.mxu0 %v2663
      %2913 = vmatpush.msra.mxu0 %v2661
      %2914 = vmatpush.msra.mxu0 %v2659
      %2915 = vmatpush.msra.mxu0 %v2657
      %2916 = vmatmul.f32.gmra.mxu0 %v2524
      %v2917 = vpop.f32.mrf.mxu0
      %v2918 = vadd.f32 %v2877, %v2917
      %2919 = vmatmul.f32.gmra.mxu0 %v2529
      %v2920 = vpop.f32.mrf.mxu0
      %v2921 = vadd.f32 %v2880, %v2920
      %2922 = vmatmul.f32.gmra.mxu0 %v2534
      %v2923 = vpop.f32.mrf.mxu0
      %v2924 = vadd.f32 %v2883, %v2923
      %2925 = vmatmul.f32.gmra.mxu0 %v2539
      %v2926 = vpop.f32.mrf.mxu0
      %v2927 = vadd.f32 %v2886, %v2926
      %2928 = vmatmul.f32.gmra.mxu0 %v2544
      %v2929 = vpop.f32.mrf.mxu0
      %v2930 = vadd.f32 %v2889, %v2929
      %2931 = vmatmul.f32.gmra.mxu0 %v2549
      %v2932 = vpop.f32.mrf.mxu0
      %v2933 = vadd.f32 %v2892, %v2932
      %2934 = vmatmul.f32.gmra.mxu0 %v2554
      %v2935 = vpop.f32.mrf.mxu0
      %v2936 = vadd.f32 %v2895, %v2935
      %2937 = vmatmul.f32.gmra.mxu0 %v2559
      %v2938 = vpop.f32.mrf.mxu0
      %v2939 = vadd.f32 %v2898, %v2938
      %2940 = vdwg.mxu0
      %2941 = vmatpush.msra.mxu0 0.0
      %2942 = vmatpush.msra.mxu0 0.0
      %2943 = vmatpush.msra.mxu0 0.0
      %2944 = vmatpush.msra.mxu0 0.0
      %2945 = vmatpush.msra.mxu0 0.0
      %2946 = vmatpush.msra.mxu0 0.0
      %2947 = vmatpush.msra.mxu0 0.0
      %2948 = vmatpush.msra.mxu0 0.0
      %2949 = vmatpush.msra.mxu0 %v2703
      %2950 = vmatpush.msra.mxu0 %v2701
      %2951 = vmatpush.msra.mxu0 %v2699
      %2952 = vmatpush.msra.mxu0 %v2697
      %2953 = vmatpush.msra.mxu0 %v2695
      %2954 = vmatpush.msra.mxu0 %v2693
      %2955 = vmatpush.msra.mxu0 %v2691
      %2956 = vmatpush.msra.mxu0 %v2689
      %2957 = vmatmul.f32.gmra.mxu0 %v2754
      %v2958 = vpop.f32.mrf.mxu0
      %v2959 = vadd.f32 %v2918, %v2958
      %2960 = vmatmul.f32.gmra.mxu0 %v2757
      %v2961 = vpop.f32.mrf.mxu0
      %v2962 = vadd.f32 %v2921, %v2961
      %2963 = vmatmul.f32.gmra.mxu0 %v2760
      %v2964 = vpop.f32.mrf.mxu0
      %v2965 = vadd.f32 %v2924, %v2964
      %2966 = vmatmul.f32.gmra.mxu0 %v2763
      %v2967 = vpop.f32.mrf.mxu0
      %v2968 = vadd.f32 %v2927, %v2967
      %2969 = vmatmul.f32.gmra.mxu0 %v2766
      %v2970 = vpop.f32.mrf.mxu0
      %v2971 = vadd.f32 %v2930, %v2970
      %2972 = vmatmul.f32.gmra.mxu0 %v2769
      %v2973 = vpop.f32.mrf.mxu0
      %v2974 = vadd.f32 %v2933, %v2973
      %2975 = vmatmul.f32.gmra.mxu0 %v2772
      %v2976 = vpop.f32.mrf.mxu0
      %v2977 = vadd.f32 %v2936, %v2976
      %2978 = vmatmul.f32.gmra.mxu0 %v2775
      %v2979 = vpop.f32.mrf.mxu0
      %v2980 = vadd.f32 %v2939, %v2979
      %2981 = vdwg.mxu0
      %2982 = vmatpush.msra.mxu0 %v2592
      %2983 = vmatpush.msra.mxu0 %v2590
      %2984 = vmatpush.msra.mxu0 %v2588
      %2985 = vmatpush.msra.mxu0 %v2586
      %2986 = vmatpush.msra.mxu0 %v2584
      %2987 = vmatpush.msra.mxu0 %v2582
      %2988 = vmatpush.msra.mxu0 %v2580
      %2989 = vmatpush.msra.mxu0 %v2578
      %2990 = vmatpush.msra.mxu0 %v2576
      %2991 = vmatpush.msra.mxu0 %v2574
      %2992 = vmatpush.msra.mxu0 %v2572
      %2993 = vmatpush.msra.mxu0 %v2570
      %2994 = vmatpush.msra.mxu0 %v2568
      %2995 = vmatpush.msra.mxu0 %v2566
      %2996 = vmatpush.msra.mxu0 %v2564
      %2997 = vmatpush.msra.mxu0 %v2562
      %2998 = vmatmul.f32.gmra.mxu0 %v2521
      %v2999 = vpop.f32.mrf.mxu0
      %v3000 = vadd.f32 %v2716, %v2999
      %3001 = vmatmul.f32.gmra.mxu0 %v2526
      %v3002 = vpop.f32.mrf.mxu0
      %v3003 = vadd.f32 %v2721, %v3002
      %3004 = vmatmul.f32.gmra.mxu0 %v2531
      %v3005 = vpop.f32.mrf.mxu0
      %v3006 = vadd.f32 %v2726, %v3005
      %3007 = vmatmul.f32.gmra.mxu0 %v2536
      %v3008 = vpop.f32.mrf.mxu0
      %v3009 = vadd.f32 %v2731, %v3008
      %3010 = vmatmul.f32.gmra.mxu0 %v2541
      %v3011 = vpop.f32.mrf.mxu0
      %v3012 = vadd.f32 %v2736, %v3011
      %3013 = vmatmul.f32.gmra.mxu0 %v2546
      %v3014 = vpop.f32.mrf.mxu0
      %v3015 = vadd.f32 %v2741, %v3014
      %3016 = vmatmul.f32.gmra.mxu0 %v2551
      %v3017 = vpop.f32.mrf.mxu0
      %v3018 = vadd.f32 %v2746, %v3017
      %3019 = vmatmul.f32.gmra.mxu0 %v2556
      %v3020 = vpop.f32.mrf.mxu0
      %v3021 = vadd.f32 %v2751, %v3020
      %3022 = vdwg.mxu0
      %3023 = vmatpush.msra.mxu0 %v2624
      %3024 = vmatpush.msra.mxu0 %v2622
      %3025 = vmatpush.msra.mxu0 %v2620
      %3026 = vmatpush.msra.mxu0 %v2618
      %3027 = vmatpush.msra.mxu0 %v2616
      %3028 = vmatpush.msra.mxu0 %v2614
      %3029 = vmatpush.msra.mxu0 %v2612
      %3030 = vmatpush.msra.mxu0 %v2610
      %3031 = vmatpush.msra.mxu0 %v2608
      %3032 = vmatpush.msra.mxu0 %v2606
      %3033 = vmatpush.msra.mxu0 %v2604
      %3034 = vmatpush.msra.mxu0 %v2602
      %3035 = vmatpush.msra.mxu0 %v2600
      %3036 = vmatpush.msra.mxu0 %v2598
      %3037 = vmatpush.msra.mxu0 %v2596
      %3038 = vmatpush.msra.mxu0 %v2594
      %3039 = vmatmul.f32.gmra.mxu0 %v2522
      %v3040 = vpop.f32.mrf.mxu0
      %v3041 = vadd.f32 %v3000, %v3040
      %3042 = vmatmul.f32.gmra.mxu0 %v2527
      %v3043 = vpop.f32.mrf.mxu0
      %v3044 = vadd.f32 %v3003, %v3043
      %3045 = vmatmul.f32.gmra.mxu0 %v2532
      %v3046 = vpop.f32.mrf.mxu0
      %v3047 = vadd.f32 %v3006, %v3046
      %3048 = vmatmul.f32.gmra.mxu0 %v2537
      %v3049 = vpop.f32.mrf.mxu0
      %v3050 = vadd.f32 %v3009, %v3049
      %3051 = vmatmul.f32.gmra.mxu0 %v2542
      %v3052 = vpop.f32.mrf.mxu0
      %v3053 = vadd.f32 %v3012, %v3052
      %3054 = vmatmul.f32.gmra.mxu0 %v2547
      %v3055 = vpop.f32.mrf.mxu0
      %v3056 = vadd.f32 %v3015, %v3055
      %3057 = vmatmul.f32.gmra.mxu0 %v2552
      %v3058 = vpop.f32.mrf.mxu0
      %v3059 = vadd.f32 %v3018, %v3058
      %3060 = vmatmul.f32.gmra.mxu0 %v2557
      %v3061 = vpop.f32.mrf.mxu0
      %v3062 = vadd.f32 %v3021, %v3061
      %3063 = vdwg.mxu0
      %3064 = vmatpush.msra.mxu0 %v2656
      %3065 = vmatpush.msra.mxu0 %v2654
      %3066 = vmatpush.msra.mxu0 %v2652
      %3067 = vmatpush.msra.mxu0 %v2650
      %3068 = vmatpush.msra.mxu0 %v2648
      %3069 = vmatpush.msra.mxu0 %v2646
      %3070 = vmatpush.msra.mxu0 %v2644
      %3071 = vmatpush.msra.mxu0 %v2642
      %3072 = vmatpush.msra.mxu0 %v2640
      %3073 = vmatpush.msra.mxu0 %v2638
      %3074 = vmatpush.msra.mxu0 %v2636
      %3075 = vmatpush.msra.mxu0 %v2634
      %3076 = vmatpush.msra.mxu0 %v2632
      %3077 = vmatpush.msra.mxu0 %v2630
      %3078 = vmatpush.msra.mxu0 %v2628
      %3079 = vmatpush.msra.mxu0 %v2626
      %3080 = vmatmul.f32.gmra.mxu0 %v2523
      %v3081 = vpop.f32.mrf.mxu0
      %v3082 = vadd.f32 %v3041, %v3081
      %3083 = vmatmul.f32.gmra.mxu0 %v2528
      %v3084 = vpop.f32.mrf.mxu0
      %v3085 = vadd.f32 %v3044, %v3084
      %3086 = vmatmul.f32.gmra.mxu0 %v2533
      %v3087 = vpop.f32.mrf.mxu0
      %v3088 = vadd.f32 %v3047, %v3087
      %3089 = vmatmul.f32.gmra.mxu0 %v2538
      %v3090 = vpop.f32.mrf.mxu0
      %v3091 = vadd.f32 %v3050, %v3090
      %3092 = vmatmul.f32.gmra.mxu0 %v2543
      %v3093 = vpop.f32.mrf.mxu0
      %v3094 = vadd.f32 %v3053, %v3093
      %3095 = vmatmul.f32.gmra.mxu0 %v2548
      %v3096 = vpop.f32.mrf.mxu0
      %v3097 = vadd.f32 %v3056, %v3096
      %3098 = vmatmul.f32.gmra.mxu0 %v2553
      %v3099 = vpop.f32.mrf.mxu0
      %v3100 = vadd.f32 %v3059, %v3099
      %3101 = vmatmul.f32.gmra.mxu0 %v2558
      %v3102 = vpop.f32.mrf.mxu0
      %v3103 = vadd.f32 %v3062, %v3102
      %3104 = vdwg.mxu0
      %3105 = vmatpush.msra.mxu0 %v2688
      %3106 = vmatpush.msra.mxu0 %v2686
      %3107 = vmatpush.msra.mxu0 %v2684
      %3108 = vmatpush.msra.mxu0 %v2682
      %3109 = vmatpush.msra.mxu0 %v2680
      %3110 = vmatpush.msra.mxu0 %v2678
      %3111 = vmatpush.msra.mxu0 %v2676
      %3112 = vmatpush.msra.mxu0 %v2674
      %3113 = vmatpush.msra.mxu0 %v2672
      %3114 = vmatpush.msra.mxu0 %v2670
      %3115 = vmatpush.msra.mxu0 %v2668
      %3116 = vmatpush.msra.mxu0 %v2666
      %3117 = vmatpush.msra.mxu0 %v2664
      %3118 = vmatpush.msra.mxu0 %v2662
      %3119 = vmatpush.msra.mxu0 %v2660
      %3120 = vmatpush.msra.mxu0 %v2658
      %3121 = vmatmul.f32.gmra.mxu0 %v2524
      %v3122 = vpop.f32.mrf.mxu0
      %v3123 = vadd.f32 %v3082, %v3122
      %3124 = vmatmul.f32.gmra.mxu0 %v2529
      %v3125 = vpop.f32.mrf.mxu0
      %v3126 = vadd.f32 %v3085, %v3125
      %3127 = vmatmul.f32.gmra.mxu0 %v2534
      %v3128 = vpop.f32.mrf.mxu0
      %v3129 = vadd.f32 %v3088, %v3128
      %3130 = vmatmul.f32.gmra.mxu0 %v2539
      %v3131 = vpop.f32.mrf.mxu0
      %v3132 = vadd.f32 %v3091, %v3131
      %3133 = vmatmul.f32.gmra.mxu0 %v2544
      %v3134 = vpop.f32.mrf.mxu0
      %v3135 = vadd.f32 %v3094, %v3134
      %3136 = vmatmul.f32.gmra.mxu0 %v2549
      %v3137 = vpop.f32.mrf.mxu0
      %v3138 = vadd.f32 %v3097, %v3137
      %3139 = vmatmul.f32.gmra.mxu0 %v2554
      %v3140 = vpop.f32.mrf.mxu0
      %v3141 = vadd.f32 %v3100, %v3140
      %3142 = vmatmul.f32.gmra.mxu0 %v2559
      %v3143 = vpop.f32.mrf.mxu0
      %v3144 = vadd.f32 %v3103, %v3143
      %3145 = vdwg.mxu0
      %3146 = vmatpush.msra.mxu0 0.0
      %3147 = vmatpush.msra.mxu0 0.0
      %3148 = vmatpush.msra.mxu0 0.0
      %3149 = vmatpush.msra.mxu0 0.0
      %3150 = vmatpush.msra.mxu0 0.0
      %3151 = vmatpush.msra.mxu0 0.0
      %3152 = vmatpush.msra.mxu0 0.0
      %3153 = vmatpush.msra.mxu0 0.0
      %3154 = vmatpush.msra.mxu0 %v2704
      %3155 = vmatpush.msra.mxu0 %v2702
      %3156 = vmatpush.msra.mxu0 %v2700
      %3157 = vmatpush.msra.mxu0 %v2698
      %3158 = vmatpush.msra.mxu0 %v2696
      %3159 = vmatpush.msra.mxu0 %v2694
      %3160 = vmatpush.msra.mxu0 %v2692
      %3161 = vmatpush.msra.mxu0 %v2690
      %3162 = vmatmul.f32.gmra.mxu0 %v2754
      %v3163 = vpop.f32.mrf.mxu0
      %v3164 = vadd.f32 %v3123, %v3163
      %3165 = vmatmul.f32.gmra.mxu0 %v2757
      %v3166 = vpop.f32.mrf.mxu0
      %v3167 = vadd.f32 %v3126, %v3166
      %3168 = vmatmul.f32.gmra.mxu0 %v2760
      %v3169 = vpop.f32.mrf.mxu0
      %v3170 = vadd.f32 %v3129, %v3169
      %3171 = vmatmul.f32.gmra.mxu0 %v2763
      %v3172 = vpop.f32.mrf.mxu0
      %v3173 = vadd.f32 %v3132, %v3172
      %3174 = vmatmul.f32.gmra.mxu0 %v2766
      %v3175 = vpop.f32.mrf.mxu0
      %v3176 = vadd.f32 %v3135, %v3175
      %3177 = vmatmul.f32.gmra.mxu0 %v2769
      %v3178 = vpop.f32.mrf.mxu0
      %v3179 = vadd.f32 %v3138, %v3178
      %3180 = vmatmul.f32.gmra.mxu0 %v2772
      %v3181 = vpop.f32.mrf.mxu0
      %v3182 = vadd.f32 %v3141, %v3181
      %3183 = vmatmul.f32.gmra.mxu0 %v2775
      %v3184 = vpop.f32.mrf.mxu0
      %v3185 = vadd.f32 %v3144, %v3184
      %3186 = vdwg.mxu0
      %v3187 = vmax.f32 %v2959, 0.0
      %v3188 = vmax.f32 %v3164, 0.0
      %v3189 = vmax.f32 %v2962, 0.0
      %v3190 = vmax.f32 %v3167, 0.0
      %v3191 = vmax.f32 %v2965, 0.0
      %v3192 = vmax.f32 %v3170, 0.0
      %v3193 = vmax.f32 %v2968, 0.0
      %v3194 = vmax.f32 %v3173, 0.0
      %v3195 = vmax.f32 %v2971, 0.0
      %v3196 = vmax.f32 %v3176, 0.0
      %v3197 = vmax.f32 %v2974, 0.0
      %v3198 = vmax.f32 %v3179, 0.0
      %v3199 = vmax.f32 %v2977, 0.0
      %v3200 = vmax.f32 %v3182, 0.0
      %v3201 = vmax.f32 %v2980, 0.0
      %v3202 = vmax.f32 %v3185, 0.0
      %3203 = vst [vmem:[%s460] sm:$0xff] %v3187
      %3204 = vst [vmem:[%s460 + $0x8] sm:$0xff] %v3188
      %3205 = vst [vmem:[%s460 + $0x10] sm:$0xff] %v3189
      %3206 = vst [vmem:[%s460 + $0x18] sm:$0xff] %v3190
      %3207 = vst [vmem:[%s460 + $0x20] sm:$0xff] %v3191
      %3208 = vst [vmem:[%s460 + $0x28] sm:$0xff] %v3192
      %3209 = vst [vmem:[%s460 + $0x30] sm:$0xff] %v3193
      %3210 = vst [vmem:[%s460 + $0x38] sm:$0xff] %v3194
      %3211 = vst [vmem:[%s460 + $0x40] sm:$0xff] %v3195
      %3212 = vst [vmem:[%s460 + $0x48] sm:$0xff] %v3196
      %3213 = vst [vmem:[%s460 + $0x50] sm:$0xff] %v3197
      %3214 = vst [vmem:[%s460 + $0x58] sm:$0xff] %v3198
      %3215 = vst [vmem:[%s460 + $0x60] sm:$0xff] %v3199
      %3216 = vst [vmem:[%s460 + $0x68] sm:$0xff] %v3200
      %3217 = vst [vmem:[%s460 + $0x70] sm:$0xff] %v3201
      %3218 = vst [vmem:[%s460 + $0x78] sm:$0xff] %v3202
      %p3219 = scmp.lt.s32.totalorder %s24, 1
      %s3220 = scalar_select %p3219, %s24, 1
      %s3221 = smul.addr %s3220, 16
      %s3222 = smul.addr %s3221, 8
      %s3223 = scalar_lea.vmem %s13, %s3222
      // Predicated region
      $region73: #{fuse_forward.1} parent=71 // pred_check
        %p3224 = pneg %p325
      $region74: #{fuse_forward.1} parent=71 // pred_check_branch
        %3226 = sbr.rel (%p3224) target = $region76
      $region75: #{fuse_forward.1} parent=71 // pred_region
        _
      $region76: #{fuse_forward.1} parent=71 // pred_fallthru
        _
    $region72: #{fuse_forward.1} parent=5 // pred_fallthru
      _
    %p3227 = scmp.le.s32.totalorder 2, %s19
    // Predicated region
    $region77: #{fuse_forward.1} parent=5 // pred_check
      %p3228 = pneg %p3227
    $region78: #{fuse_forward.1} parent=5 // pred_check_branch
      %3230 = sbr.rel (%p3228) target = $region80
    $region79: #{fuse_forward.1} parent=5 // pred_region
      %s3231 = ssub.s32 %s19, 2
      // Predicated region
      $region81: #{fuse_forward.1} parent=79 // pred_check
        %p3232 = pneg %p331
      $region82: #{fuse_forward.1} parent=79 // pred_check_branch
        %3234 = sbr.rel (%p3232) target = $region84
      $region83: #{fuse_forward.1} parent=79 // pred_region
        %p3235 = scmp.lt.s32.totalorder %s25, 1
        %s3236 = scalar_select %p3235, %s25, 1
        %s3237 = smul.addr %s3236, 16
        %s3238 = smul.addr %s3237, 8
        %s3239 = scalar_lea.vmem %s13, %s3238
      $region84: #{fuse_forward.1} parent=79 // pred_fallthru
        _
    $region80: #{fuse_forward.1} parent=5 // pred_fallthru
      _
  $region6: #{fuse_forward.1} parent=0 // loop_footer
    %s23 = sadd.s32 1, %s19
  $region7: #{fuse_forward.1} parent=0 // loop_footer_branch
    %18 = sbr.rel target = $region3
  $region8: #{fuse_forward.1} parent=0 // loop_exit
    _

</llo_original>
